<compile_context>
chip_gen: v7x
topology: tpu7x:2x2x1
jax: 0.10.0
libtpu: 0.0.40
codegen_flags: <defaults>
</compile_context>

<pallas_src>
import jax
import jax.numpy as jnp
from jax.experimental import pallas as pl
from jax.experimental.pallas import tpu as pltpu

D_IN = 28 * 28       # 784
D_MODEL = 1024
D_OUT = 10
D_OUT_PAD = 128      # lane-dense output width (unmasked vst), sliced back to 10


def _mlp_kernel(x_ref, w1_ref, b1_ref, w2_ref, b2_ref, o_ref):
    # x_ref : (TM, 784)    f32  (bf16 cast done here -> no XLA HBM round trip)
    # w1_ref: (784, 1024)  bf16 (resident across batch tiles)
    # b1_ref: (1, 1024)    f32
    # w2_ref: (1024, 128)  bf16 (cols 10..127 are zero)
    # b2_ref: (1, 128)     f32  (cols 10..127 are zero)
    # o_ref : (TM, 128)    bf16
    x = x_ref[...].astype(jnp.bfloat16)
    h = jnp.dot(x, w1_ref[...], preferred_element_type=jnp.float32)
    h = h + b1_ref[...]
    # tanh-approx GELU: transcendental goes to the (otherwise idle) EUP slot
    # instead of a VALU erf polynomial. Deviation from torch's exact-erf gelu
    # is an order of magnitude below the bf16-matmul error already tolerated.
    h = jax.nn.gelu(h, approximate=True)
    y = jnp.dot(h.astype(jnp.bfloat16), w2_ref[...],
                preferred_element_type=jnp.float32)
    y = y + b2_ref[...]
    o_ref[...] = y.astype(o_ref.dtype)


def prepare_params(w1, b1, w2, b2):
    """One-time weight preparation (pad output cols to 128, cast weights to bf16).

    Call once and reuse the result; do NOT redo this per forward call.
    """
    w1p = w1.astype(jnp.bfloat16)                                   # (784, 1024)
    b1p = b1.reshape(1, D_MODEL).astype(jnp.float32)                # (1, 1024)
    w2p = jnp.pad(w2, ((0, 0), (0, D_OUT_PAD - D_OUT))).astype(jnp.bfloat16)
    b2p = jnp.pad(b2.reshape(1, D_OUT).astype(jnp.float32),
                  ((0, 0), (0, D_OUT_PAD - D_OUT)))                 # (1, 128)
    return w1p, b1p, w2p, b2p


def _choose_tiling(bs):
    # bs <= 128: single tile (block dims == full array dims, no padding needed;
    # splitting tiny batches across TCs would only duplicate the weight DMA).
    if bs <= 128:
        return bs, bs
    # Larger batches: biggest TM in {512,256,128} that divides bs and still
    # leaves >= 2 tiles (keeps both v7x TensorCores busy, cuts grid-step
    # overhead vs TM=128).
    for tm in (512, 256, 128):
        if bs % tm == 0 and bs // tm >= 2:
            return tm, bs
    tm = 256 if bs >= 512 else 128
    bs_pad = ((bs + tm - 1) // tm) * tm
    return tm, bs_pad


def mlp_forward(x_nchw, params):
    w1p, b1p, w2p, b2p = params
    bs = x_nchw.shape[0]
    x2d = x_nchw.reshape(bs, -1)     # (bs, 784): metadata-only for contiguous NCHW
    assert x2d.shape[1] == D_IN

    tm, bs_pad = _choose_tiling(bs)
    n_tiles = bs_pad // tm
    if bs_pad != bs:                 # only when bs doesn't divide cleanly
        x2d = jnp.pad(x2d, ((0, bs_pad - bs), (0, 0)))

    cost = pl.CostEstimate(
        flops=2 * bs_pad * (D_IN * D_MODEL + D_MODEL * D_OUT_PAD),
        transcendentals=bs_pad * D_MODEL,
        bytes_accessed=(bs_pad * D_IN * 4            # x (f32 in)
                        + D_IN * D_MODEL * 2         # w1 (bf16)
                        + D_MODEL * 4                # b1
                        + D_MODEL * D_OUT_PAD * 2    # w2 (bf16)
                        + D_OUT_PAD * 4              # b2
                        + bs_pad * D_OUT_PAD * 2),   # out (bf16)
    )

    out_pad = pl.pallas_call(
        _mlp_kernel,
        out_shape=jax.ShapeDtypeStruct((bs_pad, D_OUT_PAD), jnp.bfloat16),
        grid_spec=pl.GridSpec(
            grid=(n_tiles,),
            in_specs=[
                pl.BlockSpec((tm, D_IN), lambda i: (i, 0)),            # x: batch-tiled
                pl.BlockSpec((D_IN, D_MODEL), lambda i: (0, 0)),       # w1: resident
                pl.BlockSpec((1, D_MODEL), lambda i: (0, 0)),          # b1: resident
                pl.BlockSpec((D_MODEL, D_OUT_PAD), lambda i: (0, 0)),  # w2: resident
                pl.BlockSpec((1, D_OUT_PAD), lambda i: (0, 0)),        # b2: resident
            ],
            out_specs=pl.BlockSpec((tm, D_OUT_PAD), lambda i: (i, 0)),
        ),
        compiler_params=pltpu.CompilerParams(
            dimension_semantics=("parallel",),   # independent batch tiles (v7x 2-TC)
        ),
        cost_estimate=cost,
    )(x2d, w1p, b1p, w2p, b2p)

    return out_pad[:bs, :D_OUT].astype(jnp.float32)


def init_params(key):
    # Deterministic synthetic init (shapes from the module's __init__).
    k1, k2, k3, k4 = jax.random.split(key, 4)
    w1 = jax.random.normal(k1, (D_IN, D_MODEL), jnp.float32) * (1.0 / jnp.sqrt(D_IN))
    b1 = jax.random.normal(k2, (1, D_MODEL), jnp.float32) * 0.01
    w2 = jax.random.normal(k3, (D_MODEL, D_OUT), jnp.float32) * (1.0 / jnp.sqrt(D_MODEL))
    b2 = jax.random.normal(k4, (1, D_OUT), jnp.float32) * 0.01
    return w1, b1, w2, b2


if __name__ == "__main__":
    key = jax.random.PRNGKey(0)
    kx, kp = jax.random.split(key)

    bs = 2
    x = jax.random.normal(kx, (bs, 1, 28, 28), jnp.float32)   # NCHW like PyTorch
    w1, b1, w2, b2 = init_params(kp)

    params = prepare_params(w1, b1, w2, b2)   # one-time pad/cast, reused across calls
    out = jax.block_until_ready(mlp_forward(x, params))

    # Reference in plain f32 JAX (exact-erf GELU, same math as the torch module).
    # Tolerance covers bf16 matmuls + tanh-GELU approximation.
    x2d = x.reshape(bs, -1)
    ref = jax.nn.gelu(x2d @ w1 + b1, approximate=False) @ w2 + b2
    assert out.shape == (bs, D_OUT)
    assert jnp.allclose(out, ref, atol=1e-1, rtol=1e-1), (
        "mismatch vs reference, max abs diff = "
        f"{float(jnp.max(jnp.abs(out - ref)))}")

    print("KERNEL_OK")
</pallas_src>

<mosaic_0001>
module attributes {stable_mosaic.version = 11 : i64} {
  func.func @_mlp_kernel(%arg0: i32, %arg1: memref<2x784xf32, #tpu.memory_space<vmem>>, %arg2: memref<784x1024xbf16, #tpu.memory_space<vmem>>, %arg3: memref<1x1024xf32, #tpu.memory_space<vmem>>, %arg4: memref<1024x128xbf16, #tpu.memory_space<vmem>>, %arg5: memref<1x128xf32, #tpu.memory_space<vmem>>, %arg6: memref<2x128xbf16, #tpu.memory_space<vmem>>) attributes {dimension_semantics = [#tpu.dimension_semantics<parallel>], iteration_bounds = array<i64: 1>, scalar_prefetch = 0 : i64, scratch_operands = 0 : i64, tpu.core_type = #tpu.core_type<tc>, window_params = [{transform_indices = @transform_0, window_bounds = array<i64: 2, 784>}, {pipeline_mode = #tpu.pipeline_mode<synchronous>, transform_indices = @transform_1, window_bounds = array<i64: 784, 1024>}, {pipeline_mode = #tpu.pipeline_mode<synchronous>, transform_indices = @transform_2, window_bounds = array<i64: 1, 1024>}, {pipeline_mode = #tpu.pipeline_mode<synchronous>, transform_indices = @transform_3, window_bounds = array<i64: 1024, 128>}, {pipeline_mode = #tpu.pipeline_mode<synchronous>, transform_indices = @transform_4, window_bounds = array<i64: 1, 128>}, {transform_indices = @transform_5, window_bounds = array<i64: 2, 128>}]} {
    %c0 = arith.constant 0 : index
    %c0_0 = arith.constant 0 : index
    %0 = vector.load %arg1[%c0, %c0_0] : memref<2x784xf32, #tpu.memory_space<vmem>>, vector<2x784xf32>
    %1 = arith.truncf %0 : vector<2x784xf32> to vector<2x784xbf16>
    %c0_1 = arith.constant 0 : index
    %c0_2 = arith.constant 0 : index
    %2 = vector.load %arg2[%c0_1, %c0_2] : memref<784x1024xbf16, #tpu.memory_space<vmem>>, vector<784x1024xbf16>
    %cst = arith.constant dense<0.000000e+00> : vector<2x1024xf32>
    %3 = tpu.matmul %1, %2, %cst {dimension_numbers = #tpu.dot_dimension_numbers<[1], [0], [0], [1], [0, 0, 1, 1], [], []>} : vector<2x784xbf16>, vector<784x1024xbf16>, vector<2x1024xf32> -> vector<2x1024xf32>
    %c0_3 = arith.constant 0 : index
    %c0_4 = arith.constant 0 : index
    %4 = vector.load %arg3[%c0_3, %c0_4] : memref<1x1024xf32, #tpu.memory_space<vmem>>, vector<1x1024xf32>
    %5 = vector.broadcast %4 : vector<1x1024xf32> to vector<2x1024xf32>
    %6 = arith.addf %3, %5 : vector<2x1024xf32>
    %7 = arith.mulf %6, %6 : vector<2x1024xf32>
    %8 = arith.mulf %6, %7 : vector<2x1024xf32>
    %cst_5 = arith.constant 4.471500e-02 : f32
    %9 = vector.broadcast %cst_5 : f32 to vector<2x1024xf32>
    %10 = arith.mulf %9, %8 : vector<2x1024xf32>
    %11 = arith.addf %6, %10 : vector<2x1024xf32>
    %cst_6 = arith.constant 0.797884583 : f32
    %12 = vector.broadcast %cst_6 : f32 to vector<2x1024xf32>
    %13 = arith.mulf %12, %11 : vector<2x1024xf32>
    %14 = math.tanh %13 : vector<2x1024xf32>
    %cst_7 = arith.constant 1.000000e+00 : f32
    %15 = vector.broadcast %cst_7 : f32 to vector<2x1024xf32>
    %16 = arith.addf %15, %14 : vector<2x1024xf32>
    %cst_8 = arith.constant 5.000000e-01 : f32
    %17 = vector.broadcast %cst_8 : f32 to vector<2x1024xf32>
    %18 = arith.mulf %17, %16 : vector<2x1024xf32>
    %19 = arith.mulf %6, %18 : vector<2x1024xf32>
    %20 = arith.truncf %19 : vector<2x1024xf32> to vector<2x1024xbf16>
    %c0_9 = arith.constant 0 : index
    %c0_10 = arith.constant 0 : index
    %21 = vector.load %arg4[%c0_9, %c0_10] : memref<1024x128xbf16, #tpu.memory_space<vmem>>, vector<1024x128xbf16>
    %cst_11 = arith.constant dense<0.000000e+00> : vector<2x128xf32>
    %22 = tpu.matmul %20, %21, %cst_11 {dimension_numbers = #tpu.dot_dimension_numbers<[1], [0], [0], [1], [0, 0, 1, 1], [], []>} : vector<2x1024xbf16>, vector<1024x128xbf16>, vector<2x128xf32> -> vector<2x128xf32>
    %c0_12 = arith.constant 0 : index
    %c0_13 = arith.constant 0 : index
    %23 = vector.load %arg5[%c0_12, %c0_13] : memref<1x128xf32, #tpu.memory_space<vmem>>, vector<1x128xf32>
    %24 = vector.broadcast %23 : vector<1x128xf32> to vector<2x128xf32>
    %25 = arith.addf %22, %24 : vector<2x128xf32>
    %26 = arith.truncf %25 : vector<2x128xf32> to vector<2x128xbf16>
    %c0_14 = arith.constant 0 : index
    %c0_15 = arith.constant 0 : index
    %27 = vector.load %arg6[%c0_14, %c0_15] : memref<2x128xbf16, #tpu.memory_space<vmem>>, vector<2x128xbf16>
    tpu.vector_store %arg6[%c0_14, %c0_15], %26 {strides = array<i32>} : memref<2x128xbf16, #tpu.memory_space<vmem>>, vector<2x128xbf16>,
    return
  }
  func.func @transform_0(%arg0: i32) -> (i32, i32) {
    %c0_i32 = arith.constant 0 : i32
    %c0_i32_0 = arith.constant 0 : i32
    return %arg0, %c0_i32 : i32, i32
  }
  func.func @transform_1(%arg0: i32) -> (i32, i32) {
    %c0_i32 = arith.constant 0 : i32
    %c0_i32_0 = arith.constant 0 : i32
    %c0_i32_1 = arith.constant 0 : i32
    return %c0_i32, %c0_i32_0 : i32, i32
  }
  func.func @transform_2(%arg0: i32) -> (i32, i32) {
    %c0_i32 = arith.constant 0 : i32
    %c0_i32_0 = arith.constant 0 : i32
    %c0_i32_1 = arith.constant 0 : i32
    return %c0_i32, %c0_i32_0 : i32, i32
  }
  func.func @transform_3(%arg0: i32) -> (i32, i32) {
    %c0_i32 = arith.constant 0 : i32
    %c0_i32_0 = arith.constant 0 : i32
    %c0_i32_1 = arith.constant 0 : i32
    return %c0_i32, %c0_i32_0 : i32, i32
  }
  func.func @transform_4(%arg0: i32) -> (i32, i32) {
    %c0_i32 = arith.constant 0 : i32
    %c0_i32_0 = arith.constant 0 : i32
    %c0_i32_1 = arith.constant 0 : i32
    return %c0_i32, %c0_i32_0 : i32, i32
  }
  func.func @transform_5(%arg0: i32) -> (i32, i32) {
    %c0_i32 = arith.constant 0 : i32
    %c0_i32_0 = arith.constant 0 : i32
    return %arg0, %c0_i32 : i32, i32
  }
}

</mosaic_0001>

<llo_original>
// kernel: tpu_custom_call.1
$region0: #{tpu_custom_call.1}
  #allocation0 [shape = 'u32[]', space=smem, size = 0x4, offset = 0x4, fixed_abs, tag = 'smem constant byte address 0x4 - core index']
  #allocation1 [shape = 'u32[144,128]{1,0:T(1,128)}', space=vmem, size = 0x12000, scoped, tag = 'internal scratch']
  %s0 = inlined_call_operand.hbm [shape: f32[2,784], index: 0, kind: input, shape index: {}]
  %s1 = inlined_call_operand.hbm [shape: bf16[784,1024], index: 1, kind: input, shape index: {}]
  %s2 = inlined_call_operand.hbm [shape: f32[1,1024], index: 2, kind: input, shape index: {}]
  %s3 = inlined_call_operand.hbm [shape: bf16[1024,128], index: 3, kind: input, shape index: {}]
  %s4 = inlined_call_operand.hbm [shape: f32[1,128], index: 4, kind: input, shape index: {}]
  %s5 = inlined_call_operand.hbm [shape: bf16[2,128], index: 5, kind: output, shape index: {}]
  %s6 = sld [smem:[#allocation0]]
  $region50: #{tpu_custom_call.1} parent=0
    _
  %s8 = ssub.s32 1, %s6
  %s9 = scalar_select 0, %s8, %s6
  $region1: #{tpu_custom_call.1} parent=0
    #allocation2 [shape = 'u8[7168]{0}', space=vmem, size = 0x1c00, scoped, tag = 'input window, operand 0, single buffered']
    #allocation3 [shape = 's32[1]{0}', space=sflag, size = 0x4, scoped, tag = 'scoped memory for tpu_custom_call.1']
    #allocation4 [shape = 's32[1]{0}', space=sflag, size = 0x4, scoped, tag = 'scoped memory for tpu_custom_call.1']
    #allocation5 [shape = 'u8[1605632]{0}', space=vmem, size = 0x188000, scoped, tag = 'input window, operand 1, single buffered']
    #allocation6 [shape = 's32[1]{0}', space=sflag, size = 0x4, scoped, tag = 'scoped memory for tpu_custom_call.1']
    #allocation7 [shape = 'u8[4096]{0}', space=vmem, size = 0x1000, scoped, tag = 'input window, operand 2, single buffered']
    #allocation8 [shape = 'u8[262144]{0}', space=vmem, size = 0x40000, scoped, tag = 'input window, operand 3, single buffered']
    #allocation9 [shape = 's32[1]{0}', space=sflag, size = 0x4, scoped, tag = 'scoped memory for tpu_custom_call.1']
    #allocation10 [shape = 'u8[512]{0}', space=vmem, size = 0x400, scoped, tag = 'input window, operand 4, single buffered']
    #allocation11 [shape = 'u8[512]{0}', space=vmem, size = 0x400, scoped, tag = 'output window, operand 0, single buffered']
    %10 = vsyncpa [#allocation3], 0
    %11 = vsyncpa [#allocation6], 0
    %12 = vsyncpa [#allocation9], 0
    %13 = vsyncpa [#allocation4], 0
    // Predicated region
    $region2: #{tpu_custom_call.1} parent=1 // pred_check
      _
    $region3: #{tpu_custom_call.1} parent=1 // pred_check_branch
      %15 = sbr.rel (0) target = $region5
    $region4: #{tpu_custom_call.1} parent=1 // pred_region
      %s17 = ssub.s32 224, 224
      %18 = vsyncadd [#allocation3], %s17
      %s20 = sshll.u32 [#allocation2], 4
      %s21 = int_to_ptr.vmem [resolvable:$true] %s20
      %23 = dma.hbm_to_vmem [thread:$0]  %s0, 224, %s21, [#allocation3]
    $region5: #{tpu_custom_call.1} parent=1 // pred_fallthru
      _
    // Predicated region
    $region6: #{tpu_custom_call.1} parent=1 // pred_check
      _
    $region7: #{tpu_custom_call.1} parent=1 // pred_check_branch
      %25 = sbr.rel (0) target = $region9
    $region8: #{tpu_custom_call.1} parent=1 // pred_region
      %s27 = ssub.s32 50176, 50176
      %28 = vsyncadd [#allocation6], %s27
      %s29 = sshll.u32 [#allocation5], 4
      %s30 = int_to_ptr.vmem [resolvable:$true] %s29
      %35 = dma.hbm_to_vmem [thread:$0]  %s1, 50176, %s30, [#allocation6], 512, 512, 32
    $region9: #{tpu_custom_call.1} parent=1 // pred_fallthru
      _
    // Predicated region
    $region10: #{tpu_custom_call.1} parent=1 // pred_check
      _
    $region11: #{tpu_custom_call.1} parent=1 // pred_check_branch
      %37 = sbr.rel (0) target = $region13
    $region12: #{tpu_custom_call.1} parent=1 // pred_region
      %s39 = ssub.s32 128, 128
      %40 = vsyncadd [#allocation6], %s39
      %s42 = sshll.u32 [#allocation7], 4
      %s43 = int_to_ptr.vmem [resolvable:$true] %s42
      %45 = dma.hbm_to_vmem [thread:$0]  %s2, 128, %s43, [#allocation6]
    $region13: #{tpu_custom_call.1} parent=1 // pred_fallthru
      _
    // Predicated region
    $region14: #{tpu_custom_call.1} parent=1 // pred_check
      _
    $region15: #{tpu_custom_call.1} parent=1 // pred_check_branch
      %47 = sbr.rel (0) target = $region17
    $region16: #{tpu_custom_call.1} parent=1 // pred_region
      %s49 = ssub.s32 8192, 8192
      %50 = vsyncadd [#allocation9], %s49
      %s51 = sshll.u32 [#allocation8], 4
      %s52 = int_to_ptr.vmem [resolvable:$true] %s51
      %57 = dma.hbm_to_vmem [thread:$0]  %s3, 8192, %s52, [#allocation9], 64, 64, 4
    $region17: #{tpu_custom_call.1} parent=1 // pred_fallthru
      _
    // Predicated region
    $region18: #{tpu_custom_call.1} parent=1 // pred_check
      _
    $region19: #{tpu_custom_call.1} parent=1 // pred_check_branch
      %59 = sbr.rel (0) target = $region21
    $region20: #{tpu_custom_call.1} parent=1 // pred_region
      %s61 = ssub.s32 16, 16
      %62 = vsyncadd [#allocation9], %s61
      %s64 = sshll.u32 [#allocation10], 4
      %s65 = int_to_ptr.vmem [resolvable:$true] %s64
      %67 = dma.hbm_to_vmem [thread:$0]  %s4, 16, %s65, [#allocation9]
    $region21: #{tpu_custom_call.1} parent=1 // pred_fallthru
      _
    // Predicated region
    $region22: #{tpu_custom_call.1} parent=1 // pred_check
      _
    $region23: #{tpu_custom_call.1} parent=1 // pred_check_branch
      %69 = sbr.rel (0) target = $region25
    $region24: #{tpu_custom_call.1} parent=1 // pred_region
      %70 = dma.done [#allocation3], 224
    $region25: #{tpu_custom_call.1} parent=1 // pred_fallthru
      _
    // Predicated region
    $region26: #{tpu_custom_call.1} parent=1 // pred_check
      _
    $region27: #{tpu_custom_call.1} parent=1 // pred_check_branch
      %72 = sbr.rel (0) target = $region29
    $region28: #{tpu_custom_call.1} parent=1 // pred_region
      %73 = dma.done [#allocation6], 50176
    $region29: #{tpu_custom_call.1} parent=1 // pred_fallthru
      _
    // Predicated region
    $region30: #{tpu_custom_call.1} parent=1 // pred_check
      _
    $region31: #{tpu_custom_call.1} parent=1 // pred_check_branch
      %75 = sbr.rel (0) target = $region33
    $region32: #{tpu_custom_call.1} parent=1 // pred_region
      %76 = dma.done [#allocation6], 128
    $region33: #{tpu_custom_call.1} parent=1 // pred_fallthru
      _
    // Predicated region
    $region34: #{tpu_custom_call.1} parent=1 // pred_check
      _
    $region35: #{tpu_custom_call.1} parent=1 // pred_check_branch
      %78 = sbr.rel (0) target = $region37
    $region36: #{tpu_custom_call.1} parent=1 // pred_region
      %79 = dma.done [#allocation9], 8192
    $region37: #{tpu_custom_call.1} parent=1 // pred_fallthru
      _
    // Predicated region
    $region38: #{tpu_custom_call.1} parent=1 // pred_check
      _
    $region39: #{tpu_custom_call.1} parent=1 // pred_check_branch
      %81 = sbr.rel (0) target = $region41
    $region40: #{tpu_custom_call.1} parent=1 // pred_region
      %82 = dma.done [#allocation9], 16
    $region41: #{tpu_custom_call.1} parent=1 // pred_fallthru
      _
    %v84 = vld [vmem:[#allocation2] sm:$0xff]
    %v85 = vld [vmem:[#allocation2 + $0x8] sm:$0x3f]
    %v88 = vcombine.high %v84, %v84
    %v90 = vunpack.c.l.s4 1983009808
    %v91 = vunpack.c.0.s8 %v90
    %v92 = vlaneseq
    %v93 = vshrl.u32 %v92, 7
    %v94 = vsub.s32 %v91, %v93
    %v95 = vrot.slane %v84, %v94
    %v97 = vunpack.c.l.s4 1983009808
    %v98 = vunpack.c.0.s8 %v97
    %v99 = vlaneseq
    %v100 = vshrl.u32 %v99, 7
    %v101 = vsub.s32 %v98, %v100
    %v102 = vrot.slane %v88, %v101
    %v103 = vcombine.high %v95, %v95
    %v104 = vcombine.high %v102, %v102
    %v105 = vcombine.high %v85, %v85
    %v107 = vunpack.c.l.s4 1983009808
    %v108 = vunpack.c.0.s8 %v107
    %v109 = vlaneseq
    %v110 = vshrl.u32 %v109, 7
    %v111 = vsub.s32 %v108, %v110
    %v112 = vrot.slane %v85, %v111
    %v114 = vunpack.c.l.s4 1983009808
    %v115 = vunpack.c.0.s8 %v114
    %v116 = vlaneseq
    %v117 = vshrl.u32 %v116, 7
    %v118 = vsub.s32 %v115, %v117
    %v119 = vrot.slane %v105, %v118
    %v120 = vcombine.high %v112, %v112
    %v128 = vpack.c.bf16 %v95, %v95
    %v129 = vpack.c.bf16 %v103, %v103
    %v130 = vpack.c.bf16 %v102, %v102
    %v131 = vpack.c.bf16 %v104, %v104
    %v132 = vpack.c.bf16 %v112, %v112
    %v133 = vpack.c.bf16 %v120, %v120
    %v134 = vpack.c.bf16 %v119, %v119
    %v135 = vld [vmem:[#allocation5] sm:$0xff]
    %v136 = vld [vmem:[#allocation5 + $0x8] sm:$0xff]
    %v137 = vld [vmem:[#allocation5 + $0x10] sm:$0xff]
    %v138 = vld [vmem:[#allocation5 + $0x18] sm:$0xff]
    %v139 = vld [vmem:[#allocation5 + $0x20] sm:$0xff]
    %v140 = vld [vmem:[#allocation5 + $0x28] sm:$0xff]
    %v141 = vld [vmem:[#allocation5 + $0x30] sm:$0xff]
    %v142 = vld [vmem:[#allocation5 + $0x38] sm:$0xff]
    %v143 = vld [vmem:[#allocation5 + $0x40] sm:$0xff]
    %v144 = vld [vmem:[#allocation5 + $0x48] sm:$0xff]
    %v145 = vld [vmem:[#allocation5 + $0x50] sm:$0xff]
    %v146 = vld [vmem:[#allocation5 + $0x58] sm:$0xff]
    %v147 = vld [vmem:[#allocation5 + $0x60] sm:$0xff]
    %v148 = vld [vmem:[#allocation5 + $0x68] sm:$0xff]
    %v149 = vld [vmem:[#allocation5 + $0x70] sm:$0xff]
    %v150 = vld [vmem:[#allocation5 + $0x78] sm:$0xff]
    %v151 = vld [vmem:[#allocation5 + $0x80] sm:$0xff]
    %v152 = vld [vmem:[#allocation5 + $0x88] sm:$0xff]
    %v153 = vld [vmem:[#allocation5 + $0x90] sm:$0xff]
    %v154 = vld [vmem:[#allocation5 + $0x98] sm:$0xff]
    %v155 = vld [vmem:[#allocation5 + $0xa0] sm:$0xff]
    %v156 = vld [vmem:[#allocation5 + $0xa8] sm:$0xff]
    %v157 = vld [vmem:[#allocation5 + $0xb0] sm:$0xff]
    %v158 = vld [vmem:[#allocation5 + $0xb8] sm:$0xff]
    %v159 = vld [vmem:[#allocation5 + $0xc0] sm:$0xff]
    %v160 = vld [vmem:[#allocation5 + $0xc8] sm:$0xff]
    %v161 = vld [vmem:[#allocation5 + $0xd0] sm:$0xff]
    %v162 = vld [vmem:[#allocation5 + $0xd8] sm:$0xff]
    %v163 = vld [vmem:[#allocation5 + $0xe0] sm:$0xff]
    %v164 = vld [vmem:[#allocation5 + $0xe8] sm:$0xff]
    %v165 = vld [vmem:[#allocation5 + $0xf0] sm:$0xff]
    %v166 = vld [vmem:[#allocation5 + $0xf8] sm:$0xff]
    %v167 = vld [vmem:[#allocation5 + $0x100] sm:$0xff]
    %v168 = vld [vmem:[#allocation5 + $0x108] sm:$0xff]
    %v169 = vld [vmem:[#allocation5 + $0x110] sm:$0xff]
    %v170 = vld [vmem:[#allocation5 + $0x118] sm:$0xff]
    %v171 = vld [vmem:[#allocation5 + $0x120] sm:$0xff]
    %v172 = vld [vmem:[#allocation5 + $0x128] sm:$0xff]
    %v173 = vld [vmem:[#allocation5 + $0x130] sm:$0xff]
    %v174 = vld [vmem:[#allocation5 + $0x138] sm:$0xff]
    %v175 = vld [vmem:[#allocation5 + $0x140] sm:$0xff]
    %v176 = vld [vmem:[#allocation5 + $0x148] sm:$0xff]
    %v177 = vld [vmem:[#allocation5 + $0x150] sm:$0xff]
    %v178 = vld [vmem:[#allocation5 + $0x158] sm:$0xff]
    %v179 = vld [vmem:[#allocation5 + $0x160] sm:$0xff]
    %v180 = vld [vmem:[#allocation5 + $0x168] sm:$0xff]
    %v181 = vld [vmem:[#allocation5 + $0x170] sm:$0xff]
    %v182 = vld [vmem:[#allocation5 + $0x178] sm:$0xff]
    %v183 = vld [vmem:[#allocation5 + $0x180] sm:$0xff]
    %v184 = vld [vmem:[#allocation5 + $0x188] sm:$0xff]
    %v185 = vld [vmem:[#allocation5 + $0x190] sm:$0xff]
    %v186 = vld [vmem:[#allocation5 + $0x198] sm:$0xff]
    %v187 = vld [vmem:[#allocation5 + $0x1a0] sm:$0xff]
    %v188 = vld [vmem:[#allocation5 + $0x1a8] sm:$0xff]
    %v189 = vld [vmem:[#allocation5 + $0x1b0] sm:$0xff]
    %v190 = vld [vmem:[#allocation5 + $0x1b8] sm:$0xff]
    %v191 = vld [vmem:[#allocation5 + $0x1c0] sm:$0xff]
    %v192 = vld [vmem:[#allocation5 + $0x1c8] sm:$0xff]
    %v193 = vld [vmem:[#allocation5 + $0x1d0] sm:$0xff]
    %v194 = vld [vmem:[#allocation5 + $0x1d8] sm:$0xff]
    %v195 = vld [vmem:[#allocation5 + $0x1e0] sm:$0xff]
    %v196 = vld [vmem:[#allocation5 + $0x1e8] sm:$0xff]
    %v197 = vld [vmem:[#allocation5 + $0x1f0] sm:$0xff]
    %v198 = vld [vmem:[#allocation5 + $0x1f8] sm:$0xff]
    %v199 = vld [vmem:[#allocation5 + $0x200] sm:$0xff]
    %v200 = vld [vmem:[#allocation5 + $0x208] sm:$0xff]
    %v201 = vld [vmem:[#allocation5 + $0x210] sm:$0xff]
    %v202 = vld [vmem:[#allocation5 + $0x218] sm:$0xff]
    %v203 = vld [vmem:[#allocation5 + $0x220] sm:$0xff]
    %v204 = vld [vmem:[#allocation5 + $0x228] sm:$0xff]
    %v205 = vld [vmem:[#allocation5 + $0x230] sm:$0xff]
    %v206 = vld [vmem:[#allocation5 + $0x238] sm:$0xff]
    %v207 = vld [vmem:[#allocation5 + $0x240] sm:$0xff]
    %v208 = vld [vmem:[#allocation5 + $0x248] sm:$0xff]
    %v209 = vld [vmem:[#allocation5 + $0x250] sm:$0xff]
    %v210 = vld [vmem:[#allocation5 + $0x258] sm:$0xff]
    %v211 = vld [vmem:[#allocation5 + $0x260] sm:$0xff]
    %v212 = vld [vmem:[#allocation5 + $0x268] sm:$0xff]
    %v213 = vld [vmem:[#allocation5 + $0x270] sm:$0xff]
    %v214 = vld [vmem:[#allocation5 + $0x278] sm:$0xff]
    %v215 = vld [vmem:[#allocation5 + $0x280] sm:$0xff]
    %v216 = vld [vmem:[#allocation5 + $0x288] sm:$0xff]
    %v217 = vld [vmem:[#allocation5 + $0x290] sm:$0xff]
    %v218 = vld [vmem:[#allocation5 + $0x298] sm:$0xff]
    %v219 = vld [vmem:[#allocation5 + $0x2a0] sm:$0xff]
    %v220 = vld [vmem:[#allocation5 + $0x2a8] sm:$0xff]
    %v221 = vld [vmem:[#allocation5 + $0x2b0] sm:$0xff]
    %v222 = vld [vmem:[#allocation5 + $0x2b8] sm:$0xff]
    %v223 = vld [vmem:[#allocation5 + $0x2c0] sm:$0xff]
    %v224 = vld [vmem:[#allocation5 + $0x2c8] sm:$0xff]
    %v225 = vld [vmem:[#allocation5 + $0x2d0] sm:$0xff]
    %v226 = vld [vmem:[#allocation5 + $0x2d8] sm:$0xff]
    %v227 = vld [vmem:[#allocation5 + $0x2e0] sm:$0xff]
    %v228 = vld [vmem:[#allocation5 + $0x2e8] sm:$0xff]
    %v229 = vld [vmem:[#allocation5 + $0x2f0] sm:$0xff]
    %v230 = vld [vmem:[#allocation5 + $0x2f8] sm:$0xff]
    %v231 = vld [vmem:[#allocation5 + $0x300] sm:$0xff]
    %v232 = vld [vmem:[#allocation5 + $0x308] sm:$0xff]
    %v233 = vld [vmem:[#allocation5 + $0x310] sm:$0xff]
    %v234 = vld [vmem:[#allocation5 + $0x318] sm:$0xff]
    %v235 = vld [vmem:[#allocation5 + $0x320] sm:$0xff]
    %v236 = vld [vmem:[#allocation5 + $0x328] sm:$0xff]
    %v237 = vld [vmem:[#allocation5 + $0x330] sm:$0xff]
    %v238 = vld [vmem:[#allocation5 + $0x338] sm:$0xff]
    %v239 = vld [vmem:[#allocation5 + $0x340] sm:$0xff]
    %v240 = vld [vmem:[#allocation5 + $0x348] sm:$0xff]
    %v241 = vld [vmem:[#allocation5 + $0x350] sm:$0xff]
    %v242 = vld [vmem:[#allocation5 + $0x358] sm:$0xff]
    %v243 = vld [vmem:[#allocation5 + $0x360] sm:$0xff]
    %v244 = vld [vmem:[#allocation5 + $0x368] sm:$0xff]
    %v245 = vld [vmem:[#allocation5 + $0x370] sm:$0xff]
    %v246 = vld [vmem:[#allocation5 + $0x378] sm:$0xff]
    %v247 = vld [vmem:[#allocation5 + $0x380] sm:$0xff]
    %v248 = vld [vmem:[#allocation5 + $0x388] sm:$0xff]
    %v249 = vld [vmem:[#allocation5 + $0x390] sm:$0xff]
    %v250 = vld [vmem:[#allocation5 + $0x398] sm:$0xff]
    %v251 = vld [vmem:[#allocation5 + $0x3a0] sm:$0xff]
    %v252 = vld [vmem:[#allocation5 + $0x3a8] sm:$0xff]
    %v253 = vld [vmem:[#allocation5 + $0x3b0] sm:$0xff]
    %v254 = vld [vmem:[#allocation5 + $0x3b8] sm:$0xff]
    %v255 = vld [vmem:[#allocation5 + $0x3c0] sm:$0xff]
    %v256 = vld [vmem:[#allocation5 + $0x3c8] sm:$0xff]
    %v257 = vld [vmem:[#allocation5 + $0x3d0] sm:$0xff]
    %v258 = vld [vmem:[#allocation5 + $0x3d8] sm:$0xff]
    %v259 = vld [vmem:[#allocation5 + $0x3e0] sm:$0xff]
    %v260 = vld [vmem:[#allocation5 + $0x3e8] sm:$0xff]
    %v261 = vld [vmem:[#allocation5 + $0x3f0] sm:$0xff]
    %v262 = vld [vmem:[#allocation5 + $0x3f8] sm:$0xff]
    %v263 = vld [vmem:[#allocation5 + $0x400] sm:$0xff]
    %v264 = vld [vmem:[#allocation5 + $0x408] sm:$0xff]
    %v265 = vld [vmem:[#allocation5 + $0x410] sm:$0xff]
    %v266 = vld [vmem:[#allocation5 + $0x418] sm:$0xff]
    %v267 = vld [vmem:[#allocation5 + $0x420] sm:$0xff]
    %v268 = vld [vmem:[#allocation5 + $0x428] sm:$0xff]
    %v269 = vld [vmem:[#allocation5 + $0x430] sm:$0xff]
    %v270 = vld [vmem:[#allocation5 + $0x438] sm:$0xff]
    %v271 = vld [vmem:[#allocation5 + $0x440] sm:$0xff]
    %v272 = vld [vmem:[#allocation5 + $0x448] sm:$0xff]
    %v273 = vld [vmem:[#allocation5 + $0x450] sm:$0xff]
    %v274 = vld [vmem:[#allocation5 + $0x458] sm:$0xff]
    %v275 = vld [vmem:[#allocation5 + $0x460] sm:$0xff]
    %v276 = vld [vmem:[#allocation5 + $0x468] sm:$0xff]
    %v277 = vld [vmem:[#allocation5 + $0x470] sm:$0xff]
    %v278 = vld [vmem:[#allocation5 + $0x478] sm:$0xff]
    %v279 = vld [vmem:[#allocation5 + $0x480] sm:$0xff]
    %v280 = vld [vmem:[#allocation5 + $0x488] sm:$0xff]
    %v281 = vld [vmem:[#allocation5 + $0x490] sm:$0xff]
    %v282 = vld [vmem:[#allocation5 + $0x498] sm:$0xff]
    %v283 = vld [vmem:[#allocation5 + $0x4a0] sm:$0xff]
    %v284 = vld [vmem:[#allocation5 + $0x4a8] sm:$0xff]
    %v285 = vld [vmem:[#allocation5 + $0x4b0] sm:$0xff]
    %v286 = vld [vmem:[#allocation5 + $0x4b8] sm:$0xff]
    %v287 = vld [vmem:[#allocation5 + $0x4c0] sm:$0xff]
    %v288 = vld [vmem:[#allocation5 + $0x4c8] sm:$0xff]
    %v289 = vld [vmem:[#allocation5 + $0x4d0] sm:$0xff]
    %v290 = vld [vmem:[#allocation5 + $0x4d8] sm:$0xff]
    %v291 = vld [vmem:[#allocation5 + $0x4e0] sm:$0xff]
    %v292 = vld [vmem:[#allocation5 + $0x4e8] sm:$0xff]
    %v293 = vld [vmem:[#allocation5 + $0x4f0] sm:$0xff]
    %v294 = vld [vmem:[#allocation5 + $0x4f8] sm:$0xff]
    %v295 = vld [vmem:[#allocation5 + $0x500] sm:$0xff]
    %v296 = vld [vmem:[#allocation5 + $0x508] sm:$0xff]
    %v297 = vld [vmem:[#allocation5 + $0x510] sm:$0xff]
    %v298 = vld [vmem:[#allocation5 + $0x518] sm:$0xff]
    %v299 = vld [vmem:[#allocation5 + $0x520] sm:$0xff]
    %v300 = vld [vmem:[#allocation5 + $0x528] sm:$0xff]
    %v301 = vld [vmem:[#allocation5 + $0x530] sm:$0xff]
    %v302 = vld [vmem:[#allocation5 + $0x538] sm:$0xff]
    %v303 = vld [vmem:[#allocation5 + $0x540] sm:$0xff]
    %v304 = vld [vmem:[#allocation5 + $0x548] sm:$0xff]
    %v305 = vld [vmem:[#allocation5 + $0x550] sm:$0xff]
    %v306 = vld [vmem:[#allocation5 + $0x558] sm:$0xff]
    %v307 = vld [vmem:[#allocation5 + $0x560] sm:$0xff]
    %v308 = vld [vmem:[#allocation5 + $0x568] sm:$0xff]
    %v309 = vld [vmem:[#allocation5 + $0x570] sm:$0xff]
    %v310 = vld [vmem:[#allocation5 + $0x578] sm:$0xff]
    %v311 = vld [vmem:[#allocation5 + $0x580] sm:$0xff]
    %v312 = vld [vmem:[#allocation5 + $0x588] sm:$0xff]
    %v313 = vld [vmem:[#allocation5 + $0x590] sm:$0xff]
    %v314 = vld [vmem:[#allocation5 + $0x598] sm:$0xff]
    %v315 = vld [vmem:[#allocation5 + $0x5a0] sm:$0xff]
    %v316 = vld [vmem:[#allocation5 + $0x5a8] sm:$0xff]
    %v317 = vld [vmem:[#allocation5 + $0x5b0] sm:$0xff]
    %v318 = vld [vmem:[#allocation5 + $0x5b8] sm:$0xff]
    %v319 = vld [vmem:[#allocation5 + $0x5c0] sm:$0xff]
    %v320 = vld [vmem:[#allocation5 + $0x5c8] sm:$0xff]
    %v321 = vld [vmem:[#allocation5 + $0x5d0] sm:$0xff]
    %v322 = vld [vmem:[#allocation5 + $0x5d8] sm:$0xff]
    %v323 = vld [vmem:[#allocation5 + $0x5e0] sm:$0xff]
    %v324 = vld [vmem:[#allocation5 + $0x5e8] sm:$0xff]
    %v325 = vld [vmem:[#allocation5 + $0x5f0] sm:$0xff]
    %v326 = vld [vmem:[#allocation5 + $0x5f8] sm:$0xff]
    %v327 = vld [vmem:[#allocation5 + $0x600] sm:$0xff]
    %v328 = vld [vmem:[#allocation5 + $0x608] sm:$0xff]
    %v329 = vld [vmem:[#allocation5 + $0x610] sm:$0xff]
    %v330 = vld [vmem:[#allocation5 + $0x618] sm:$0xff]
    %v331 = vld [vmem:[#allocation5 + $0x620] sm:$0xff]
    %v332 = vld [vmem:[#allocation5 + $0x628] sm:$0xff]
    %v333 = vld [vmem:[#allocation5 + $0x630] sm:$0xff]
    %v334 = vld [vmem:[#allocation5 + $0x638] sm:$0xff]
    %v335 = vld [vmem:[#allocation5 + $0x640] sm:$0xff]
    %v336 = vld [vmem:[#allocation5 + $0x648] sm:$0xff]
    %v337 = vld [vmem:[#allocation5 + $0x650] sm:$0xff]
    %v338 = vld [vmem:[#allocation5 + $0x658] sm:$0xff]
    %v339 = vld [vmem:[#allocation5 + $0x660] sm:$0xff]
    %v340 = vld [vmem:[#allocation5 + $0x668] sm:$0xff]
    %v341 = vld [vmem:[#allocation5 + $0x670] sm:$0xff]
    %v342 = vld [vmem:[#allocation5 + $0x678] sm:$0xff]
    %v343 = vld [vmem:[#allocation5 + $0x680] sm:$0xff]
    %v344 = vld [vmem:[#allocation5 + $0x688] sm:$0xff]
    %v345 = vld [vmem:[#allocation5 + $0x690] sm:$0xff]
    %v346 = vld [vmem:[#allocation5 + $0x698] sm:$0xff]
    %v347 = vld [vmem:[#allocation5 + $0x6a0] sm:$0xff]
    %v348 = vld [vmem:[#allocation5 + $0x6a8] sm:$0xff]
    %v349 = vld [vmem:[#allocation5 + $0x6b0] sm:$0xff]
    %v350 = vld [vmem:[#allocation5 + $0x6b8] sm:$0xff]
    %v351 = vld [vmem:[#allocation5 + $0x6c0] sm:$0xff]
    %v352 = vld [vmem:[#allocation5 + $0x6c8] sm:$0xff]
    %v353 = vld [vmem:[#allocation5 + $0x6d0] sm:$0xff]
    %v354 = vld [vmem:[#allocation5 + $0x6d8] sm:$0xff]
    %v355 = vld [vmem:[#allocation5 + $0x6e0] sm:$0xff]
    %v356 = vld [vmem:[#allocation5 + $0x6e8] sm:$0xff]
    %v357 = vld [vmem:[#allocation5 + $0x6f0] sm:$0xff]
    %v358 = vld [vmem:[#allocation5 + $0x6f8] sm:$0xff]
    %v359 = vld [vmem:[#allocation5 + $0x700] sm:$0xff]
    %v360 = vld [vmem:[#allocation5 + $0x708] sm:$0xff]
    %v361 = vld [vmem:[#allocation5 + $0x710] sm:$0xff]
    %v362 = vld [vmem:[#allocation5 + $0x718] sm:$0xff]
    %v363 = vld [vmem:[#allocation5 + $0x720] sm:$0xff]
    %v364 = vld [vmem:[#allocation5 + $0x728] sm:$0xff]
    %v365 = vld [vmem:[#allocation5 + $0x730] sm:$0xff]
    %v366 = vld [vmem:[#allocation5 + $0x738] sm:$0xff]
    %v367 = vld [vmem:[#allocation5 + $0x740] sm:$0xff]
    %v368 = vld [vmem:[#allocation5 + $0x748] sm:$0xff]
    %v369 = vld [vmem:[#allocation5 + $0x750] sm:$0xff]
    %v370 = vld [vmem:[#allocation5 + $0x758] sm:$0xff]
    %v371 = vld [vmem:[#allocation5 + $0x760] sm:$0xff]
    %v372 = vld [vmem:[#allocation5 + $0x768] sm:$0xff]
    %v373 = vld [vmem:[#allocation5 + $0x770] sm:$0xff]
    %v374 = vld [vmem:[#allocation5 + $0x778] sm:$0xff]
    %v375 = vld [vmem:[#allocation5 + $0x780] sm:$0xff]
    %v376 = vld [vmem:[#allocation5 + $0x788] sm:$0xff]
    %v377 = vld [vmem:[#allocation5 + $0x790] sm:$0xff]
    %v378 = vld [vmem:[#allocation5 + $0x798] sm:$0xff]
    %v379 = vld [vmem:[#allocation5 + $0x7a0] sm:$0xff]
    %v380 = vld [vmem:[#allocation5 + $0x7a8] sm:$0xff]
    %v381 = vld [vmem:[#allocation5 + $0x7b0] sm:$0xff]
    %v382 = vld [vmem:[#allocation5 + $0x7b8] sm:$0xff]
    %v383 = vld [vmem:[#allocation5 + $0x7c0] sm:$0xff]
    %v384 = vld [vmem:[#allocation5 + $0x7c8] sm:$0xff]
    %v385 = vld [vmem:[#allocation5 + $0x7d0] sm:$0xff]
    %v386 = vld [vmem:[#allocation5 + $0x7d8] sm:$0xff]
    %v387 = vld [vmem:[#allocation5 + $0x7e0] sm:$0xff]
    %v388 = vld [vmem:[#allocation5 + $0x7e8] sm:$0xff]
    %v389 = vld [vmem:[#allocation5 + $0x7f0] sm:$0xff]
    %v390 = vld [vmem:[#allocation5 + $0x7f8] sm:$0xff]
    %v391 = vld [vmem:[#allocation5 + $0x800] sm:$0xff]
    %v392 = vld [vmem:[#allocation5 + $0x808] sm:$0xff]
    %v393 = vld [vmem:[#allocation5 + $0x810] sm:$0xff]
    %v394 = vld [vmem:[#allocation5 + $0x818] sm:$0xff]
    %v395 = vld [vmem:[#allocation5 + $0x820] sm:$0xff]
    %v396 = vld [vmem:[#allocation5 + $0x828] sm:$0xff]
    %v397 = vld [vmem:[#allocation5 + $0x830] sm:$0xff]
    %v398 = vld [vmem:[#allocation5 + $0x838] sm:$0xff]
    %v399 = vld [vmem:[#allocation5 + $0x840] sm:$0xff]
    %v400 = vld [vmem:[#allocation5 + $0x848] sm:$0xff]
    %v401 = vld [vmem:[#allocation5 + $0x850] sm:$0xff]
    %v402 = vld [vmem:[#allocation5 + $0x858] sm:$0xff]
    %v403 = vld [vmem:[#allocation5 + $0x860] sm:$0xff]
    %v404 = vld [vmem:[#allocation5 + $0x868] sm:$0xff]
    %v405 = vld [vmem:[#allocation5 + $0x870] sm:$0xff]
    %v406 = vld [vmem:[#allocation5 + $0x878] sm:$0xff]
    %v407 = vld [vmem:[#allocation5 + $0x880] sm:$0xff]
    %v408 = vld [vmem:[#allocation5 + $0x888] sm:$0xff]
    %v409 = vld [vmem:[#allocation5 + $0x890] sm:$0xff]
    %v410 = vld [vmem:[#allocation5 + $0x898] sm:$0xff]
    %v411 = vld [vmem:[#allocation5 + $0x8a0] sm:$0xff]
    %v412 = vld [vmem:[#allocation5 + $0x8a8] sm:$0xff]
    %v413 = vld [vmem:[#allocation5 + $0x8b0] sm:$0xff]
    %v414 = vld [vmem:[#allocation5 + $0x8b8] sm:$0xff]
    %v415 = vld [vmem:[#allocation5 + $0x8c0] sm:$0xff]
    %v416 = vld [vmem:[#allocation5 + $0x8c8] sm:$0xff]
    %v417 = vld [vmem:[#allocation5 + $0x8d0] sm:$0xff]
    %v418 = vld [vmem:[#allocation5 + $0x8d8] sm:$0xff]
    %v419 = vld [vmem:[#allocation5 + $0x8e0] sm:$0xff]
    %v420 = vld [vmem:[#allocation5 + $0x8e8] sm:$0xff]
    %v421 = vld [vmem:[#allocation5 + $0x8f0] sm:$0xff]
    %v422 = vld [vmem:[#allocation5 + $0x8f8] sm:$0xff]
    %v423 = vld [vmem:[#allocation5 + $0x900] sm:$0xff]
    %v424 = vld [vmem:[#allocation5 + $0x908] sm:$0xff]
    %v425 = vld [vmem:[#allocation5 + $0x910] sm:$0xff]
    %v426 = vld [vmem:[#allocation5 + $0x918] sm:$0xff]
    %v427 = vld [vmem:[#allocation5 + $0x920] sm:$0xff]
    %v428 = vld [vmem:[#allocation5 + $0x928] sm:$0xff]
    %v429 = vld [vmem:[#allocation5 + $0x930] sm:$0xff]
    %v430 = vld [vmem:[#allocation5 + $0x938] sm:$0xff]
    %v431 = vld [vmem:[#allocation5 + $0x940] sm:$0xff]
    %v432 = vld [vmem:[#allocation5 + $0x948] sm:$0xff]
    %v433 = vld [vmem:[#allocation5 + $0x950] sm:$0xff]
    %v434 = vld [vmem:[#allocation5 + $0x958] sm:$0xff]
    %v435 = vld [vmem:[#allocation5 + $0x960] sm:$0xff]
    %v436 = vld [vmem:[#allocation5 + $0x968] sm:$0xff]
    %v437 = vld [vmem:[#allocation5 + $0x970] sm:$0xff]
    %v438 = vld [vmem:[#allocation5 + $0x978] sm:$0xff]
    %v439 = vld [vmem:[#allocation5 + $0x980] sm:$0xff]
    %v440 = vld [vmem:[#allocation5 + $0x988] sm:$0xff]
    %v441 = vld [vmem:[#allocation5 + $0x990] sm:$0xff]
    %v442 = vld [vmem:[#allocation5 + $0x998] sm:$0xff]
    %v443 = vld [vmem:[#allocation5 + $0x9a0] sm:$0xff]
    %v444 = vld [vmem:[#allocation5 + $0x9a8] sm:$0xff]
    %v445 = vld [vmem:[#allocation5 + $0x9b0] sm:$0xff]
    %v446 = vld [vmem:[#allocation5 + $0x9b8] sm:$0xff]
    %v447 = vld [vmem:[#allocation5 + $0x9c0] sm:$0xff]
    %v448 = vld [vmem:[#allocation5 + $0x9c8] sm:$0xff]
    %v449 = vld [vmem:[#allocation5 + $0x9d0] sm:$0xff]
    %v450 = vld [vmem:[#allocation5 + $0x9d8] sm:$0xff]
    %v451 = vld [vmem:[#allocation5 + $0x9e0] sm:$0xff]
    %v452 = vld [vmem:[#allocation5 + $0x9e8] sm:$0xff]
    %v453 = vld [vmem:[#allocation5 + $0x9f0] sm:$0xff]
    %v454 = vld [vmem:[#allocation5 + $0x9f8] sm:$0xff]
    %v455 = vld [vmem:[#allocation5 + $0xa00] sm:$0xff]
    %v456 = vld [vmem:[#allocation5 + $0xa08] sm:$0xff]
    %v457 = vld [vmem:[#allocation5 + $0xa10] sm:$0xff]
    %v458 = vld [vmem:[#allocation5 + $0xa18] sm:$0xff]
    %v459 = vld [vmem:[#allocation5 + $0xa20] sm:$0xff]
    %v460 = vld [vmem:[#allocation5 + $0xa28] sm:$0xff]
    %v461 = vld [vmem:[#allocation5 + $0xa30] sm:$0xff]
    %v462 = vld [vmem:[#allocation5 + $0xa38] sm:$0xff]
    %v463 = vld [vmem:[#allocation5 + $0xa40] sm:$0xff]
    %v464 = vld [vmem:[#allocation5 + $0xa48] sm:$0xff]
    %v465 = vld [vmem:[#allocation5 + $0xa50] sm:$0xff]
    %v466 = vld [vmem:[#allocation5 + $0xa58] sm:$0xff]
    %v467 = vld [vmem:[#allocation5 + $0xa60] sm:$0xff]
    %v468 = vld [vmem:[#allocation5 + $0xa68] sm:$0xff]
    %v469 = vld [vmem:[#allocation5 + $0xa70] sm:$0xff]
    %v470 = vld [vmem:[#allocation5 + $0xa78] sm:$0xff]
    %v471 = vld [vmem:[#allocation5 + $0xa80] sm:$0xff]
    %v472 = vld [vmem:[#allocation5 + $0xa88] sm:$0xff]
    %v473 = vld [vmem:[#allocation5 + $0xa90] sm:$0xff]
    %v474 = vld [vmem:[#allocation5 + $0xa98] sm:$0xff]
    %v475 = vld [vmem:[#allocation5 + $0xaa0] sm:$0xff]
    %v476 = vld [vmem:[#allocation5 + $0xaa8] sm:$0xff]
    %v477 = vld [vmem:[#allocation5 + $0xab0] sm:$0xff]
    %v478 = vld [vmem:[#allocation5 + $0xab8] sm:$0xff]
    %v479 = vld [vmem:[#allocation5 + $0xac0] sm:$0xff]
    %v480 = vld [vmem:[#allocation5 + $0xac8] sm:$0xff]
    %v481 = vld [vmem:[#allocation5 + $0xad0] sm:$0xff]
    %v482 = vld [vmem:[#allocation5 + $0xad8] sm:$0xff]
    %v483 = vld [vmem:[#allocation5 + $0xae0] sm:$0xff]
    %v484 = vld [vmem:[#allocation5 + $0xae8] sm:$0xff]
    %v485 = vld [vmem:[#allocation5 + $0xaf0] sm:$0xff]
    %v486 = vld [vmem:[#allocation5 + $0xaf8] sm:$0xff]
    %v487 = vld [vmem:[#allocation5 + $0xb00] sm:$0xff]
    %v488 = vld [vmem:[#allocation5 + $0xb08] sm:$0xff]
    %v489 = vld [vmem:[#allocation5 + $0xb10] sm:$0xff]
    %v490 = vld [vmem:[#allocation5 + $0xb18] sm:$0xff]
    %v491 = vld [vmem:[#allocation5 + $0xb20] sm:$0xff]
    %v492 = vld [vmem:[#allocation5 + $0xb28] sm:$0xff]
    %v493 = vld [vmem:[#allocation5 + $0xb30] sm:$0xff]
    %v494 = vld [vmem:[#allocation5 + $0xb38] sm:$0xff]
    %v495 = vld [vmem:[#allocation5 + $0xb40] sm:$0xff]
    %v496 = vld [vmem:[#allocation5 + $0xb48] sm:$0xff]
    %v497 = vld [vmem:[#allocation5 + $0xb50] sm:$0xff]
    %v498 = vld [vmem:[#allocation5 + $0xb58] sm:$0xff]
    %v499 = vld [vmem:[#allocation5 + $0xb60] sm:$0xff]
    %v500 = vld [vmem:[#allocation5 + $0xb68] sm:$0xff]
    %v501 = vld [vmem:[#allocation5 + $0xb70] sm:$0xff]
    %v502 = vld [vmem:[#allocation5 + $0xb78] sm:$0xff]
    %v503 = vld [vmem:[#allocation5 + $0xb80] sm:$0xff]
    %v504 = vld [vmem:[#allocation5 + $0xb88] sm:$0xff]
    %v505 = vld [vmem:[#allocation5 + $0xb90] sm:$0xff]
    %v506 = vld [vmem:[#allocation5 + $0xb98] sm:$0xff]
    %v507 = vld [vmem:[#allocation5 + $0xba0] sm:$0xff]
    %v508 = vld [vmem:[#allocation5 + $0xba8] sm:$0xff]
    %v509 = vld [vmem:[#allocation5 + $0xbb0] sm:$0xff]
    %v510 = vld [vmem:[#allocation5 + $0xbb8] sm:$0xff]
    %v511 = vld [vmem:[#allocation5 + $0xbc0] sm:$0xff]
    %v512 = vld [vmem:[#allocation5 + $0xbc8] sm:$0xff]
    %v513 = vld [vmem:[#allocation5 + $0xbd0] sm:$0xff]
    %v514 = vld [vmem:[#allocation5 + $0xbd8] sm:$0xff]
    %v515 = vld [vmem:[#allocation5 + $0xbe0] sm:$0xff]
    %v516 = vld [vmem:[#allocation5 + $0xbe8] sm:$0xff]
    %v517 = vld [vmem:[#allocation5 + $0xbf0] sm:$0xff]
    %v518 = vld [vmem:[#allocation5 + $0xbf8] sm:$0xff]
    %v519 = vld [vmem:[#allocation5 + $0xc00] sm:$0xff]
    %v520 = vld [vmem:[#allocation5 + $0xc08] sm:$0xff]
    %v521 = vld [vmem:[#allocation5 + $0xc10] sm:$0xff]
    %v522 = vld [vmem:[#allocation5 + $0xc18] sm:$0xff]
    %v523 = vld [vmem:[#allocation5 + $0xc20] sm:$0xff]
    %v524 = vld [vmem:[#allocation5 + $0xc28] sm:$0xff]
    %v525 = vld [vmem:[#allocation5 + $0xc30] sm:$0xff]
    %v526 = vld [vmem:[#allocation5 + $0xc38] sm:$0xff]
    %v527 = vld [vmem:[#allocation7] sm:$0xff]
    %v529 = vlaneseq
    %v530 = vshrl.u32 %v529, 7
    %v531 = vsub.s32 0, %v530
    %v532 = vrot.slane %v527, %v531
    %v533 = vlaneseq
    %v534 = vshrl.u32 %v533, 7
    %v535 = vsub.s32 1, %v534
    %v536 = vrot.slane %v527, %v535
    %v537 = vlaneseq
    %v538 = vshrl.u32 %v537, 7
    %v539 = vsub.s32 2, %v538
    %v540 = vrot.slane %v527, %v539
    %v541 = vlaneseq
    %v542 = vshrl.u32 %v541, 7
    %v543 = vsub.s32 3, %v542
    %v544 = vrot.slane %v527, %v543
    %v545 = vlaneseq
    %v546 = vshrl.u32 %v545, 7
    %v547 = vsub.s32 4, %v546
    %v548 = vrot.slane %v527, %v547
    %v549 = vlaneseq
    %v550 = vshrl.u32 %v549, 7
    %v551 = vsub.s32 5, %v550
    %v552 = vrot.slane %v527, %v551
    %v553 = vlaneseq
    %v554 = vshrl.u32 %v553, 7
    %v555 = vsub.s32 6, %v554
    %v556 = vrot.slane %v527, %v555
    %v557 = vlaneseq
    %v558 = vshrl.u32 %v557, 7
    %v559 = vsub.s32 7, %v558
    %v560 = vrot.slane %v527, %v559
    %v961 = vunpack.c.l.b16 %v135
    %v962 = vunpack.c.h.b16 %v135
    %v963 = vunpack.c.l.b16 %v136
    %v964 = vunpack.c.h.b16 %v136
    %v965 = vunpack.c.l.b16 %v137
    %v966 = vunpack.c.h.b16 %v137
    %v967 = vunpack.c.l.b16 %v138
    %v968 = vunpack.c.h.b16 %v138
    %v969 = vunpack.c.l.b16 %v139
    %v970 = vunpack.c.h.b16 %v139
    %v971 = vunpack.c.l.b16 %v140
    %v972 = vunpack.c.h.b16 %v140
    %v973 = vunpack.c.l.b16 %v141
    %v974 = vunpack.c.h.b16 %v141
    %v975 = vunpack.c.l.b16 %v142
    %v976 = vunpack.c.h.b16 %v142
    %v977 = vunpack.c.l.b16 %v143
    %v978 = vunpack.c.h.b16 %v143
    %v979 = vunpack.c.l.b16 %v144
    %v980 = vunpack.c.h.b16 %v144
    %v981 = vunpack.c.l.b16 %v145
    %v982 = vunpack.c.h.b16 %v145
    %v983 = vunpack.c.l.b16 %v146
    %v984 = vunpack.c.h.b16 %v146
    %v985 = vunpack.c.l.b16 %v147
    %v986 = vunpack.c.h.b16 %v147
    %v987 = vunpack.c.l.b16 %v148
    %v988 = vunpack.c.h.b16 %v148
    %v989 = vunpack.c.l.b16 %v149
    %v990 = vunpack.c.h.b16 %v149
    %v991 = vunpack.c.l.b16 %v150
    %v992 = vunpack.c.h.b16 %v150
    %v993 = vunpack.c.l.b16 %v151
    %v994 = vunpack.c.h.b16 %v151
    %v995 = vunpack.c.l.b16 %v152
    %v996 = vunpack.c.h.b16 %v152
    %v997 = vunpack.c.l.b16 %v153
    %v998 = vunpack.c.h.b16 %v153
    %v999 = vunpack.c.l.b16 %v154
    %v1000 = vunpack.c.h.b16 %v154
    %v1001 = vunpack.c.l.b16 %v155
    %v1002 = vunpack.c.h.b16 %v155
    %v1003 = vunpack.c.l.b16 %v156
    %v1004 = vunpack.c.h.b16 %v156
    %v1005 = vunpack.c.l.b16 %v157
    %v1006 = vunpack.c.h.b16 %v157
    %v1007 = vunpack.c.l.b16 %v158
    %v1008 = vunpack.c.h.b16 %v158
    %v1009 = vunpack.c.l.b16 %v159
    %v1010 = vunpack.c.h.b16 %v159
    %v1011 = vunpack.c.l.b16 %v160
    %v1012 = vunpack.c.h.b16 %v160
    %v1013 = vunpack.c.l.b16 %v161
    %v1014 = vunpack.c.h.b16 %v161
    %v1015 = vunpack.c.l.b16 %v162
    %v1016 = vunpack.c.h.b16 %v162
    %v1017 = vunpack.c.l.b16 %v163
    %v1018 = vunpack.c.h.b16 %v163
    %v1019 = vunpack.c.l.b16 %v164
    %v1020 = vunpack.c.h.b16 %v164
    %v1021 = vunpack.c.l.b16 %v165
    %v1022 = vunpack.c.h.b16 %v165
    %v1023 = vunpack.c.l.b16 %v166
    %v1024 = vunpack.c.h.b16 %v166
    %v1025 = vunpack.c.l.b16 %v167
    %v1026 = vunpack.c.h.b16 %v167
    %v1027 = vunpack.c.l.b16 %v168
    %v1028 = vunpack.c.h.b16 %v168
    %v1029 = vunpack.c.l.b16 %v169
    %v1030 = vunpack.c.h.b16 %v169
    %v1031 = vunpack.c.l.b16 %v170
    %v1032 = vunpack.c.h.b16 %v170
    %v1033 = vunpack.c.l.b16 %v171
    %v1034 = vunpack.c.h.b16 %v171
    %v1035 = vunpack.c.l.b16 %v172
    %v1036 = vunpack.c.h.b16 %v172
    %v1037 = vunpack.c.l.b16 %v173
    %v1038 = vunpack.c.h.b16 %v173
    %v1039 = vunpack.c.l.b16 %v174
    %v1040 = vunpack.c.h.b16 %v174
    %v1041 = vunpack.c.l.b16 %v175
    %v1042 = vunpack.c.h.b16 %v175
    %v1043 = vunpack.c.l.b16 %v176
    %v1044 = vunpack.c.h.b16 %v176
    %v1045 = vunpack.c.l.b16 %v177
    %v1046 = vunpack.c.h.b16 %v177
    %v1047 = vunpack.c.l.b16 %v178
    %v1048 = vunpack.c.h.b16 %v178
    %v1049 = vunpack.c.l.b16 %v179
    %v1050 = vunpack.c.h.b16 %v179
    %v1051 = vunpack.c.l.b16 %v180
    %v1052 = vunpack.c.h.b16 %v180
    %v1053 = vunpack.c.l.b16 %v181
    %v1054 = vunpack.c.h.b16 %v181
    %v1055 = vunpack.c.l.b16 %v182
    %v1056 = vunpack.c.h.b16 %v182
    %v1057 = vunpack.c.l.b16 %v183
    %v1058 = vunpack.c.h.b16 %v183
    %v1059 = vunpack.c.l.b16 %v184
    %v1060 = vunpack.c.h.b16 %v184
    %v1061 = vunpack.c.l.b16 %v185
    %v1062 = vunpack.c.h.b16 %v185
    %v1063 = vunpack.c.l.b16 %v186
    %v1064 = vunpack.c.h.b16 %v186
    %v1065 = vunpack.c.l.b16 %v187
    %v1066 = vunpack.c.h.b16 %v187
    %v1067 = vunpack.c.l.b16 %v188
    %v1068 = vunpack.c.h.b16 %v188
    %v1069 = vunpack.c.l.b16 %v189
    %v1070 = vunpack.c.h.b16 %v189
    %v1071 = vunpack.c.l.b16 %v190
    %v1072 = vunpack.c.h.b16 %v190
    %v1073 = vunpack.c.l.b16 %v191
    %v1074 = vunpack.c.h.b16 %v191
    %v1075 = vunpack.c.l.b16 %v192
    %v1076 = vunpack.c.h.b16 %v192
    %v1077 = vunpack.c.l.b16 %v193
    %v1078 = vunpack.c.h.b16 %v193
    %v1079 = vunpack.c.l.b16 %v194
    %v1080 = vunpack.c.h.b16 %v194
    %v1081 = vunpack.c.l.b16 %v195
    %v1082 = vunpack.c.h.b16 %v195
    %v1083 = vunpack.c.l.b16 %v196
    %v1084 = vunpack.c.h.b16 %v196
    %v1085 = vunpack.c.l.b16 %v197
    %v1086 = vunpack.c.h.b16 %v197
    %v1087 = vunpack.c.l.b16 %v198
    %v1088 = vunpack.c.h.b16 %v198
    %v1089 = vunpack.c.l.b16 %v199
    %v1090 = vunpack.c.h.b16 %v199
    %v1091 = vunpack.c.l.b16 %v200
    %v1092 = vunpack.c.h.b16 %v200
    %v1093 = vunpack.c.l.b16 %v201
    %v1094 = vunpack.c.h.b16 %v201
    %v1095 = vunpack.c.l.b16 %v202
    %v1096 = vunpack.c.h.b16 %v202
    %v1097 = vunpack.c.l.b16 %v203
    %v1098 = vunpack.c.h.b16 %v203
    %v1099 = vunpack.c.l.b16 %v204
    %v1100 = vunpack.c.h.b16 %v204
    %v1101 = vunpack.c.l.b16 %v205
    %v1102 = vunpack.c.h.b16 %v205
    %v1103 = vunpack.c.l.b16 %v206
    %v1104 = vunpack.c.h.b16 %v206
    %v1105 = vunpack.c.l.b16 %v207
    %v1106 = vunpack.c.h.b16 %v207
    %v1107 = vunpack.c.l.b16 %v208
    %v1108 = vunpack.c.h.b16 %v208
    %v1109 = vunpack.c.l.b16 %v209
    %v1110 = vunpack.c.h.b16 %v209
    %v1111 = vunpack.c.l.b16 %v210
    %v1112 = vunpack.c.h.b16 %v210
    %v1113 = vunpack.c.l.b16 %v211
    %v1114 = vunpack.c.h.b16 %v211
    %v1115 = vunpack.c.l.b16 %v212
    %v1116 = vunpack.c.h.b16 %v212
    %v1117 = vunpack.c.l.b16 %v213
    %v1118 = vunpack.c.h.b16 %v213
    %v1119 = vunpack.c.l.b16 %v214
    %v1120 = vunpack.c.h.b16 %v214
    %v1121 = vunpack.c.l.b16 %v215
    %v1122 = vunpack.c.h.b16 %v215
    %v1123 = vunpack.c.l.b16 %v216
    %v1124 = vunpack.c.h.b16 %v216
    %v1125 = vunpack.c.l.b16 %v217
    %v1126 = vunpack.c.h.b16 %v217
    %v1127 = vunpack.c.l.b16 %v218
    %v1128 = vunpack.c.h.b16 %v218
    %v1129 = vunpack.c.l.b16 %v219
    %v1130 = vunpack.c.h.b16 %v219
    %v1131 = vunpack.c.l.b16 %v220
    %v1132 = vunpack.c.h.b16 %v220
    %v1133 = vunpack.c.l.b16 %v221
    %v1134 = vunpack.c.h.b16 %v221
    %v1135 = vunpack.c.l.b16 %v222
    %v1136 = vunpack.c.h.b16 %v222
    %v1137 = vunpack.c.l.b16 %v223
    %v1138 = vunpack.c.h.b16 %v223
    %v1139 = vunpack.c.l.b16 %v224
    %v1140 = vunpack.c.h.b16 %v224
    %v1141 = vunpack.c.l.b16 %v225
    %v1142 = vunpack.c.h.b16 %v225
    %v1143 = vunpack.c.l.b16 %v226
    %v1144 = vunpack.c.h.b16 %v226
    %v1145 = vunpack.c.l.b16 %v227
    %v1146 = vunpack.c.h.b16 %v227
    %v1147 = vunpack.c.l.b16 %v228
    %v1148 = vunpack.c.h.b16 %v228
    %v1149 = vunpack.c.l.b16 %v229
    %v1150 = vunpack.c.h.b16 %v229
    %v1151 = vunpack.c.l.b16 %v230
    %v1152 = vunpack.c.h.b16 %v230
    %v1153 = vunpack.c.l.b16 %v231
    %v1154 = vunpack.c.h.b16 %v231
    %v1155 = vunpack.c.l.b16 %v232
    %v1156 = vunpack.c.h.b16 %v232
    %v1157 = vunpack.c.l.b16 %v233
    %v1158 = vunpack.c.h.b16 %v233
    %v1159 = vunpack.c.l.b16 %v234
    %v1160 = vunpack.c.h.b16 %v234
    %v1161 = vunpack.c.l.b16 %v235
    %v1162 = vunpack.c.h.b16 %v235
    %v1163 = vunpack.c.l.b16 %v236
    %v1164 = vunpack.c.h.b16 %v236
    %v1165 = vunpack.c.l.b16 %v237
    %v1166 = vunpack.c.h.b16 %v237
    %v1167 = vunpack.c.l.b16 %v238
    %v1168 = vunpack.c.h.b16 %v238
    %v1169 = vunpack.c.l.b16 %v239
    %v1170 = vunpack.c.h.b16 %v239
    %v1171 = vunpack.c.l.b16 %v240
    %v1172 = vunpack.c.h.b16 %v240
    %v1173 = vunpack.c.l.b16 %v241
    %v1174 = vunpack.c.h.b16 %v241
    %v1175 = vunpack.c.l.b16 %v242
    %v1176 = vunpack.c.h.b16 %v242
    %v1177 = vunpack.c.l.b16 %v243
    %v1178 = vunpack.c.h.b16 %v243
    %v1179 = vunpack.c.l.b16 %v244
    %v1180 = vunpack.c.h.b16 %v244
    %v1181 = vunpack.c.l.b16 %v245
    %v1182 = vunpack.c.h.b16 %v245
    %v1183 = vunpack.c.l.b16 %v246
    %v1184 = vunpack.c.h.b16 %v246
    %v1185 = vunpack.c.l.b16 %v247
    %v1186 = vunpack.c.h.b16 %v247
    %v1187 = vunpack.c.l.b16 %v248
    %v1188 = vunpack.c.h.b16 %v248
    %v1189 = vunpack.c.l.b16 %v249
    %v1190 = vunpack.c.h.b16 %v249
    %v1191 = vunpack.c.l.b16 %v250
    %v1192 = vunpack.c.h.b16 %v250
    %v1193 = vunpack.c.l.b16 %v251
    %v1194 = vunpack.c.h.b16 %v251
    %v1195 = vunpack.c.l.b16 %v252
    %v1196 = vunpack.c.h.b16 %v252
    %v1197 = vunpack.c.l.b16 %v253
    %v1198 = vunpack.c.h.b16 %v253
    %v1199 = vunpack.c.l.b16 %v254
    %v1200 = vunpack.c.h.b16 %v254
    %v1201 = vunpack.c.l.b16 %v255
    %v1202 = vunpack.c.h.b16 %v255
    %v1203 = vunpack.c.l.b16 %v256
    %v1204 = vunpack.c.h.b16 %v256
    %v1205 = vunpack.c.l.b16 %v257
    %v1206 = vunpack.c.h.b16 %v257
    %v1207 = vunpack.c.l.b16 %v258
    %v1208 = vunpack.c.h.b16 %v258
    %v1209 = vunpack.c.l.b16 %v259
    %v1210 = vunpack.c.h.b16 %v259
    %v1211 = vunpack.c.l.b16 %v260
    %v1212 = vunpack.c.h.b16 %v260
    %v1213 = vunpack.c.l.b16 %v261
    %v1214 = vunpack.c.h.b16 %v261
    %v1215 = vunpack.c.l.b16 %v262
    %v1216 = vunpack.c.h.b16 %v262
    %v1217 = vunpack.c.l.b16 %v263
    %v1218 = vunpack.c.h.b16 %v263
    %v1219 = vunpack.c.l.b16 %v264
    %v1220 = vunpack.c.h.b16 %v264
    %v1221 = vunpack.c.l.b16 %v265
    %v1222 = vunpack.c.h.b16 %v265
    %v1223 = vunpack.c.l.b16 %v266
    %v1224 = vunpack.c.h.b16 %v266
    %v1225 = vunpack.c.l.b16 %v267
    %v1226 = vunpack.c.h.b16 %v267
    %v1227 = vunpack.c.l.b16 %v268
    %v1228 = vunpack.c.h.b16 %v268
    %v1229 = vunpack.c.l.b16 %v269
    %v1230 = vunpack.c.h.b16 %v269
    %v1231 = vunpack.c.l.b16 %v270
    %v1232 = vunpack.c.h.b16 %v270
    %v1233 = vunpack.c.l.b16 %v271
    %v1234 = vunpack.c.h.b16 %v271
    %v1235 = vunpack.c.l.b16 %v272
    %v1236 = vunpack.c.h.b16 %v272
    %v1237 = vunpack.c.l.b16 %v273
    %v1238 = vunpack.c.h.b16 %v273
    %v1239 = vunpack.c.l.b16 %v274
    %v1240 = vunpack.c.h.b16 %v274
    %v1241 = vunpack.c.l.b16 %v275
    %v1242 = vunpack.c.h.b16 %v275
    %v1243 = vunpack.c.l.b16 %v276
    %v1244 = vunpack.c.h.b16 %v276
    %v1245 = vunpack.c.l.b16 %v277
    %v1246 = vunpack.c.h.b16 %v277
    %v1247 = vunpack.c.l.b16 %v278
    %v1248 = vunpack.c.h.b16 %v278
    %v1249 = vunpack.c.l.b16 %v279
    %v1250 = vunpack.c.h.b16 %v279
    %v1251 = vunpack.c.l.b16 %v280
    %v1252 = vunpack.c.h.b16 %v280
    %v1253 = vunpack.c.l.b16 %v281
    %v1254 = vunpack.c.h.b16 %v281
    %v1255 = vunpack.c.l.b16 %v282
    %v1256 = vunpack.c.h.b16 %v282
    %v1257 = vunpack.c.l.b16 %v283
    %v1258 = vunpack.c.h.b16 %v283
    %v1259 = vunpack.c.l.b16 %v284
    %v1260 = vunpack.c.h.b16 %v284
    %v1261 = vunpack.c.l.b16 %v285
    %v1262 = vunpack.c.h.b16 %v285
    %v1263 = vunpack.c.l.b16 %v286
    %v1264 = vunpack.c.h.b16 %v286
    %v1265 = vunpack.c.l.b16 %v287
    %v1266 = vunpack.c.h.b16 %v287
    %v1267 = vunpack.c.l.b16 %v288
    %v1268 = vunpack.c.h.b16 %v288
    %v1269 = vunpack.c.l.b16 %v289
    %v1270 = vunpack.c.h.b16 %v289
    %v1271 = vunpack.c.l.b16 %v290
    %v1272 = vunpack.c.h.b16 %v290
    %v1273 = vunpack.c.l.b16 %v291
    %v1274 = vunpack.c.h.b16 %v291
    %v1275 = vunpack.c.l.b16 %v292
    %v1276 = vunpack.c.h.b16 %v292
    %v1277 = vunpack.c.l.b16 %v293
    %v1278 = vunpack.c.h.b16 %v293
    %v1279 = vunpack.c.l.b16 %v294
    %v1280 = vunpack.c.h.b16 %v294
    %v1281 = vunpack.c.l.b16 %v295
    %v1282 = vunpack.c.h.b16 %v295
    %v1283 = vunpack.c.l.b16 %v296
    %v1284 = vunpack.c.h.b16 %v296
    %v1285 = vunpack.c.l.b16 %v297
    %v1286 = vunpack.c.h.b16 %v297
    %v1287 = vunpack.c.l.b16 %v298
    %v1288 = vunpack.c.h.b16 %v298
    %v1289 = vunpack.c.l.b16 %v299
    %v1290 = vunpack.c.h.b16 %v299
    %v1291 = vunpack.c.l.b16 %v300
    %v1292 = vunpack.c.h.b16 %v300
    %v1293 = vunpack.c.l.b16 %v301
    %v1294 = vunpack.c.h.b16 %v301
    %v1295 = vunpack.c.l.b16 %v302
    %v1296 = vunpack.c.h.b16 %v302
    %v1297 = vunpack.c.l.b16 %v303
    %v1298 = vunpack.c.h.b16 %v303
    %v1299 = vunpack.c.l.b16 %v304
    %v1300 = vunpack.c.h.b16 %v304
    %v1301 = vunpack.c.l.b16 %v305
    %v1302 = vunpack.c.h.b16 %v305
    %v1303 = vunpack.c.l.b16 %v306
    %v1304 = vunpack.c.h.b16 %v306
    %v1305 = vunpack.c.l.b16 %v307
    %v1306 = vunpack.c.h.b16 %v307
    %v1307 = vunpack.c.l.b16 %v308
    %v1308 = vunpack.c.h.b16 %v308
    %v1309 = vunpack.c.l.b16 %v309
    %v1310 = vunpack.c.h.b16 %v309
    %v1311 = vunpack.c.l.b16 %v310
    %v1312 = vunpack.c.h.b16 %v310
    %v1313 = vunpack.c.l.b16 %v311
    %v1314 = vunpack.c.h.b16 %v311
    %v1315 = vunpack.c.l.b16 %v312
    %v1316 = vunpack.c.h.b16 %v312
    %v1317 = vunpack.c.l.b16 %v313
    %v1318 = vunpack.c.h.b16 %v313
    %v1319 = vunpack.c.l.b16 %v314
    %v1320 = vunpack.c.h.b16 %v314
    %v1321 = vunpack.c.l.b16 %v315
    %v1322 = vunpack.c.h.b16 %v315
    %v1323 = vunpack.c.l.b16 %v316
    %v1324 = vunpack.c.h.b16 %v316
    %v1325 = vunpack.c.l.b16 %v317
    %v1326 = vunpack.c.h.b16 %v317
    %v1327 = vunpack.c.l.b16 %v318
    %v1328 = vunpack.c.h.b16 %v318
    %v1329 = vunpack.c.l.b16 %v319
    %v1330 = vunpack.c.h.b16 %v319
    %v1331 = vunpack.c.l.b16 %v320
    %v1332 = vunpack.c.h.b16 %v320
    %v1333 = vunpack.c.l.b16 %v321
    %v1334 = vunpack.c.h.b16 %v321
    %v1335 = vunpack.c.l.b16 %v322
    %v1336 = vunpack.c.h.b16 %v322
    %v1337 = vunpack.c.l.b16 %v323
    %v1338 = vunpack.c.h.b16 %v323
    %v1339 = vunpack.c.l.b16 %v324
    %v1340 = vunpack.c.h.b16 %v324
    %v1341 = vunpack.c.l.b16 %v325
    %v1342 = vunpack.c.h.b16 %v325
    %v1343 = vunpack.c.l.b16 %v326
    %v1344 = vunpack.c.h.b16 %v326
    %v1345 = vunpack.c.l.b16 %v327
    %v1346 = vunpack.c.h.b16 %v327
    %v1347 = vunpack.c.l.b16 %v328
    %v1348 = vunpack.c.h.b16 %v328
    %v1349 = vunpack.c.l.b16 %v329
    %v1350 = vunpack.c.h.b16 %v329
    %v1351 = vunpack.c.l.b16 %v330
    %v1352 = vunpack.c.h.b16 %v330
    %v1353 = vunpack.c.l.b16 %v331
    %v1354 = vunpack.c.h.b16 %v331
    %v1355 = vunpack.c.l.b16 %v332
    %v1356 = vunpack.c.h.b16 %v332
    %v1357 = vunpack.c.l.b16 %v333
    %v1358 = vunpack.c.h.b16 %v333
    %v1359 = vunpack.c.l.b16 %v334
    %v1360 = vunpack.c.h.b16 %v334
    %v1361 = vunpack.c.l.b16 %v335
    %v1362 = vunpack.c.h.b16 %v335
    %v1363 = vunpack.c.l.b16 %v336
    %v1364 = vunpack.c.h.b16 %v336
    %v1365 = vunpack.c.l.b16 %v337
    %v1366 = vunpack.c.h.b16 %v337
    %v1367 = vunpack.c.l.b16 %v338
    %v1368 = vunpack.c.h.b16 %v338
    %v1369 = vunpack.c.l.b16 %v339
    %v1370 = vunpack.c.h.b16 %v339
    %v1371 = vunpack.c.l.b16 %v340
    %v1372 = vunpack.c.h.b16 %v340
    %v1373 = vunpack.c.l.b16 %v341
    %v1374 = vunpack.c.h.b16 %v341
    %v1375 = vunpack.c.l.b16 %v342
    %v1376 = vunpack.c.h.b16 %v342
    %v1377 = vunpack.c.l.b16 %v343
    %v1378 = vunpack.c.h.b16 %v343
    %v1379 = vunpack.c.l.b16 %v344
    %v1380 = vunpack.c.h.b16 %v344
    %v1381 = vunpack.c.l.b16 %v345
    %v1382 = vunpack.c.h.b16 %v345
    %v1383 = vunpack.c.l.b16 %v346
    %v1384 = vunpack.c.h.b16 %v346
    %v1385 = vunpack.c.l.b16 %v347
    %v1386 = vunpack.c.h.b16 %v347
    %v1387 = vunpack.c.l.b16 %v348
    %v1388 = vunpack.c.h.b16 %v348
    %v1389 = vunpack.c.l.b16 %v349
    %v1390 = vunpack.c.h.b16 %v349
    %v1391 = vunpack.c.l.b16 %v350
    %v1392 = vunpack.c.h.b16 %v350
    %v1393 = vunpack.c.l.b16 %v351
    %v1394 = vunpack.c.h.b16 %v351
    %v1395 = vunpack.c.l.b16 %v352
    %v1396 = vunpack.c.h.b16 %v352
    %v1397 = vunpack.c.l.b16 %v353
    %v1398 = vunpack.c.h.b16 %v353
    %v1399 = vunpack.c.l.b16 %v354
    %v1400 = vunpack.c.h.b16 %v354
    %v1401 = vunpack.c.l.b16 %v355
    %v1402 = vunpack.c.h.b16 %v355
    %v1403 = vunpack.c.l.b16 %v356
    %v1404 = vunpack.c.h.b16 %v356
    %v1405 = vunpack.c.l.b16 %v357
    %v1406 = vunpack.c.h.b16 %v357
    %v1407 = vunpack.c.l.b16 %v358
    %v1408 = vunpack.c.h.b16 %v358
    %v1409 = vunpack.c.l.b16 %v359
    %v1410 = vunpack.c.h.b16 %v359
    %v1411 = vunpack.c.l.b16 %v360
    %v1412 = vunpack.c.h.b16 %v360
    %v1413 = vunpack.c.l.b16 %v361
    %v1414 = vunpack.c.h.b16 %v361
    %v1415 = vunpack.c.l.b16 %v362
    %v1416 = vunpack.c.h.b16 %v362
    %v1417 = vunpack.c.l.b16 %v363
    %v1418 = vunpack.c.h.b16 %v363
    %v1419 = vunpack.c.l.b16 %v364
    %v1420 = vunpack.c.h.b16 %v364
    %v1421 = vunpack.c.l.b16 %v365
    %v1422 = vunpack.c.h.b16 %v365
    %v1423 = vunpack.c.l.b16 %v366
    %v1424 = vunpack.c.h.b16 %v366
    %v1425 = vunpack.c.l.b16 %v367
    %v1426 = vunpack.c.h.b16 %v367
    %v1427 = vunpack.c.l.b16 %v368
    %v1428 = vunpack.c.h.b16 %v368
    %v1429 = vunpack.c.l.b16 %v369
    %v1430 = vunpack.c.h.b16 %v369
    %v1431 = vunpack.c.l.b16 %v370
    %v1432 = vunpack.c.h.b16 %v370
    %v1433 = vunpack.c.l.b16 %v371
    %v1434 = vunpack.c.h.b16 %v371
    %v1435 = vunpack.c.l.b16 %v372
    %v1436 = vunpack.c.h.b16 %v372
    %v1437 = vunpack.c.l.b16 %v373
    %v1438 = vunpack.c.h.b16 %v373
    %v1439 = vunpack.c.l.b16 %v374
    %v1440 = vunpack.c.h.b16 %v374
    %v1441 = vunpack.c.l.b16 %v375
    %v1442 = vunpack.c.h.b16 %v375
    %v1443 = vunpack.c.l.b16 %v376
    %v1444 = vunpack.c.h.b16 %v376
    %v1445 = vunpack.c.l.b16 %v377
    %v1446 = vunpack.c.h.b16 %v377
    %v1447 = vunpack.c.l.b16 %v378
    %v1448 = vunpack.c.h.b16 %v378
    %v1449 = vunpack.c.l.b16 %v379
    %v1450 = vunpack.c.h.b16 %v379
    %v1451 = vunpack.c.l.b16 %v380
    %v1452 = vunpack.c.h.b16 %v380
    %v1453 = vunpack.c.l.b16 %v381
    %v1454 = vunpack.c.h.b16 %v381
    %v1455 = vunpack.c.l.b16 %v382
    %v1456 = vunpack.c.h.b16 %v382
    %v1457 = vunpack.c.l.b16 %v383
    %v1458 = vunpack.c.h.b16 %v383
    %v1459 = vunpack.c.l.b16 %v384
    %v1460 = vunpack.c.h.b16 %v384
    %v1461 = vunpack.c.l.b16 %v385
    %v1462 = vunpack.c.h.b16 %v385
    %v1463 = vunpack.c.l.b16 %v386
    %v1464 = vunpack.c.h.b16 %v386
    %v1465 = vunpack.c.l.b16 %v387
    %v1466 = vunpack.c.h.b16 %v387
    %v1467 = vunpack.c.l.b16 %v388
    %v1468 = vunpack.c.h.b16 %v388
    %v1469 = vunpack.c.l.b16 %v389
    %v1470 = vunpack.c.h.b16 %v389
    %v1471 = vunpack.c.l.b16 %v390
    %v1472 = vunpack.c.h.b16 %v390
    %v1473 = vunpack.c.l.b16 %v391
    %v1474 = vunpack.c.h.b16 %v391
    %v1475 = vunpack.c.l.b16 %v392
    %v1476 = vunpack.c.h.b16 %v392
    %v1477 = vunpack.c.l.b16 %v393
    %v1478 = vunpack.c.h.b16 %v393
    %v1479 = vunpack.c.l.b16 %v394
    %v1480 = vunpack.c.h.b16 %v394
    %v1481 = vunpack.c.l.b16 %v395
    %v1482 = vunpack.c.h.b16 %v395
    %v1483 = vunpack.c.l.b16 %v396
    %v1484 = vunpack.c.h.b16 %v396
    %v1485 = vunpack.c.l.b16 %v397
    %v1486 = vunpack.c.h.b16 %v397
    %v1487 = vunpack.c.l.b16 %v398
    %v1488 = vunpack.c.h.b16 %v398
    %v1489 = vunpack.c.l.b16 %v399
    %v1490 = vunpack.c.h.b16 %v399
    %v1491 = vunpack.c.l.b16 %v400
    %v1492 = vunpack.c.h.b16 %v400
    %v1493 = vunpack.c.l.b16 %v401
    %v1494 = vunpack.c.h.b16 %v401
    %v1495 = vunpack.c.l.b16 %v402
    %v1496 = vunpack.c.h.b16 %v402
    %v1497 = vunpack.c.l.b16 %v403
    %v1498 = vunpack.c.h.b16 %v403
    %v1499 = vunpack.c.l.b16 %v404
    %v1500 = vunpack.c.h.b16 %v404
    %v1501 = vunpack.c.l.b16 %v405
    %v1502 = vunpack.c.h.b16 %v405
    %v1503 = vunpack.c.l.b16 %v406
    %v1504 = vunpack.c.h.b16 %v406
    %v1505 = vunpack.c.l.b16 %v407
    %v1506 = vunpack.c.h.b16 %v407
    %v1507 = vunpack.c.l.b16 %v408
    %v1508 = vunpack.c.h.b16 %v408
    %v1509 = vunpack.c.l.b16 %v409
    %v1510 = vunpack.c.h.b16 %v409
    %v1511 = vunpack.c.l.b16 %v410
    %v1512 = vunpack.c.h.b16 %v410
    %v1513 = vunpack.c.l.b16 %v411
    %v1514 = vunpack.c.h.b16 %v411
    %v1515 = vunpack.c.l.b16 %v412
    %v1516 = vunpack.c.h.b16 %v412
    %v1517 = vunpack.c.l.b16 %v413
    %v1518 = vunpack.c.h.b16 %v413
    %v1519 = vunpack.c.l.b16 %v414
    %v1520 = vunpack.c.h.b16 %v414
    %v1521 = vunpack.c.l.b16 %v415
    %v1522 = vunpack.c.h.b16 %v415
    %v1523 = vunpack.c.l.b16 %v416
    %v1524 = vunpack.c.h.b16 %v416
    %v1525 = vunpack.c.l.b16 %v417
    %v1526 = vunpack.c.h.b16 %v417
    %v1527 = vunpack.c.l.b16 %v418
    %v1528 = vunpack.c.h.b16 %v418
    %v1529 = vunpack.c.l.b16 %v419
    %v1530 = vunpack.c.h.b16 %v419
    %v1531 = vunpack.c.l.b16 %v420
    %v1532 = vunpack.c.h.b16 %v420
    %v1533 = vunpack.c.l.b16 %v421
    %v1534 = vunpack.c.h.b16 %v421
    %v1535 = vunpack.c.l.b16 %v422
    %v1536 = vunpack.c.h.b16 %v422
    %v1537 = vunpack.c.l.b16 %v423
    %v1538 = vunpack.c.h.b16 %v423
    %v1539 = vunpack.c.l.b16 %v424
    %v1540 = vunpack.c.h.b16 %v424
    %v1541 = vunpack.c.l.b16 %v425
    %v1542 = vunpack.c.h.b16 %v425
    %v1543 = vunpack.c.l.b16 %v426
    %v1544 = vunpack.c.h.b16 %v426
    %v1545 = vunpack.c.l.b16 %v427
    %v1546 = vunpack.c.h.b16 %v427
    %v1547 = vunpack.c.l.b16 %v428
    %v1548 = vunpack.c.h.b16 %v428
    %v1549 = vunpack.c.l.b16 %v429
    %v1550 = vunpack.c.h.b16 %v429
    %v1551 = vunpack.c.l.b16 %v430
    %v1552 = vunpack.c.h.b16 %v430
    %v1553 = vunpack.c.l.b16 %v431
    %v1554 = vunpack.c.h.b16 %v431
    %v1555 = vunpack.c.l.b16 %v432
    %v1556 = vunpack.c.h.b16 %v432
    %v1557 = vunpack.c.l.b16 %v433
    %v1558 = vunpack.c.h.b16 %v433
    %v1559 = vunpack.c.l.b16 %v434
    %v1560 = vunpack.c.h.b16 %v434
    %v1561 = vunpack.c.l.b16 %v435
    %v1562 = vunpack.c.h.b16 %v435
    %v1563 = vunpack.c.l.b16 %v436
    %v1564 = vunpack.c.h.b16 %v436
    %v1565 = vunpack.c.l.b16 %v437
    %v1566 = vunpack.c.h.b16 %v437
    %v1567 = vunpack.c.l.b16 %v438
    %v1568 = vunpack.c.h.b16 %v438
    %v1569 = vunpack.c.l.b16 %v439
    %v1570 = vunpack.c.h.b16 %v439
    %v1571 = vunpack.c.l.b16 %v440
    %v1572 = vunpack.c.h.b16 %v440
    %v1573 = vunpack.c.l.b16 %v441
    %v1574 = vunpack.c.h.b16 %v441
    %v1575 = vunpack.c.l.b16 %v442
    %v1576 = vunpack.c.h.b16 %v442
    %v1577 = vunpack.c.l.b16 %v443
    %v1578 = vunpack.c.h.b16 %v443
    %v1579 = vunpack.c.l.b16 %v444
    %v1580 = vunpack.c.h.b16 %v444
    %v1581 = vunpack.c.l.b16 %v445
    %v1582 = vunpack.c.h.b16 %v445
    %v1583 = vunpack.c.l.b16 %v446
    %v1584 = vunpack.c.h.b16 %v446
    %v1585 = vunpack.c.l.b16 %v447
    %v1586 = vunpack.c.h.b16 %v447
    %v1587 = vunpack.c.l.b16 %v448
    %v1588 = vunpack.c.h.b16 %v448
    %v1589 = vunpack.c.l.b16 %v449
    %v1590 = vunpack.c.h.b16 %v449
    %v1591 = vunpack.c.l.b16 %v450
    %v1592 = vunpack.c.h.b16 %v450
    %v1593 = vunpack.c.l.b16 %v451
    %v1594 = vunpack.c.h.b16 %v451
    %v1595 = vunpack.c.l.b16 %v452
    %v1596 = vunpack.c.h.b16 %v452
    %v1597 = vunpack.c.l.b16 %v453
    %v1598 = vunpack.c.h.b16 %v453
    %v1599 = vunpack.c.l.b16 %v454
    %v1600 = vunpack.c.h.b16 %v454
    %v1601 = vunpack.c.l.b16 %v455
    %v1602 = vunpack.c.h.b16 %v455
    %v1603 = vunpack.c.l.b16 %v456
    %v1604 = vunpack.c.h.b16 %v456
    %v1605 = vunpack.c.l.b16 %v457
    %v1606 = vunpack.c.h.b16 %v457
    %v1607 = vunpack.c.l.b16 %v458
    %v1608 = vunpack.c.h.b16 %v458
    %v1609 = vunpack.c.l.b16 %v459
    %v1610 = vunpack.c.h.b16 %v459
    %v1611 = vunpack.c.l.b16 %v460
    %v1612 = vunpack.c.h.b16 %v460
    %v1613 = vunpack.c.l.b16 %v461
    %v1614 = vunpack.c.h.b16 %v461
    %v1615 = vunpack.c.l.b16 %v462
    %v1616 = vunpack.c.h.b16 %v462
    %v1617 = vunpack.c.l.b16 %v463
    %v1618 = vunpack.c.h.b16 %v463
    %v1619 = vunpack.c.l.b16 %v464
    %v1620 = vunpack.c.h.b16 %v464
    %v1621 = vunpack.c.l.b16 %v465
    %v1622 = vunpack.c.h.b16 %v465
    %v1623 = vunpack.c.l.b16 %v466
    %v1624 = vunpack.c.h.b16 %v466
    %v1625 = vunpack.c.l.b16 %v467
    %v1626 = vunpack.c.h.b16 %v467
    %v1627 = vunpack.c.l.b16 %v468
    %v1628 = vunpack.c.h.b16 %v468
    %v1629 = vunpack.c.l.b16 %v469
    %v1630 = vunpack.c.h.b16 %v469
    %v1631 = vunpack.c.l.b16 %v470
    %v1632 = vunpack.c.h.b16 %v470
    %v1633 = vunpack.c.l.b16 %v471
    %v1634 = vunpack.c.h.b16 %v471
    %v1635 = vunpack.c.l.b16 %v472
    %v1636 = vunpack.c.h.b16 %v472
    %v1637 = vunpack.c.l.b16 %v473
    %v1638 = vunpack.c.h.b16 %v473
    %v1639 = vunpack.c.l.b16 %v474
    %v1640 = vunpack.c.h.b16 %v474
    %v1641 = vunpack.c.l.b16 %v475
    %v1642 = vunpack.c.h.b16 %v475
    %v1643 = vunpack.c.l.b16 %v476
    %v1644 = vunpack.c.h.b16 %v476
    %v1645 = vunpack.c.l.b16 %v477
    %v1646 = vunpack.c.h.b16 %v477
    %v1647 = vunpack.c.l.b16 %v478
    %v1648 = vunpack.c.h.b16 %v478
    %v1649 = vunpack.c.l.b16 %v479
    %v1650 = vunpack.c.h.b16 %v479
    %v1651 = vunpack.c.l.b16 %v480
    %v1652 = vunpack.c.h.b16 %v480
    %v1653 = vunpack.c.l.b16 %v481
    %v1654 = vunpack.c.h.b16 %v481
    %v1655 = vunpack.c.l.b16 %v482
    %v1656 = vunpack.c.h.b16 %v482
    %v1657 = vunpack.c.l.b16 %v483
    %v1658 = vunpack.c.h.b16 %v483
    %v1659 = vunpack.c.l.b16 %v484
    %v1660 = vunpack.c.h.b16 %v484
    %v1661 = vunpack.c.l.b16 %v485
    %v1662 = vunpack.c.h.b16 %v485
    %v1663 = vunpack.c.l.b16 %v486
    %v1664 = vunpack.c.h.b16 %v486
    %v1665 = vunpack.c.l.b16 %v487
    %v1666 = vunpack.c.h.b16 %v487
    %v1667 = vunpack.c.l.b16 %v488
    %v1668 = vunpack.c.h.b16 %v488
    %v1669 = vunpack.c.l.b16 %v489
    %v1670 = vunpack.c.h.b16 %v489
    %v1671 = vunpack.c.l.b16 %v490
    %v1672 = vunpack.c.h.b16 %v490
    %v1673 = vunpack.c.l.b16 %v491
    %v1674 = vunpack.c.h.b16 %v491
    %v1675 = vunpack.c.l.b16 %v492
    %v1676 = vunpack.c.h.b16 %v492
    %v1677 = vunpack.c.l.b16 %v493
    %v1678 = vunpack.c.h.b16 %v493
    %v1679 = vunpack.c.l.b16 %v494
    %v1680 = vunpack.c.h.b16 %v494
    %v1681 = vunpack.c.l.b16 %v495
    %v1682 = vunpack.c.h.b16 %v495
    %v1683 = vunpack.c.l.b16 %v496
    %v1684 = vunpack.c.h.b16 %v496
    %v1685 = vunpack.c.l.b16 %v497
    %v1686 = vunpack.c.h.b16 %v497
    %v1687 = vunpack.c.l.b16 %v498
    %v1688 = vunpack.c.h.b16 %v498
    %v1689 = vunpack.c.l.b16 %v499
    %v1690 = vunpack.c.h.b16 %v499
    %v1691 = vunpack.c.l.b16 %v500
    %v1692 = vunpack.c.h.b16 %v500
    %v1693 = vunpack.c.l.b16 %v501
    %v1694 = vunpack.c.h.b16 %v501
    %v1695 = vunpack.c.l.b16 %v502
    %v1696 = vunpack.c.h.b16 %v502
    %v1697 = vunpack.c.l.b16 %v503
    %v1698 = vunpack.c.h.b16 %v503
    %v1699 = vunpack.c.l.b16 %v504
    %v1700 = vunpack.c.h.b16 %v504
    %v1701 = vunpack.c.l.b16 %v505
    %v1702 = vunpack.c.h.b16 %v505
    %v1703 = vunpack.c.l.b16 %v506
    %v1704 = vunpack.c.h.b16 %v506
    %v1705 = vunpack.c.l.b16 %v507
    %v1706 = vunpack.c.h.b16 %v507
    %v1707 = vunpack.c.l.b16 %v508
    %v1708 = vunpack.c.h.b16 %v508
    %v1709 = vunpack.c.l.b16 %v509
    %v1710 = vunpack.c.h.b16 %v509
    %v1711 = vunpack.c.l.b16 %v510
    %v1712 = vunpack.c.h.b16 %v510
    %v1713 = vunpack.c.l.b16 %v511
    %v1714 = vunpack.c.h.b16 %v511
    %v1715 = vunpack.c.l.b16 %v512
    %v1716 = vunpack.c.h.b16 %v512
    %v1717 = vunpack.c.l.b16 %v513
    %v1718 = vunpack.c.h.b16 %v513
    %v1719 = vunpack.c.l.b16 %v514
    %v1720 = vunpack.c.h.b16 %v514
    %v1721 = vunpack.c.l.b16 %v515
    %v1722 = vunpack.c.h.b16 %v515
    %v1723 = vunpack.c.l.b16 %v516
    %v1724 = vunpack.c.h.b16 %v516
    %v1725 = vunpack.c.l.b16 %v517
    %v1726 = vunpack.c.h.b16 %v517
    %v1727 = vunpack.c.l.b16 %v518
    %v1728 = vunpack.c.h.b16 %v518
    %v1729 = vunpack.c.l.b16 %v519
    %v1730 = vunpack.c.h.b16 %v519
    %v1731 = vunpack.c.l.b16 %v520
    %v1732 = vunpack.c.h.b16 %v520
    %v1733 = vunpack.c.l.b16 %v521
    %v1734 = vunpack.c.h.b16 %v521
    %v1735 = vunpack.c.l.b16 %v522
    %v1736 = vunpack.c.h.b16 %v522
    %v1737 = vunpack.c.l.b16 %v523
    %v1738 = vunpack.c.h.b16 %v523
    %v1739 = vunpack.c.l.b16 %v524
    %v1740 = vunpack.c.h.b16 %v524
    %v1741 = vunpack.c.l.b16 %v525
    %v1742 = vunpack.c.h.b16 %v525
    %v1743 = vunpack.c.l.b16 %v526
    %v1744 = vunpack.c.h.b16 %v526
    %v1745 = vpack.c.b16 %v969, %v961
    %v1746 = vpack.c.b16 %v970, %v962
    %v1747 = vpack.c.b16 %v971, %v963
    %v1748 = vpack.c.b16 %v972, %v964
    %v1749 = vpack.c.b16 %v973, %v965
    %v1750 = vpack.c.b16 %v974, %v966
    %v1751 = vpack.c.b16 %v975, %v967
    %v1752 = vpack.c.b16 %v976, %v968
    %v1753 = vpack.c.b16 %v985, %v977
    %v1754 = vpack.c.b16 %v986, %v978
    %v1755 = vpack.c.b16 %v987, %v979
    %v1756 = vpack.c.b16 %v988, %v980
    %v1757 = vpack.c.b16 %v989, %v981
    %v1758 = vpack.c.b16 %v990, %v982
    %v1759 = vpack.c.b16 %v991, %v983
    %v1760 = vpack.c.b16 %v992, %v984
    %v1761 = vpack.c.b16 %v1001, %v993
    %v1762 = vpack.c.b16 %v1002, %v994
    %v1763 = vpack.c.b16 %v1003, %v995
    %v1764 = vpack.c.b16 %v1004, %v996
    %v1765 = vpack.c.b16 %v1005, %v997
    %v1766 = vpack.c.b16 %v1006, %v998
    %v1767 = vpack.c.b16 %v1007, %v999
    %v1768 = vpack.c.b16 %v1008, %v1000
    %v1769 = vpack.c.b16 %v1017, %v1009
    %v1770 = vpack.c.b16 %v1018, %v1010
    %v1771 = vpack.c.b16 %v1019, %v1011
    %v1772 = vpack.c.b16 %v1020, %v1012
    %v1773 = vpack.c.b16 %v1021, %v1013
    %v1774 = vpack.c.b16 %v1022, %v1014
    %v1775 = vpack.c.b16 %v1023, %v1015
    %v1776 = vpack.c.b16 %v1024, %v1016
    %v1777 = vpack.c.b16 %v1033, %v1025
    %v1778 = vpack.c.b16 %v1034, %v1026
    %v1779 = vpack.c.b16 %v1035, %v1027
    %v1780 = vpack.c.b16 %v1036, %v1028
    %v1781 = vpack.c.b16 %v1037, %v1029
    %v1782 = vpack.c.b16 %v1038, %v1030
    %v1783 = vpack.c.b16 %v1039, %v1031
    %v1784 = vpack.c.b16 %v1040, %v1032
    %v1785 = vpack.c.b16 %v1049, %v1041
    %v1786 = vpack.c.b16 %v1050, %v1042
    %v1787 = vpack.c.b16 %v1051, %v1043
    %v1788 = vpack.c.b16 %v1052, %v1044
    %v1789 = vpack.c.b16 %v1053, %v1045
    %v1790 = vpack.c.b16 %v1054, %v1046
    %v1791 = vpack.c.b16 %v1055, %v1047
    %v1792 = vpack.c.b16 %v1056, %v1048
    %v1793 = vpack.c.b16 %v1065, %v1057
    %v1794 = vpack.c.b16 %v1066, %v1058
    %v1795 = vpack.c.b16 %v1067, %v1059
    %v1796 = vpack.c.b16 %v1068, %v1060
    %v1797 = vpack.c.b16 %v1069, %v1061
    %v1798 = vpack.c.b16 %v1070, %v1062
    %v1799 = vpack.c.b16 %v1071, %v1063
    %v1800 = vpack.c.b16 %v1072, %v1064
    %v1801 = vpack.c.b16 %v1081, %v1073
    %v1802 = vpack.c.b16 %v1082, %v1074
    %v1803 = vpack.c.b16 %v1083, %v1075
    %v1804 = vpack.c.b16 %v1084, %v1076
    %v1805 = vpack.c.b16 %v1085, %v1077
    %v1806 = vpack.c.b16 %v1086, %v1078
    %v1807 = vpack.c.b16 %v1087, %v1079
    %v1808 = vpack.c.b16 %v1088, %v1080
    %v1809 = vpack.c.b16 %v1097, %v1089
    %v1810 = vpack.c.b16 %v1098, %v1090
    %v1811 = vpack.c.b16 %v1099, %v1091
    %v1812 = vpack.c.b16 %v1100, %v1092
    %v1813 = vpack.c.b16 %v1101, %v1093
    %v1814 = vpack.c.b16 %v1102, %v1094
    %v1815 = vpack.c.b16 %v1103, %v1095
    %v1816 = vpack.c.b16 %v1104, %v1096
    %v1817 = vpack.c.b16 %v1113, %v1105
    %v1818 = vpack.c.b16 %v1114, %v1106
    %v1819 = vpack.c.b16 %v1115, %v1107
    %v1820 = vpack.c.b16 %v1116, %v1108
    %v1821 = vpack.c.b16 %v1117, %v1109
    %v1822 = vpack.c.b16 %v1118, %v1110
    %v1823 = vpack.c.b16 %v1119, %v1111
    %v1824 = vpack.c.b16 %v1120, %v1112
    %v1825 = vpack.c.b16 %v1129, %v1121
    %v1826 = vpack.c.b16 %v1130, %v1122
    %v1827 = vpack.c.b16 %v1131, %v1123
    %v1828 = vpack.c.b16 %v1132, %v1124
    %v1829 = vpack.c.b16 %v1133, %v1125
    %v1830 = vpack.c.b16 %v1134, %v1126
    %v1831 = vpack.c.b16 %v1135, %v1127
    %v1832 = vpack.c.b16 %v1136, %v1128
    %v1833 = vpack.c.b16 %v1145, %v1137
    %v1834 = vpack.c.b16 %v1146, %v1138
    %v1835 = vpack.c.b16 %v1147, %v1139
    %v1836 = vpack.c.b16 %v1148, %v1140
    %v1837 = vpack.c.b16 %v1149, %v1141
    %v1838 = vpack.c.b16 %v1150, %v1142
    %v1839 = vpack.c.b16 %v1151, %v1143
    %v1840 = vpack.c.b16 %v1152, %v1144
    %v1841 = vpack.c.b16 %v1161, %v1153
    %v1842 = vpack.c.b16 %v1162, %v1154
    %v1843 = vpack.c.b16 %v1163, %v1155
    %v1844 = vpack.c.b16 %v1164, %v1156
    %v1845 = vpack.c.b16 %v1165, %v1157
    %v1846 = vpack.c.b16 %v1166, %v1158
    %v1847 = vpack.c.b16 %v1167, %v1159
    %v1848 = vpack.c.b16 %v1168, %v1160
    %v1849 = vpack.c.b16 %v1177, %v1169
    %v1850 = vpack.c.b16 %v1178, %v1170
    %v1851 = vpack.c.b16 %v1179, %v1171
    %v1852 = vpack.c.b16 %v1180, %v1172
    %v1853 = vpack.c.b16 %v1181, %v1173
    %v1854 = vpack.c.b16 %v1182, %v1174
    %v1855 = vpack.c.b16 %v1183, %v1175
    %v1856 = vpack.c.b16 %v1184, %v1176
    %v1857 = vpack.c.b16 %v1193, %v1185
    %v1858 = vpack.c.b16 %v1194, %v1186
    %v1859 = vpack.c.b16 %v1195, %v1187
    %v1860 = vpack.c.b16 %v1196, %v1188
    %v1861 = vpack.c.b16 %v1197, %v1189
    %v1862 = vpack.c.b16 %v1198, %v1190
    %v1863 = vpack.c.b16 %v1199, %v1191
    %v1864 = vpack.c.b16 %v1200, %v1192
    %v1865 = vpack.c.b16 %v1209, %v1201
    %v1866 = vpack.c.b16 %v1210, %v1202
    %v1867 = vpack.c.b16 %v1211, %v1203
    %v1868 = vpack.c.b16 %v1212, %v1204
    %v1869 = vpack.c.b16 %v1213, %v1205
    %v1870 = vpack.c.b16 %v1214, %v1206
    %v1871 = vpack.c.b16 %v1215, %v1207
    %v1872 = vpack.c.b16 %v1216, %v1208
    %v1873 = vpack.c.b16 %v1225, %v1217
    %v1874 = vpack.c.b16 %v1226, %v1218
    %v1875 = vpack.c.b16 %v1227, %v1219
    %v1876 = vpack.c.b16 %v1228, %v1220
    %v1877 = vpack.c.b16 %v1229, %v1221
    %v1878 = vpack.c.b16 %v1230, %v1222
    %v1879 = vpack.c.b16 %v1231, %v1223
    %v1880 = vpack.c.b16 %v1232, %v1224
    %v1881 = vpack.c.b16 %v1241, %v1233
    %v1882 = vpack.c.b16 %v1242, %v1234
    %v1883 = vpack.c.b16 %v1243, %v1235
    %v1884 = vpack.c.b16 %v1244, %v1236
    %v1885 = vpack.c.b16 %v1245, %v1237
    %v1886 = vpack.c.b16 %v1246, %v1238
    %v1887 = vpack.c.b16 %v1247, %v1239
    %v1888 = vpack.c.b16 %v1248, %v1240
    %v1889 = vpack.c.b16 %v1257, %v1249
    %v1890 = vpack.c.b16 %v1258, %v1250
    %v1891 = vpack.c.b16 %v1259, %v1251
    %v1892 = vpack.c.b16 %v1260, %v1252
    %v1893 = vpack.c.b16 %v1261, %v1253
    %v1894 = vpack.c.b16 %v1262, %v1254
    %v1895 = vpack.c.b16 %v1263, %v1255
    %v1896 = vpack.c.b16 %v1264, %v1256
    %v1897 = vpack.c.b16 %v1273, %v1265
    %v1898 = vpack.c.b16 %v1274, %v1266
    %v1899 = vpack.c.b16 %v1275, %v1267
    %v1900 = vpack.c.b16 %v1276, %v1268
    %v1901 = vpack.c.b16 %v1277, %v1269
    %v1902 = vpack.c.b16 %v1278, %v1270
    %v1903 = vpack.c.b16 %v1279, %v1271
    %v1904 = vpack.c.b16 %v1280, %v1272
    %v1905 = vpack.c.b16 %v1289, %v1281
    %v1906 = vpack.c.b16 %v1290, %v1282
    %v1907 = vpack.c.b16 %v1291, %v1283
    %v1908 = vpack.c.b16 %v1292, %v1284
    %v1909 = vpack.c.b16 %v1293, %v1285
    %v1910 = vpack.c.b16 %v1294, %v1286
    %v1911 = vpack.c.b16 %v1295, %v1287
    %v1912 = vpack.c.b16 %v1296, %v1288
    %v1913 = vpack.c.b16 %v1305, %v1297
    %v1914 = vpack.c.b16 %v1306, %v1298
    %v1915 = vpack.c.b16 %v1307, %v1299
    %v1916 = vpack.c.b16 %v1308, %v1300
    %v1917 = vpack.c.b16 %v1309, %v1301
    %v1918 = vpack.c.b16 %v1310, %v1302
    %v1919 = vpack.c.b16 %v1311, %v1303
    %v1920 = vpack.c.b16 %v1312, %v1304
    %v1921 = vpack.c.b16 %v1321, %v1313
    %v1922 = vpack.c.b16 %v1322, %v1314
    %v1923 = vpack.c.b16 %v1323, %v1315
    %v1924 = vpack.c.b16 %v1324, %v1316
    %v1925 = vpack.c.b16 %v1325, %v1317
    %v1926 = vpack.c.b16 %v1326, %v1318
    %v1927 = vpack.c.b16 %v1327, %v1319
    %v1928 = vpack.c.b16 %v1328, %v1320
    %v1929 = vpack.c.b16 %v1337, %v1329
    %v1930 = vpack.c.b16 %v1338, %v1330
    %v1931 = vpack.c.b16 %v1339, %v1331
    %v1932 = vpack.c.b16 %v1340, %v1332
    %v1933 = vpack.c.b16 %v1341, %v1333
    %v1934 = vpack.c.b16 %v1342, %v1334
    %v1935 = vpack.c.b16 %v1343, %v1335
    %v1936 = vpack.c.b16 %v1344, %v1336
    %v1937 = vpack.c.b16 %v1353, %v1345
    %v1938 = vpack.c.b16 %v1354, %v1346
    %v1939 = vpack.c.b16 %v1355, %v1347
    %v1940 = vpack.c.b16 %v1356, %v1348
    %v1941 = vpack.c.b16 %v1357, %v1349
    %v1942 = vpack.c.b16 %v1358, %v1350
    %v1943 = vpack.c.b16 %v1359, %v1351
    %v1944 = vpack.c.b16 %v1360, %v1352
    %v1945 = vpack.c.b16 %v1369, %v1361
    %v1946 = vpack.c.b16 %v1370, %v1362
    %v1947 = vpack.c.b16 %v1371, %v1363
    %v1948 = vpack.c.b16 %v1372, %v1364
    %v1949 = vpack.c.b16 %v1373, %v1365
    %v1950 = vpack.c.b16 %v1374, %v1366
    %v1951 = vpack.c.b16 %v1375, %v1367
    %v1952 = vpack.c.b16 %v1376, %v1368
    %v1953 = vpack.c.b16 %v1385, %v1377
    %v1954 = vpack.c.b16 %v1386, %v1378
    %v1955 = vpack.c.b16 %v1387, %v1379
    %v1956 = vpack.c.b16 %v1388, %v1380
    %v1957 = vpack.c.b16 %v1389, %v1381
    %v1958 = vpack.c.b16 %v1390, %v1382
    %v1959 = vpack.c.b16 %v1391, %v1383
    %v1960 = vpack.c.b16 %v1392, %v1384
    %v1961 = vpack.c.b16 %v1401, %v1393
    %v1962 = vpack.c.b16 %v1402, %v1394
    %v1963 = vpack.c.b16 %v1403, %v1395
    %v1964 = vpack.c.b16 %v1404, %v1396
    %v1965 = vpack.c.b16 %v1405, %v1397
    %v1966 = vpack.c.b16 %v1406, %v1398
    %v1967 = vpack.c.b16 %v1407, %v1399
    %v1968 = vpack.c.b16 %v1408, %v1400
    %v1969 = vpack.c.b16 %v1417, %v1409
    %v1970 = vpack.c.b16 %v1418, %v1410
    %v1971 = vpack.c.b16 %v1419, %v1411
    %v1972 = vpack.c.b16 %v1420, %v1412
    %v1973 = vpack.c.b16 %v1421, %v1413
    %v1974 = vpack.c.b16 %v1422, %v1414
    %v1975 = vpack.c.b16 %v1423, %v1415
    %v1976 = vpack.c.b16 %v1424, %v1416
    %v1977 = vpack.c.b16 %v1433, %v1425
    %v1978 = vpack.c.b16 %v1434, %v1426
    %v1979 = vpack.c.b16 %v1435, %v1427
    %v1980 = vpack.c.b16 %v1436, %v1428
    %v1981 = vpack.c.b16 %v1437, %v1429
    %v1982 = vpack.c.b16 %v1438, %v1430
    %v1983 = vpack.c.b16 %v1439, %v1431
    %v1984 = vpack.c.b16 %v1440, %v1432
    %v1985 = vpack.c.b16 %v1449, %v1441
    %v1986 = vpack.c.b16 %v1450, %v1442
    %v1987 = vpack.c.b16 %v1451, %v1443
    %v1988 = vpack.c.b16 %v1452, %v1444
    %v1989 = vpack.c.b16 %v1453, %v1445
    %v1990 = vpack.c.b16 %v1454, %v1446
    %v1991 = vpack.c.b16 %v1455, %v1447
    %v1992 = vpack.c.b16 %v1456, %v1448
    %v1993 = vpack.c.b16 %v1465, %v1457
    %v1994 = vpack.c.b16 %v1466, %v1458
    %v1995 = vpack.c.b16 %v1467, %v1459
    %v1996 = vpack.c.b16 %v1468, %v1460
    %v1997 = vpack.c.b16 %v1469, %v1461
    %v1998 = vpack.c.b16 %v1470, %v1462
    %v1999 = vpack.c.b16 %v1471, %v1463
    %v2000 = vpack.c.b16 %v1472, %v1464
    %v2001 = vpack.c.b16 %v1481, %v1473
    %v2002 = vpack.c.b16 %v1482, %v1474
    %v2003 = vpack.c.b16 %v1483, %v1475
    %v2004 = vpack.c.b16 %v1484, %v1476
    %v2005 = vpack.c.b16 %v1485, %v1477
    %v2006 = vpack.c.b16 %v1486, %v1478
    %v2007 = vpack.c.b16 %v1487, %v1479
    %v2008 = vpack.c.b16 %v1488, %v1480
    %v2009 = vpack.c.b16 %v1497, %v1489
    %v2010 = vpack.c.b16 %v1498, %v1490
    %v2011 = vpack.c.b16 %v1499, %v1491
    %v2012 = vpack.c.b16 %v1500, %v1492
    %v2013 = vpack.c.b16 %v1501, %v1493
    %v2014 = vpack.c.b16 %v1502, %v1494
    %v2015 = vpack.c.b16 %v1503, %v1495
    %v2016 = vpack.c.b16 %v1504, %v1496
    %v2017 = vpack.c.b16 %v1513, %v1505
    %v2018 = vpack.c.b16 %v1514, %v1506
    %v2019 = vpack.c.b16 %v1515, %v1507
    %v2020 = vpack.c.b16 %v1516, %v1508
    %v2021 = vpack.c.b16 %v1517, %v1509
    %v2022 = vpack.c.b16 %v1518, %v1510
    %v2023 = vpack.c.b16 %v1519, %v1511
    %v2024 = vpack.c.b16 %v1520, %v1512
    %v2025 = vpack.c.b16 %v1529, %v1521
    %v2026 = vpack.c.b16 %v1530, %v1522
    %v2027 = vpack.c.b16 %v1531, %v1523
    %v2028 = vpack.c.b16 %v1532, %v1524
    %v2029 = vpack.c.b16 %v1533, %v1525
    %v2030 = vpack.c.b16 %v1534, %v1526
    %v2031 = vpack.c.b16 %v1535, %v1527
    %v2032 = vpack.c.b16 %v1536, %v1528
    %v2033 = vpack.c.b16 %v1545, %v1537
    %v2034 = vpack.c.b16 %v1546, %v1538
    %v2035 = vpack.c.b16 %v1547, %v1539
    %v2036 = vpack.c.b16 %v1548, %v1540
    %v2037 = vpack.c.b16 %v1549, %v1541
    %v2038 = vpack.c.b16 %v1550, %v1542
    %v2039 = vpack.c.b16 %v1551, %v1543
    %v2040 = vpack.c.b16 %v1552, %v1544
    %v2041 = vpack.c.b16 %v1561, %v1553
    %v2042 = vpack.c.b16 %v1562, %v1554
    %v2043 = vpack.c.b16 %v1563, %v1555
    %v2044 = vpack.c.b16 %v1564, %v1556
    %v2045 = vpack.c.b16 %v1565, %v1557
    %v2046 = vpack.c.b16 %v1566, %v1558
    %v2047 = vpack.c.b16 %v1567, %v1559
    %v2048 = vpack.c.b16 %v1568, %v1560
    %v2049 = vpack.c.b16 %v1577, %v1569
    %v2050 = vpack.c.b16 %v1578, %v1570
    %v2051 = vpack.c.b16 %v1579, %v1571
    %v2052 = vpack.c.b16 %v1580, %v1572
    %v2053 = vpack.c.b16 %v1581, %v1573
    %v2054 = vpack.c.b16 %v1582, %v1574
    %v2055 = vpack.c.b16 %v1583, %v1575
    %v2056 = vpack.c.b16 %v1584, %v1576
    %v2057 = vpack.c.b16 %v1593, %v1585
    %v2058 = vpack.c.b16 %v1594, %v1586
    %v2059 = vpack.c.b16 %v1595, %v1587
    %v2060 = vpack.c.b16 %v1596, %v1588
    %v2061 = vpack.c.b16 %v1597, %v1589
    %v2062 = vpack.c.b16 %v1598, %v1590
    %v2063 = vpack.c.b16 %v1599, %v1591
    %v2064 = vpack.c.b16 %v1600, %v1592
    %v2065 = vpack.c.b16 %v1609, %v1601
    %v2066 = vpack.c.b16 %v1610, %v1602
    %v2067 = vpack.c.b16 %v1611, %v1603
    %v2068 = vpack.c.b16 %v1612, %v1604
    %v2069 = vpack.c.b16 %v1613, %v1605
    %v2070 = vpack.c.b16 %v1614, %v1606
    %v2071 = vpack.c.b16 %v1615, %v1607
    %v2072 = vpack.c.b16 %v1616, %v1608
    %v2073 = vpack.c.b16 %v1625, %v1617
    %v2074 = vpack.c.b16 %v1626, %v1618
    %v2075 = vpack.c.b16 %v1627, %v1619
    %v2076 = vpack.c.b16 %v1628, %v1620
    %v2077 = vpack.c.b16 %v1629, %v1621
    %v2078 = vpack.c.b16 %v1630, %v1622
    %v2079 = vpack.c.b16 %v1631, %v1623
    %v2080 = vpack.c.b16 %v1632, %v1624
    %v2081 = vpack.c.b16 %v1641, %v1633
    %v2082 = vpack.c.b16 %v1642, %v1634
    %v2083 = vpack.c.b16 %v1643, %v1635
    %v2084 = vpack.c.b16 %v1644, %v1636
    %v2085 = vpack.c.b16 %v1645, %v1637
    %v2086 = vpack.c.b16 %v1646, %v1638
    %v2087 = vpack.c.b16 %v1647, %v1639
    %v2088 = vpack.c.b16 %v1648, %v1640
    %v2089 = vpack.c.b16 %v1657, %v1649
    %v2090 = vpack.c.b16 %v1658, %v1650
    %v2091 = vpack.c.b16 %v1659, %v1651
    %v2092 = vpack.c.b16 %v1660, %v1652
    %v2093 = vpack.c.b16 %v1661, %v1653
    %v2094 = vpack.c.b16 %v1662, %v1654
    %v2095 = vpack.c.b16 %v1663, %v1655
    %v2096 = vpack.c.b16 %v1664, %v1656
    %v2097 = vpack.c.b16 %v1673, %v1665
    %v2098 = vpack.c.b16 %v1674, %v1666
    %v2099 = vpack.c.b16 %v1675, %v1667
    %v2100 = vpack.c.b16 %v1676, %v1668
    %v2101 = vpack.c.b16 %v1677, %v1669
    %v2102 = vpack.c.b16 %v1678, %v1670
    %v2103 = vpack.c.b16 %v1679, %v1671
    %v2104 = vpack.c.b16 %v1680, %v1672
    %v2105 = vpack.c.b16 %v1689, %v1681
    %v2106 = vpack.c.b16 %v1690, %v1682
    %v2107 = vpack.c.b16 %v1691, %v1683
    %v2108 = vpack.c.b16 %v1692, %v1684
    %v2109 = vpack.c.b16 %v1693, %v1685
    %v2110 = vpack.c.b16 %v1694, %v1686
    %v2111 = vpack.c.b16 %v1695, %v1687
    %v2112 = vpack.c.b16 %v1696, %v1688
    %v2113 = vpack.c.b16 %v1705, %v1697
    %v2114 = vpack.c.b16 %v1706, %v1698
    %v2115 = vpack.c.b16 %v1707, %v1699
    %v2116 = vpack.c.b16 %v1708, %v1700
    %v2117 = vpack.c.b16 %v1709, %v1701
    %v2118 = vpack.c.b16 %v1710, %v1702
    %v2119 = vpack.c.b16 %v1711, %v1703
    %v2120 = vpack.c.b16 %v1712, %v1704
    %v2121 = vpack.c.b16 %v1721, %v1713
    %v2122 = vpack.c.b16 %v1722, %v1714
    %v2123 = vpack.c.b16 %v1723, %v1715
    %v2124 = vpack.c.b16 %v1724, %v1716
    %v2125 = vpack.c.b16 %v1725, %v1717
    %v2126 = vpack.c.b16 %v1726, %v1718
    %v2127 = vpack.c.b16 %v1727, %v1719
    %v2128 = vpack.c.b16 %v1728, %v1720
    %v2129 = vpack.c.b16 %v1737, %v1729
    %v2130 = vpack.c.b16 %v1738, %v1730
    %v2131 = vpack.c.b16 %v1739, %v1731
    %v2132 = vpack.c.b16 %v1740, %v1732
    %v2133 = vpack.c.b16 %v1741, %v1733
    %v2134 = vpack.c.b16 %v1742, %v1734
    %v2135 = vpack.c.b16 %v1743, %v1735
    %v2136 = vpack.c.b16 %v1744, %v1736
    %vm2529 = vcmask 130048
    %v2531 = vsel %vm2529, %v134, 0
    %2533 = vmatprep.subr.bf16.mxu0 %v1746
    %2534 = vmatpush1.bf16.msra.mxu0 %v1745
    %2535 = vmatprep.subr.bf16.mxu0 %v1754
    %2536 = vmatpush1.bf16.msra.mxu0 %v1753
    %2537 = vmatprep.subr.bf16.mxu0 %v1762
    %2538 = vmatpush1.bf16.msra.mxu0 %v1761
    %2539 = vmatprep.subr.bf16.mxu0 %v1770
    %2540 = vmatpush1.bf16.msra.mxu0 %v1769
    %2541 = vmatprep.subr.bf16.mxu0 %v1778
    %2542 = vmatpush1.bf16.msra.mxu0 %v1777
    %2543 = vmatprep.subr.bf16.mxu0 %v1786
    %2544 = vmatpush1.bf16.msra.mxu0 %v1785
    %2545 = vmatprep.subr.bf16.mxu0 %v1794
    %2546 = vmatpush1.bf16.msra.mxu0 %v1793
    %2547 = vmatprep.subr.bf16.mxu0 %v1802
    %2548 = vmatpush1.bf16.msra.mxu0 %v1801
    %2549 = vmatprep.subr.bf16.mxu0 %v1810
    %2550 = vmatpush1.bf16.msra.mxu0 %v1809
    %2551 = vmatprep.subr.bf16.mxu0 %v1818
    %2552 = vmatpush1.bf16.msra.mxu0 %v1817
    %2553 = vmatprep.subr.bf16.mxu0 %v1826
    %2554 = vmatpush1.bf16.msra.mxu0 %v1825
    %2555 = vmatprep.subr.bf16.mxu0 %v1834
    %2556 = vmatpush1.bf16.msra.mxu0 %v1833
    %2557 = vmatprep.subr.bf16.mxu0 %v1842
    %2558 = vmatpush1.bf16.msra.mxu0 %v1841
    %2559 = vmatprep.subr.bf16.mxu0 %v1850
    %2560 = vmatpush1.bf16.msra.mxu0 %v1849
    %2561 = vmatprep.subr.bf16.mxu0 %v1858
    %2562 = vmatpush1.bf16.msra.mxu0 %v1857
    %2563 = vmatprep.subr.bf16.mxu0 %v1866
    %2564 = vmatpush1.bf16.msra.mxu0 %v1865
    %2565 = vmatprep.mubr.bf16.mxu0 %v129
    %2566 = vmatmul.mubr.bf16.gmra.mrb[0].mxu0 %v128
    %v2567 = vpop.f32.mrb[0].mxu0
    %v2568 = vadd.f32 %v532, %v2567
    %v2569 = vpop.f32.mrb[0].mxu0
    %v2570 = vadd.f32 %v536, %v2569
    %v2571 = vpop.f32.mrb[0].mxu0
    %v2572 = vpop.f32.mrb[0].mxu0
    %2573 = vdwg.mxu0
    %2574 = vmatprep.subr.bf16.mxu0 %v1874
    %2575 = vmatpush1.bf16.msra.mxu0 %v1873
    %2576 = vmatprep.subr.bf16.mxu0 %v1882
    %2577 = vmatpush1.bf16.msra.mxu0 %v1881
    %2578 = vmatprep.subr.bf16.mxu0 %v1890
    %2579 = vmatpush1.bf16.msra.mxu0 %v1889
    %2580 = vmatprep.subr.bf16.mxu0 %v1898
    %2581 = vmatpush1.bf16.msra.mxu0 %v1897
    %2582 = vmatprep.subr.bf16.mxu0 %v1906
    %2583 = vmatpush1.bf16.msra.mxu0 %v1905
    %2584 = vmatprep.subr.bf16.mxu0 %v1914
    %2585 = vmatpush1.bf16.msra.mxu0 %v1913
    %2586 = vmatprep.subr.bf16.mxu0 %v1922
    %2587 = vmatpush1.bf16.msra.mxu0 %v1921
    %2588 = vmatprep.subr.bf16.mxu0 %v1930
    %2589 = vmatpush1.bf16.msra.mxu0 %v1929
    %2590 = vmatprep.subr.bf16.mxu0 %v1938
    %2591 = vmatpush1.bf16.msra.mxu0 %v1937
    %2592 = vmatprep.subr.bf16.mxu0 %v1946
    %2593 = vmatpush1.bf16.msra.mxu0 %v1945
    %2594 = vmatprep.subr.bf16.mxu0 %v1954
    %2595 = vmatpush1.bf16.msra.mxu0 %v1953
    %2596 = vmatprep.subr.bf16.mxu0 %v1962
    %2597 = vmatpush1.bf16.msra.mxu0 %v1961
    %2598 = vmatprep.subr.bf16.mxu0 %v1970
    %2599 = vmatpush1.bf16.msra.mxu0 %v1969
    %2600 = vmatprep.subr.bf16.mxu0 %v1978
    %2601 = vmatpush1.bf16.msra.mxu0 %v1977
    %2602 = vmatprep.subr.bf16.mxu0 %v1986
    %2603 = vmatpush1.bf16.msra.mxu0 %v1985
    %2604 = vmatprep.subr.bf16.mxu0 %v1994
    %2605 = vmatpush1.bf16.msra.mxu0 %v1993
    %2606 = vmatprep.mubr.bf16.mxu0 %v131
    %2607 = vmatmul.mubr.bf16.gmra.mrb[0].mxu0 %v130
    %v2608 = vpop.f32.mrb[0].mxu0
    %v2609 = vadd.f32 %v2568, %v2608
    %v2610 = vpop.f32.mrb[0].mxu0
    %v2611 = vadd.f32 %v2570, %v2610
    %v2612 = vpop.f32.mrb[0].mxu0
    %v2613 = vpop.f32.mrb[0].mxu0
    %2614 = vdwg.mxu0
    %2615 = vmatprep.subr.bf16.mxu0 %v2002
    %2616 = vmatpush1.bf16.msra.mxu0 %v2001
    %2617 = vmatprep.subr.bf16.mxu0 %v2010
    %2618 = vmatpush1.bf16.msra.mxu0 %v2009
    %2619 = vmatprep.subr.bf16.mxu0 %v2018
    %2620 = vmatpush1.bf16.msra.mxu0 %v2017
    %2621 = vmatprep.subr.bf16.mxu0 %v2026
    %2622 = vmatpush1.bf16.msra.mxu0 %v2025
    %2623 = vmatprep.subr.bf16.mxu0 %v2034
    %2624 = vmatpush1.bf16.msra.mxu0 %v2033
    %2625 = vmatprep.subr.bf16.mxu0 %v2042
    %2626 = vmatpush1.bf16.msra.mxu0 %v2041
    %2627 = vmatprep.subr.bf16.mxu0 %v2050
    %2628 = vmatpush1.bf16.msra.mxu0 %v2049
    %2629 = vmatprep.subr.bf16.mxu0 %v2058
    %2630 = vmatpush1.bf16.msra.mxu0 %v2057
    %2631 = vmatprep.subr.bf16.mxu0 %v2066
    %2632 = vmatpush1.bf16.msra.mxu0 %v2065
    %2633 = vmatprep.subr.bf16.mxu0 %v2074
    %2634 = vmatpush1.bf16.msra.mxu0 %v2073
    %2635 = vmatprep.subr.bf16.mxu0 %v2082
    %2636 = vmatpush1.bf16.msra.mxu0 %v2081
    %2637 = vmatprep.subr.bf16.mxu0 %v2090
    %2638 = vmatpush1.bf16.msra.mxu0 %v2089
    %2639 = vmatprep.subr.bf16.mxu0 %v2098
    %2640 = vmatpush1.bf16.msra.mxu0 %v2097
    %2641 = vmatprep.subr.bf16.mxu0 %v2106
    %2642 = vmatpush1.bf16.msra.mxu0 %v2105
    %2643 = vmatprep.subr.bf16.mxu0 %v2114
    %2644 = vmatpush1.bf16.msra.mxu0 %v2113
    %2645 = vmatprep.subr.bf16.mxu0 %v2122
    %2646 = vmatpush1.bf16.msra.mxu0 %v2121
    %2647 = vmatprep.mubr.bf16.mxu0 %v133
    %2648 = vmatmul.mubr.bf16.gmra.mrb[0].mxu0 %v132
    %v2649 = vpop.f32.mrb[0].mxu0
    %v2650 = vadd.f32 %v2609, %v2649
    %v2651 = vpop.f32.mrb[0].mxu0
    %v2652 = vadd.f32 %v2611, %v2651
    %v2653 = vpop.f32.mrb[0].mxu0
    %v2654 = vpop.f32.mrb[0].mxu0
    %2655 = vdwg.mxu0
    %2656 = vmatprep.subr.bf16.mxu0 %v2130
    %2657 = vmatpush1.bf16.msra.mxu0 %v2129
    %2658 = vmatprep.subr.bf16.mxu0 0
    %2659 = vmatpush1.bf16.msra.mxu0 0
    %2660 = vmatprep.subr.bf16.mxu0 0
    %2661 = vmatpush1.bf16.msra.mxu0 0
    %2662 = vmatprep.subr.bf16.mxu0 0
    %2663 = vmatpush1.bf16.msra.mxu0 0
    %2664 = vmatprep.subr.bf16.mxu0 0
    %2665 = vmatpush1.bf16.msra.mxu0 0
    %2666 = vmatprep.subr.bf16.mxu0 0
    %2667 = vmatpush1.bf16.msra.mxu0 0
    %2668 = vmatprep.subr.bf16.mxu0 0
    %2669 = vmatpush1.bf16.msra.mxu0 0
    %2670 = vmatprep.subr.bf16.mxu0 0
    %2671 = vmatpush1.bf16.msra.mxu0 0
    %2672 = vmatprep.subr.bf16.mxu0 0
    %2673 = vmatpush1.bf16.msra.mxu0 0
    %2674 = vmatprep.subr.bf16.mxu0 0
    %2675 = vmatpush1.bf16.msra.mxu0 0
    %2676 = vmatprep.subr.bf16.mxu0 0
    %2677 = vmatpush1.bf16.msra.mxu0 0
    %2678 = vmatprep.subr.bf16.mxu0 0
    %2679 = vmatpush1.bf16.msra.mxu0 0
    %2680 = vmatprep.subr.bf16.mxu0 0
    %2681 = vmatpush1.bf16.msra.mxu0 0
    %2682 = vmatprep.subr.bf16.mxu0 0
    %2683 = vmatpush1.bf16.msra.mxu0 0
    %2684 = vmatprep.subr.bf16.mxu0 0
    %2685 = vmatpush1.bf16.msra.mxu0 0
    %2686 = vmatprep.subr.bf16.mxu0 0
    %2687 = vmatpush1.bf16.msra.mxu0 0
    %2688 = vmatprep.mubr.bf16.mxu0 0
    %2689 = vmatmul.mubr.bf16.gmra.mrb[0].mxu0 %v2531
    %v2690 = vpop.f32.mrb[0].mxu0
    %v2691 = vadd.f32 %v2650, %v2690
    %v2692 = vpop.f32.mrb[0].mxu0
    %v2693 = vadd.f32 %v2652, %v2692
    %v2694 = vpop.f32.mrb[0].mxu0
    %v2695 = vpop.f32.mrb[0].mxu0
    %2696 = vdwg.mxu0
    %2697 = vmatprep.subr.bf16.mxu0 %v1748
    %2698 = vmatpush1.bf16.msra.mxu0 %v1747
    %2699 = vmatprep.subr.bf16.mxu0 %v1756
    %2700 = vmatpush1.bf16.msra.mxu0 %v1755
    %2701 = vmatprep.subr.bf16.mxu0 %v1764
    %2702 = vmatpush1.bf16.msra.mxu0 %v1763
    %2703 = vmatprep.subr.bf16.mxu0 %v1772
    %2704 = vmatpush1.bf16.msra.mxu0 %v1771
    %2705 = vmatprep.subr.bf16.mxu0 %v1780
    %2706 = vmatpush1.bf16.msra.mxu0 %v1779
    %2707 = vmatprep.subr.bf16.mxu0 %v1788
    %2708 = vmatpush1.bf16.msra.mxu0 %v1787
    %2709 = vmatprep.subr.bf16.mxu0 %v1796
    %2710 = vmatpush1.bf16.msra.mxu0 %v1795
    %2711 = vmatprep.subr.bf16.mxu0 %v1804
    %2712 = vmatpush1.bf16.msra.mxu0 %v1803
    %2713 = vmatprep.subr.bf16.mxu0 %v1812
    %2714 = vmatpush1.bf16.msra.mxu0 %v1811
    %2715 = vmatprep.subr.bf16.mxu0 %v1820
    %2716 = vmatpush1.bf16.msra.mxu0 %v1819
    %2717 = vmatprep.subr.bf16.mxu0 %v1828
    %2718 = vmatpush1.bf16.msra.mxu0 %v1827
    %2719 = vmatprep.subr.bf16.mxu0 %v1836
    %2720 = vmatpush1.bf16.msra.mxu0 %v1835
    %2721 = vmatprep.subr.bf16.mxu0 %v1844
    %2722 = vmatpush1.bf16.msra.mxu0 %v1843
    %2723 = vmatprep.subr.bf16.mxu0 %v1852
    %2724 = vmatpush1.bf16.msra.mxu0 %v1851
    %2725 = vmatprep.subr.bf16.mxu0 %v1860
    %2726 = vmatpush1.bf16.msra.mxu0 %v1859
    %2727 = vmatprep.subr.bf16.mxu0 %v1868
    %2728 = vmatpush1.bf16.msra.mxu0 %v1867
    %2729 = vmatprep.mubr.bf16.mxu0 %v129
    %2730 = vmatmul.mubr.bf16.gmra.mrb[0].mxu0 %v128
    %v2731 = vpop.f32.mrb[0].mxu0
    %v2732 = vadd.f32 %v540, %v2731
    %v2733 = vpop.f32.mrb[0].mxu0
    %v2734 = vadd.f32 %v544, %v2733
    %v2735 = vpop.f32.mrb[0].mxu0
    %v2736 = vpop.f32.mrb[0].mxu0
    %2737 = vdwg.mxu0
    %2738 = vmatprep.subr.bf16.mxu0 %v1876
    %2739 = vmatpush1.bf16.msra.mxu0 %v1875
    %2740 = vmatprep.subr.bf16.mxu0 %v1884
    %2741 = vmatpush1.bf16.msra.mxu0 %v1883
    %2742 = vmatprep.subr.bf16.mxu0 %v1892
    %2743 = vmatpush1.bf16.msra.mxu0 %v1891
    %2744 = vmatprep.subr.bf16.mxu0 %v1900
    %2745 = vmatpush1.bf16.msra.mxu0 %v1899
    %2746 = vmatprep.subr.bf16.mxu0 %v1908
    %2747 = vmatpush1.bf16.msra.mxu0 %v1907
    %2748 = vmatprep.subr.bf16.mxu0 %v1916
    %2749 = vmatpush1.bf16.msra.mxu0 %v1915
    %2750 = vmatprep.subr.bf16.mxu0 %v1924
    %2751 = vmatpush1.bf16.msra.mxu0 %v1923
    %2752 = vmatprep.subr.bf16.mxu0 %v1932
    %2753 = vmatpush1.bf16.msra.mxu0 %v1931
    %2754 = vmatprep.subr.bf16.mxu0 %v1940
    %2755 = vmatpush1.bf16.msra.mxu0 %v1939
    %2756 = vmatprep.subr.bf16.mxu0 %v1948
    %2757 = vmatpush1.bf16.msra.mxu0 %v1947
    %2758 = vmatprep.subr.bf16.mxu0 %v1956
    %2759 = vmatpush1.bf16.msra.mxu0 %v1955
    %2760 = vmatprep.subr.bf16.mxu0 %v1964
    %2761 = vmatpush1.bf16.msra.mxu0 %v1963
    %2762 = vmatprep.subr.bf16.mxu0 %v1972
    %2763 = vmatpush1.bf16.msra.mxu0 %v1971
    %2764 = vmatprep.subr.bf16.mxu0 %v1980
    %2765 = vmatpush1.bf16.msra.mxu0 %v1979
    %2766 = vmatprep.subr.bf16.mxu0 %v1988
    %2767 = vmatpush1.bf16.msra.mxu0 %v1987
    %2768 = vmatprep.subr.bf16.mxu0 %v1996
    %2769 = vmatpush1.bf16.msra.mxu0 %v1995
    %2770 = vmatprep.mubr.bf16.mxu0 %v131
    %2771 = vmatmul.mubr.bf16.gmra.mrb[0].mxu0 %v130
    %v2772 = vpop.f32.mrb[0].mxu0
    %v2773 = vadd.f32 %v2732, %v2772
    %v2774 = vpop.f32.mrb[0].mxu0
    %v2775 = vadd.f32 %v2734, %v2774
    %v2776 = vpop.f32.mrb[0].mxu0
    %v2777 = vpop.f32.mrb[0].mxu0
    %2778 = vdwg.mxu0
    %2779 = vmatprep.subr.bf16.mxu0 %v2004
    %2780 = vmatpush1.bf16.msra.mxu0 %v2003
    %2781 = vmatprep.subr.bf16.mxu0 %v2012
    %2782 = vmatpush1.bf16.msra.mxu0 %v2011
    %2783 = vmatprep.subr.bf16.mxu0 %v2020
    %2784 = vmatpush1.bf16.msra.mxu0 %v2019
    %2785 = vmatprep.subr.bf16.mxu0 %v2028
    %2786 = vmatpush1.bf16.msra.mxu0 %v2027
    %2787 = vmatprep.subr.bf16.mxu0 %v2036
    %2788 = vmatpush1.bf16.msra.mxu0 %v2035
    %2789 = vmatprep.subr.bf16.mxu0 %v2044
    %2790 = vmatpush1.bf16.msra.mxu0 %v2043
    %2791 = vmatprep.subr.bf16.mxu0 %v2052
    %2792 = vmatpush1.bf16.msra.mxu0 %v2051
    %2793 = vmatprep.subr.bf16.mxu0 %v2060
    %2794 = vmatpush1.bf16.msra.mxu0 %v2059
    %2795 = vmatprep.subr.bf16.mxu0 %v2068
    %2796 = vmatpush1.bf16.msra.mxu0 %v2067
    %2797 = vmatprep.subr.bf16.mxu0 %v2076
    %2798 = vmatpush1.bf16.msra.mxu0 %v2075
    %2799 = vmatprep.subr.bf16.mxu0 %v2084
    %2800 = vmatpush1.bf16.msra.mxu0 %v2083
    %2801 = vmatprep.subr.bf16.mxu0 %v2092
    %2802 = vmatpush1.bf16.msra.mxu0 %v2091
    %2803 = vmatprep.subr.bf16.mxu0 %v2100
    %2804 = vmatpush1.bf16.msra.mxu0 %v2099
    %2805 = vmatprep.subr.bf16.mxu0 %v2108
    %2806 = vmatpush1.bf16.msra.mxu0 %v2107
    %2807 = vmatprep.subr.bf16.mxu0 %v2116
    %2808 = vmatpush1.bf16.msra.mxu0 %v2115
    %2809 = vmatprep.subr.bf16.mxu0 %v2124
    %2810 = vmatpush1.bf16.msra.mxu0 %v2123
    %2811 = vmatprep.mubr.bf16.mxu0 %v133
    %2812 = vmatmul.mubr.bf16.gmra.mrb[0].mxu0 %v132
    %v2813 = vpop.f32.mrb[0].mxu0
    %v2814 = vadd.f32 %v2773, %v2813
    %v2815 = vpop.f32.mrb[0].mxu0
    %v2816 = vadd.f32 %v2775, %v2815
    %v2817 = vpop.f32.mrb[0].mxu0
    %v2818 = vpop.f32.mrb[0].mxu0
    %2819 = vdwg.mxu0
    %2820 = vmatprep.subr.bf16.mxu0 %v2132
    %2821 = vmatpush1.bf16.msra.mxu0 %v2131
    %2822 = vmatprep.subr.bf16.mxu0 0
    %2823 = vmatpush1.bf16.msra.mxu0 0
    %2824 = vmatprep.subr.bf16.mxu0 0
    %2825 = vmatpush1.bf16.msra.mxu0 0
    %2826 = vmatprep.subr.bf16.mxu0 0
    %2827 = vmatpush1.bf16.msra.mxu0 0
    %2828 = vmatprep.subr.bf16.mxu0 0
    %2829 = vmatpush1.bf16.msra.mxu0 0
    %2830 = vmatprep.subr.bf16.mxu0 0
    %2831 = vmatpush1.bf16.msra.mxu0 0
    %2832 = vmatprep.subr.bf16.mxu0 0
    %2833 = vmatpush1.bf16.msra.mxu0 0
    %2834 = vmatprep.subr.bf16.mxu0 0
    %2835 = vmatpush1.bf16.msra.mxu0 0
    %2836 = vmatprep.subr.bf16.mxu0 0
    %2837 = vmatpush1.bf16.msra.mxu0 0
    %2838 = vmatprep.subr.bf16.mxu0 0
    %2839 = vmatpush1.bf16.msra.mxu0 0
    %2840 = vmatprep.subr.bf16.mxu0 0
    %2841 = vmatpush1.bf16.msra.mxu0 0
    %2842 = vmatprep.subr.bf16.mxu0 0
    %2843 = vmatpush1.bf16.msra.mxu0 0
    %2844 = vmatprep.subr.bf16.mxu0 0
    %2845 = vmatpush1.bf16.msra.mxu0 0
    %2846 = vmatprep.subr.bf16.mxu0 0
    %2847 = vmatpush1.bf16.msra.mxu0 0
    %2848 = vmatprep.subr.bf16.mxu0 0
    %2849 = vmatpush1.bf16.msra.mxu0 0
    %2850 = vmatprep.subr.bf16.mxu0 0
    %2851 = vmatpush1.bf16.msra.mxu0 0
    %2852 = vmatprep.mubr.bf16.mxu0 0
    %2853 = vmatmul.mubr.bf16.gmra.mrb[0].mxu0 %v2531
    %v2854 = vpop.f32.mrb[0].mxu0
    %v2855 = vadd.f32 %v2814, %v2854
    %v2856 = vpop.f32.mrb[0].mxu0
    %v2857 = vadd.f32 %v2816, %v2856
    %v2858 = vpop.f32.mrb[0].mxu0
    %v2859 = vpop.f32.mrb[0].mxu0
    %2860 = vdwg.mxu0
    %2861 = vmatprep.subr.bf16.mxu0 %v1750
    %2862 = vmatpush1.bf16.msra.mxu0 %v1749
    %2863 = vmatprep.subr.bf16.mxu0 %v1758
    %2864 = vmatpush1.bf16.msra.mxu0 %v1757
    %2865 = vmatprep.subr.bf16.mxu0 %v1766
    %2866 = vmatpush1.bf16.msra.mxu0 %v1765
    %2867 = vmatprep.subr.bf16.mxu0 %v1774
    %2868 = vmatpush1.bf16.msra.mxu0 %v1773
    %2869 = vmatprep.subr.bf16.mxu0 %v1782
    %2870 = vmatpush1.bf16.msra.mxu0 %v1781
    %2871 = vmatprep.subr.bf16.mxu0 %v1790
    %2872 = vmatpush1.bf16.msra.mxu0 %v1789
    %2873 = vmatprep.subr.bf16.mxu0 %v1798
    %2874 = vmatpush1.bf16.msra.mxu0 %v1797
    %2875 = vmatprep.subr.bf16.mxu0 %v1806
    %2876 = vmatpush1.bf16.msra.mxu0 %v1805
    %2877 = vmatprep.subr.bf16.mxu0 %v1814
    %2878 = vmatpush1.bf16.msra.mxu0 %v1813
    %2879 = vmatprep.subr.bf16.mxu0 %v1822
    %2880 = vmatpush1.bf16.msra.mxu0 %v1821
    %2881 = vmatprep.subr.bf16.mxu0 %v1830
    %2882 = vmatpush1.bf16.msra.mxu0 %v1829
    %2883 = vmatprep.subr.bf16.mxu0 %v1838
    %2884 = vmatpush1.bf16.msra.mxu0 %v1837
    %2885 = vmatprep.subr.bf16.mxu0 %v1846
    %2886 = vmatpush1.bf16.msra.mxu0 %v1845
    %2887 = vmatprep.subr.bf16.mxu0 %v1854
    %2888 = vmatpush1.bf16.msra.mxu0 %v1853
    %2889 = vmatprep.subr.bf16.mxu0 %v1862
    %2890 = vmatpush1.bf16.msra.mxu0 %v1861
    %2891 = vmatprep.subr.bf16.mxu0 %v1870
    %2892 = vmatpush1.bf16.msra.mxu0 %v1869
    %2893 = vmatprep.mubr.bf16.mxu0 %v129
    %2894 = vmatmul.mubr.bf16.gmra.mrb[0].mxu0 %v128
    %v2895 = vpop.f32.mrb[0].mxu0
    %v2896 = vadd.f32 %v548, %v2895
    %v2897 = vpop.f32.mrb[0].mxu0
    %v2898 = vadd.f32 %v552, %v2897
    %v2899 = vpop.f32.mrb[0].mxu0
    %v2900 = vpop.f32.mrb[0].mxu0
    %2901 = vdwg.mxu0
    %2902 = vmatprep.subr.bf16.mxu0 %v1878
    %2903 = vmatpush1.bf16.msra.mxu0 %v1877
    %2904 = vmatprep.subr.bf16.mxu0 %v1886
    %2905 = vmatpush1.bf16.msra.mxu0 %v1885
    %2906 = vmatprep.subr.bf16.mxu0 %v1894
    %2907 = vmatpush1.bf16.msra.mxu0 %v1893
    %2908 = vmatprep.subr.bf16.mxu0 %v1902
    %2909 = vmatpush1.bf16.msra.mxu0 %v1901
    %2910 = vmatprep.subr.bf16.mxu0 %v1910
    %2911 = vmatpush1.bf16.msra.mxu0 %v1909
    %2912 = vmatprep.subr.bf16.mxu0 %v1918
    %2913 = vmatpush1.bf16.msra.mxu0 %v1917
    %2914 = vmatprep.subr.bf16.mxu0 %v1926
    %2915 = vmatpush1.bf16.msra.mxu0 %v1925
    %2916 = vmatprep.subr.bf16.mxu0 %v1934
    %2917 = vmatpush1.bf16.msra.mxu0 %v1933
    %2918 = vmatprep.subr.bf16.mxu0 %v1942
    %2919 = vmatpush1.bf16.msra.mxu0 %v1941
    %2920 = vmatprep.subr.bf16.mxu0 %v1950
    %2921 = vmatpush1.bf16.msra.mxu0 %v1949
    %2922 = vmatprep.subr.bf16.mxu0 %v1958
    %2923 = vmatpush1.bf16.msra.mxu0 %v1957
    %2924 = vmatprep.subr.bf16.mxu0 %v1966
    %2925 = vmatpush1.bf16.msra.mxu0 %v1965
    %2926 = vmatprep.subr.bf16.mxu0 %v1974
    %2927 = vmatpush1.bf16.msra.mxu0 %v1973
    %2928 = vmatprep.subr.bf16.mxu0 %v1982
    %2929 = vmatpush1.bf16.msra.mxu0 %v1981
    %2930 = vmatprep.subr.bf16.mxu0 %v1990
    %2931 = vmatpush1.bf16.msra.mxu0 %v1989
    %2932 = vmatprep.subr.bf16.mxu0 %v1998
    %2933 = vmatpush1.bf16.msra.mxu0 %v1997
    %2934 = vmatprep.mubr.bf16.mxu0 %v131
    %2935 = vmatmul.mubr.bf16.gmra.mrb[0].mxu0 %v130
    %v2936 = vpop.f32.mrb[0].mxu0
    %v2937 = vadd.f32 %v2896, %v2936
    %v2938 = vpop.f32.mrb[0].mxu0
    %v2939 = vadd.f32 %v2898, %v2938
    %v2940 = vpop.f32.mrb[0].mxu0
    %v2941 = vpop.f32.mrb[0].mxu0
    %2942 = vdwg.mxu0
    %2943 = vmatprep.subr.bf16.mxu0 %v2006
    %2944 = vmatpush1.bf16.msra.mxu0 %v2005
    %2945 = vmatprep.subr.bf16.mxu0 %v2014
    %2946 = vmatpush1.bf16.msra.mxu0 %v2013
    %2947 = vmatprep.subr.bf16.mxu0 %v2022
    %2948 = vmatpush1.bf16.msra.mxu0 %v2021
    %2949 = vmatprep.subr.bf16.mxu0 %v2030
    %2950 = vmatpush1.bf16.msra.mxu0 %v2029
    %2951 = vmatprep.subr.bf16.mxu0 %v2038
    %2952 = vmatpush1.bf16.msra.mxu0 %v2037
    %2953 = vmatprep.subr.bf16.mxu0 %v2046
    %2954 = vmatpush1.bf16.msra.mxu0 %v2045
    %2955 = vmatprep.subr.bf16.mxu0 %v2054
    %2956 = vmatpush1.bf16.msra.mxu0 %v2053
    %2957 = vmatprep.subr.bf16.mxu0 %v2062
    %2958 = vmatpush1.bf16.msra.mxu0 %v2061
    %2959 = vmatprep.subr.bf16.mxu0 %v2070
    %2960 = vmatpush1.bf16.msra.mxu0 %v2069
    %2961 = vmatprep.subr.bf16.mxu0 %v2078
    %2962 = vmatpush1.bf16.msra.mxu0 %v2077
    %2963 = vmatprep.subr.bf16.mxu0 %v2086
    %2964 = vmatpush1.bf16.msra.mxu0 %v2085
    %2965 = vmatprep.subr.bf16.mxu0 %v2094
    %2966 = vmatpush1.bf16.msra.mxu0 %v2093
    %2967 = vmatprep.subr.bf16.mxu0 %v2102
    %2968 = vmatpush1.bf16.msra.mxu0 %v2101
    %2969 = vmatprep.subr.bf16.mxu0 %v2110
    %2970 = vmatpush1.bf16.msra.mxu0 %v2109
    %2971 = vmatprep.subr.bf16.mxu0 %v2118
    %2972 = vmatpush1.bf16.msra.mxu0 %v2117
    %2973 = vmatprep.subr.bf16.mxu0 %v2126
    %2974 = vmatpush1.bf16.msra.mxu0 %v2125
    %2975 = vmatprep.mubr.bf16.mxu0 %v133
    %2976 = vmatmul.mubr.bf16.gmra.mrb[0].mxu0 %v132
    %v2977 = vpop.f32.mrb[0].mxu0
    %v2978 = vadd.f32 %v2937, %v2977
    %v2979 = vpop.f32.mrb[0].mxu0
    %v2980 = vadd.f32 %v2939, %v2979
    %v2981 = vpop.f32.mrb[0].mxu0
    %v2982 = vpop.f32.mrb[0].mxu0
    %2983 = vdwg.mxu0
    %2984 = vmatprep.subr.bf16.mxu0 %v2134
    %2985 = vmatpush1.bf16.msra.mxu0 %v2133
    %2986 = vmatprep.subr.bf16.mxu0 0
    %2987 = vmatpush1.bf16.msra.mxu0 0
    %2988 = vmatprep.subr.bf16.mxu0 0
    %2989 = vmatpush1.bf16.msra.mxu0 0
    %2990 = vmatprep.subr.bf16.mxu0 0
    %2991 = vmatpush1.bf16.msra.mxu0 0
    %2992 = vmatprep.subr.bf16.mxu0 0
    %2993 = vmatpush1.bf16.msra.mxu0 0
    %2994 = vmatprep.subr.bf16.mxu0 0
    %2995 = vmatpush1.bf16.msra.mxu0 0
    %2996 = vmatprep.subr.bf16.mxu0 0
    %2997 = vmatpush1.bf16.msra.mxu0 0
    %2998 = vmatprep.subr.bf16.mxu0 0
    %2999 = vmatpush1.bf16.msra.mxu0 0
    %3000 = vmatprep.subr.bf16.mxu0 0
    %3001 = vmatpush1.bf16.msra.mxu0 0
    %3002 = vmatprep.subr.bf16.mxu0 0
    %3003 = vmatpush1.bf16.msra.mxu0 0
    %3004 = vmatprep.subr.bf16.mxu0 0
    %3005 = vmatpush1.bf16.msra.mxu0 0
    %3006 = vmatprep.subr.bf16.mxu0 0
    %3007 = vmatpush1.bf16.msra.mxu0 0
    %3008 = vmatprep.subr.bf16.mxu0 0
    %3009 = vmatpush1.bf16.msra.mxu0 0
    %3010 = vmatprep.subr.bf16.mxu0 0
    %3011 = vmatpush1.bf16.msra.mxu0 0
    %3012 = vmatprep.subr.bf16.mxu0 0
    %3013 = vmatpush1.bf16.msra.mxu0 0
    %3014 = vmatprep.subr.bf16.mxu0 0
    %3015 = vmatpush1.bf16.msra.mxu0 0
    %3016 = vmatprep.mubr.bf16.mxu0 0
    %3017 = vmatmul.mubr.bf16.gmra.mrb[0].mxu0 %v2531
    %v3018 = vpop.f32.mrb[0].mxu0
    %v3019 = vadd.f32 %v2978, %v3018
    %v3020 = vpop.f32.mrb[0].mxu0
    %v3021 = vadd.f32 %v2980, %v3020
    %v3022 = vpop.f32.mrb[0].mxu0
    %v3023 = vpop.f32.mrb[0].mxu0
    %3024 = vdwg.mxu0
    %3025 = vmatprep.subr.bf16.mxu0 %v1752
    %3026 = vmatpush1.bf16.msra.mxu0 %v1751
    %3027 = vmatprep.subr.bf16.mxu0 %v1760
    %3028 = vmatpush1.bf16.msra.mxu0 %v1759
    %3029 = vmatprep.subr.bf16.mxu0 %v1768
    %3030 = vmatpush1.bf16.msra.mxu0 %v1767
    %3031 = vmatprep.subr.bf16.mxu0 %v1776
    %3032 = vmatpush1.bf16.msra.mxu0 %v1775
    %3033 = vmatprep.subr.bf16.mxu0 %v1784
    %3034 = vmatpush1.bf16.msra.mxu0 %v1783
    %3035 = vmatprep.subr.bf16.mxu0 %v1792
    %3036 = vmatpush1.bf16.msra.mxu0 %v1791
    %3037 = vmatprep.subr.bf16.mxu0 %v1800
    %3038 = vmatpush1.bf16.msra.mxu0 %v1799
    %3039 = vmatprep.subr.bf16.mxu0 %v1808
    %3040 = vmatpush1.bf16.msra.mxu0 %v1807
    %3041 = vmatprep.subr.bf16.mxu0 %v1816
    %3042 = vmatpush1.bf16.msra.mxu0 %v1815
    %3043 = vmatprep.subr.bf16.mxu0 %v1824
    %3044 = vmatpush1.bf16.msra.mxu0 %v1823
    %3045 = vmatprep.subr.bf16.mxu0 %v1832
    %3046 = vmatpush1.bf16.msra.mxu0 %v1831
    %3047 = vmatprep.subr.bf16.mxu0 %v1840
    %3048 = vmatpush1.bf16.msra.mxu0 %v1839
    %3049 = vmatprep.subr.bf16.mxu0 %v1848
    %3050 = vmatpush1.bf16.msra.mxu0 %v1847
    %3051 = vmatprep.subr.bf16.mxu0 %v1856
    %3052 = vmatpush1.bf16.msra.mxu0 %v1855
    %3053 = vmatprep.subr.bf16.mxu0 %v1864
    %3054 = vmatpush1.bf16.msra.mxu0 %v1863
    %3055 = vmatprep.subr.bf16.mxu0 %v1872
    %3056 = vmatpush1.bf16.msra.mxu0 %v1871
    %3057 = vmatprep.mubr.bf16.mxu0 %v129
    %3058 = vmatmul.mubr.bf16.gmra.mrb[0].mxu0 %v128
    %v3059 = vpop.f32.mrb[0].mxu0
    %v3060 = vadd.f32 %v556, %v3059
    %v3061 = vpop.f32.mrb[0].mxu0
    %v3062 = vadd.f32 %v560, %v3061
    %v3063 = vpop.f32.mrb[0].mxu0
    %v3064 = vpop.f32.mrb[0].mxu0
    %3065 = vdwg.mxu0
    %3066 = vmatprep.subr.bf16.mxu0 %v1880
    %3067 = vmatpush1.bf16.msra.mxu0 %v1879
    %3068 = vmatprep.subr.bf16.mxu0 %v1888
    %3069 = vmatpush1.bf16.msra.mxu0 %v1887
    %3070 = vmatprep.subr.bf16.mxu0 %v1896
    %3071 = vmatpush1.bf16.msra.mxu0 %v1895
    %3072 = vmatprep.subr.bf16.mxu0 %v1904
    %3073 = vmatpush1.bf16.msra.mxu0 %v1903
    %3074 = vmatprep.subr.bf16.mxu0 %v1912
    %3075 = vmatpush1.bf16.msra.mxu0 %v1911
    %3076 = vmatprep.subr.bf16.mxu0 %v1920
    %3077 = vmatpush1.bf16.msra.mxu0 %v1919
    %3078 = vmatprep.subr.bf16.mxu0 %v1928
    %3079 = vmatpush1.bf16.msra.mxu0 %v1927
    %3080 = vmatprep.subr.bf16.mxu0 %v1936
    %3081 = vmatpush1.bf16.msra.mxu0 %v1935
    %3082 = vmatprep.subr.bf16.mxu0 %v1944
    %3083 = vmatpush1.bf16.msra.mxu0 %v1943
    %3084 = vmatprep.subr.bf16.mxu0 %v1952
    %3085 = vmatpush1.bf16.msra.mxu0 %v1951
    %3086 = vmatprep.subr.bf16.mxu0 %v1960
    %3087 = vmatpush1.bf16.msra.mxu0 %v1959
    %3088 = vmatprep.subr.bf16.mxu0 %v1968
    %3089 = vmatpush1.bf16.msra.mxu0 %v1967
    %3090 = vmatprep.subr.bf16.mxu0 %v1976
    %3091 = vmatpush1.bf16.msra.mxu0 %v1975
    %3092 = vmatprep.subr.bf16.mxu0 %v1984
    %3093 = vmatpush1.bf16.msra.mxu0 %v1983
    %3094 = vmatprep.subr.bf16.mxu0 %v1992
    %3095 = vmatpush1.bf16.msra.mxu0 %v1991
    %3096 = vmatprep.subr.bf16.mxu0 %v2000
    %3097 = vmatpush1.bf16.msra.mxu0 %v1999
    %3098 = vmatprep.mubr.bf16.mxu0 %v131
    %3099 = vmatmul.mubr.bf16.gmra.mrb[0].mxu0 %v130
    %v3100 = vpop.f32.mrb[0].mxu0
    %v3101 = vadd.f32 %v3060, %v3100
    %v3102 = vpop.f32.mrb[0].mxu0
    %v3103 = vadd.f32 %v3062, %v3102
    %v3104 = vpop.f32.mrb[0].mxu0
    %v3105 = vpop.f32.mrb[0].mxu0
    %3106 = vdwg.mxu0
    %3107 = vmatprep.subr.bf16.mxu0 %v2008
    %3108 = vmatpush1.bf16.msra.mxu0 %v2007
    %3109 = vmatprep.subr.bf16.mxu0 %v2016
    %3110 = vmatpush1.bf16.msra.mxu0 %v2015
    %3111 = vmatprep.subr.bf16.mxu0 %v2024
    %3112 = vmatpush1.bf16.msra.mxu0 %v2023
    %3113 = vmatprep.subr.bf16.mxu0 %v2032
    %3114 = vmatpush1.bf16.msra.mxu0 %v2031
    %3115 = vmatprep.subr.bf16.mxu0 %v2040
    %3116 = vmatpush1.bf16.msra.mxu0 %v2039
    %3117 = vmatprep.subr.bf16.mxu0 %v2048
    %3118 = vmatpush1.bf16.msra.mxu0 %v2047
    %3119 = vmatprep.subr.bf16.mxu0 %v2056
    %3120 = vmatpush1.bf16.msra.mxu0 %v2055
    %3121 = vmatprep.subr.bf16.mxu0 %v2064
    %3122 = vmatpush1.bf16.msra.mxu0 %v2063
    %3123 = vmatprep.subr.bf16.mxu0 %v2072
    %3124 = vmatpush1.bf16.msra.mxu0 %v2071
    %3125 = vmatprep.subr.bf16.mxu0 %v2080
    %3126 = vmatpush1.bf16.msra.mxu0 %v2079
    %3127 = vmatprep.subr.bf16.mxu0 %v2088
    %3128 = vmatpush1.bf16.msra.mxu0 %v2087
    %3129 = vmatprep.subr.bf16.mxu0 %v2096
    %3130 = vmatpush1.bf16.msra.mxu0 %v2095
    %3131 = vmatprep.subr.bf16.mxu0 %v2104
    %3132 = vmatpush1.bf16.msra.mxu0 %v2103
    %3133 = vmatprep.subr.bf16.mxu0 %v2112
    %3134 = vmatpush1.bf16.msra.mxu0 %v2111
    %3135 = vmatprep.subr.bf16.mxu0 %v2120
    %3136 = vmatpush1.bf16.msra.mxu0 %v2119
    %3137 = vmatprep.subr.bf16.mxu0 %v2128
    %3138 = vmatpush1.bf16.msra.mxu0 %v2127
    %3139 = vmatprep.mubr.bf16.mxu0 %v133
    %3140 = vmatmul.mubr.bf16.gmra.mrb[0].mxu0 %v132
    %v3141 = vpop.f32.mrb[0].mxu0
    %v3142 = vadd.f32 %v3101, %v3141
    %v3143 = vpop.f32.mrb[0].mxu0
    %v3144 = vadd.f32 %v3103, %v3143
    %v3145 = vpop.f32.mrb[0].mxu0
    %v3146 = vpop.f32.mrb[0].mxu0
    %3147 = vdwg.mxu0
    %3148 = vmatprep.subr.bf16.mxu0 %v2136
    %3149 = vmatpush1.bf16.msra.mxu0 %v2135
    %3150 = vmatprep.subr.bf16.mxu0 0
    %3151 = vmatpush1.bf16.msra.mxu0 0
    %3152 = vmatprep.subr.bf16.mxu0 0
    %3153 = vmatpush1.bf16.msra.mxu0 0
    %3154 = vmatprep.subr.bf16.mxu0 0
    %3155 = vmatpush1.bf16.msra.mxu0 0
    %3156 = vmatprep.subr.bf16.mxu0 0
    %3157 = vmatpush1.bf16.msra.mxu0 0
    %3158 = vmatprep.subr.bf16.mxu0 0
    %3159 = vmatpush1.bf16.msra.mxu0 0
    %3160 = vmatprep.subr.bf16.mxu0 0
    %3161 = vmatpush1.bf16.msra.mxu0 0
    %3162 = vmatprep.subr.bf16.mxu0 0
    %3163 = vmatpush1.bf16.msra.mxu0 0
    %3164 = vmatprep.subr.bf16.mxu0 0
    %3165 = vmatpush1.bf16.msra.mxu0 0
    %3166 = vmatprep.subr.bf16.mxu0 0
    %3167 = vmatpush1.bf16.msra.mxu0 0
    %3168 = vmatprep.subr.bf16.mxu0 0
    %3169 = vmatpush1.bf16.msra.mxu0 0
    %3170 = vmatprep.subr.bf16.mxu0 0
    %3171 = vmatpush1.bf16.msra.mxu0 0
    %3172 = vmatprep.subr.bf16.mxu0 0
    %3173 = vmatpush1.bf16.msra.mxu0 0
    %3174 = vmatprep.subr.bf16.mxu0 0
    %3175 = vmatpush1.bf16.msra.mxu0 0
    %3176 = vmatprep.subr.bf16.mxu0 0
    %3177 = vmatpush1.bf16.msra.mxu0 0
    %3178 = vmatprep.subr.bf16.mxu0 0
    %3179 = vmatpush1.bf16.msra.mxu0 0
    %3180 = vmatprep.mubr.bf16.mxu0 0
    %3181 = vmatmul.mubr.bf16.gmra.mrb[0].mxu0 %v2531
    %v3182 = vpop.f32.mrb[0].mxu0
    %v3183 = vadd.f32 %v3142, %v3182
    %v3184 = vpop.f32.mrb[0].mxu0
    %v3185 = vadd.f32 %v3144, %v3184
    %v3186 = vpop.f32.mrb[0].mxu0
    %v3187 = vpop.f32.mrb[0].mxu0
    %3188 = vdwg.mxu0
    %v3189 = vmul.f32 %v2691, %v2691
    %v3190 = vmul.f32 %v2693, %v2693
    %v3191 = vmul.f32 %v2855, %v2855
    %v3192 = vmul.f32 %v2857, %v2857
    %v3193 = vmul.f32 %v3019, %v3019
    %v3194 = vmul.f32 %v3021, %v3021
    %v3195 = vmul.f32 %v3183, %v3183
    %v3196 = vmul.f32 %v3185, %v3185
    %v3197 = vmul.f32 %v2691, %v3189
    %v3198 = vmul.f32 %v2693, %v3190
    %v3199 = vmul.f32 %v2855, %v3191
    %v3200 = vmul.f32 %v2857, %v3192
    %v3201 = vmul.f32 %v3019, %v3193
    %v3202 = vmul.f32 %v3021, %v3194
    %v3203 = vmul.f32 %v3183, %v3195
    %v3204 = vmul.f32 %v3185, %v3196
    %v3205 = vmul.f32 %v3197, 0.044715
    %v3206 = vmul.f32 %v3198, 0.044715
    %v3207 = vmul.f32 %v3199, 0.044715
    %v3208 = vmul.f32 %v3200, 0.044715
    %v3209 = vmul.f32 %v3201, 0.044715
    %v3210 = vmul.f32 %v3202, 0.044715
    %v3211 = vmul.f32 %v3203, 0.044715
    %v3212 = vmul.f32 %v3204, 0.044715
    %v3213 = vadd.f32 %v2691, %v3205
    %v3214 = vadd.f32 %v2693, %v3206
    %v3215 = vadd.f32 %v2855, %v3207
    %v3216 = vadd.f32 %v2857, %v3208
    %v3217 = vadd.f32 %v3019, %v3209
    %v3218 = vadd.f32 %v3021, %v3210
    %v3219 = vadd.f32 %v3183, %v3211
    %v3220 = vadd.f32 %v3185, %v3212
    %v3221 = vmul.f32 %v3213, 0.7978846
    %v3222 = vmul.f32 %v3214, 0.7978846
    %v3223 = vmul.f32 %v3215, 0.7978846
    %v3224 = vmul.f32 %v3216, 0.7978846
    %v3225 = vmul.f32 %v3217, 0.7978846
    %v3226 = vmul.f32 %v3218, 0.7978846
    %v3227 = vmul.f32 %v3219, 0.7978846
    %v3228 = vmul.f32 %v3220, 0.7978846
    %v3229 = vtanh.pop %v3221
    %v3230 = vtanh.pop %v3222
    %v3231 = vtanh.pop %v3223
    %v3232 = vtanh.pop %v3224
    %v3233 = vtanh.pop %v3225
    %v3234 = vtanh.pop %v3226
    %v3235 = vtanh.pop %v3227
    %v3236 = vtanh.pop %v3228
    %v3237 = vadd.f32 %v3229, 1.0
    %v3238 = vadd.f32 %v3230, 1.0
    %v3239 = vadd.f32 %v3231, 1.0
    %v3240 = vadd.f32 %v3232, 1.0
    %v3241 = vadd.f32 %v3233, 1.0
    %v3242 = vadd.f32 %v3234, 1.0
    %v3243 = vadd.f32 %v3235, 1.0
    %v3244 = vadd.f32 %v3236, 1.0
    %v3245 = vmul.f32 %v3237, 0.5
    %v3246 = vmul.f32 %v3238, 0.5
    %v3247 = vmul.f32 %v3239, 0.5
    %v3248 = vmul.f32 %v3240, 0.5
    %v3249 = vmul.f32 %v3241, 0.5
    %v3250 = vmul.f32 %v3242, 0.5
    %v3251 = vmul.f32 %v3243, 0.5
    %v3252 = vmul.f32 %v3244, 0.5
    %v3253 = vmul.f32 %v2691, %v3245
    %v3254 = vmul.f32 %v2693, %v3246
    %v3255 = vmul.f32 %v2855, %v3247
    %v3256 = vmul.f32 %v2857, %v3248
    %v3257 = vmul.f32 %v3019, %v3249
    %v3258 = vmul.f32 %v3021, %v3250
    %v3259 = vmul.f32 %v3183, %v3251
    %v3260 = vmul.f32 %v3185, %v3252
    %v3261 = vpack.c.bf16 %v3253, %v3253
    %v3262 = vpack.c.bf16 %v3254, %v3254
    %v3263 = vpack.c.bf16 %v3255, %v3255
    %v3264 = vpack.c.bf16 %v3256, %v3256
    %v3265 = vpack.c.bf16 %v3257, %v3257
    %v3266 = vpack.c.bf16 %v3258, %v3258
    %v3267 = vpack.c.bf16 %v3259, %v3259
    %v3268 = vpack.c.bf16 %v3260, %v3260
    %v3269 = vld [vmem:[#allocation8] sm:$0xf]
    %v3270 = vld [vmem:[#allocation8 + $0x4] sm:$0xf]
    %v3271 = vld [vmem:[#allocation8 + $0x8] sm:$0xf]
    %v3272 = vld [vmem:[#allocation8 + $0xc] sm:$0xf]
    %v3273 = vld [vmem:[#allocation8 + $0x10] sm:$0xf]
    %v3274 = vld [vmem:[#allocation8 + $0x14] sm:$0xf]
    %v3275 = vld [vmem:[#allocation8 + $0x18] sm:$0xf]
    %v3276 = vld [vmem:[#allocation8 + $0x1c] sm:$0xf]
    %v3277 = vld [vmem:[#allocation8 + $0x20] sm:$0xf]
    %v3278 = vld [vmem:[#allocation8 + $0x24] sm:$0xf]
    %v3279 = vld [vmem:[#allocation8 + $0x28] sm:$0xf]
    %v3280 = vld [vmem:[#allocation8 + $0x2c] sm:$0xf]
    %v3281 = vld [vmem:[#allocation8 + $0x30] sm:$0xf]
    %v3282 = vld [vmem:[#allocation8 + $0x34] sm:$0xf]
    %v3283 = vld [vmem:[#allocation8 + $0x38] sm:$0xf]
    %v3284 = vld [vmem:[#allocation8 + $0x3c] sm:$0xf]
    %v3285 = vld [vmem:[#allocation8 + $0x40] sm:$0xf]
    %v3286 = vld [vmem:[#allocation8 + $0x44] sm:$0xf]
    %v3287 = vld [vmem:[#allocation8 + $0x48] sm:$0xf]
    %v3288 = vld [vmem:[#allocation8 + $0x4c] sm:$0xf]
    %v3289 = vld [vmem:[#allocation8 + $0x50] sm:$0xf]
    %v3290 = vld [vmem:[#allocation8 + $0x54] sm:$0xf]
    %v3291 = vld [vmem:[#allocation8 + $0x58] sm:$0xf]
    %v3292 = vld [vmem:[#allocation8 + $0x5c] sm:$0xf]
    %v3293 = vld [vmem:[#allocation8 + $0x60] sm:$0xf]
    %v3294 = vld [vmem:[#allocation8 + $0x64] sm:$0xf]
    %v3295 = vld [vmem:[#allocation8 + $0x68] sm:$0xf]
    %v3296 = vld [vmem:[#allocation8 + $0x6c] sm:$0xf]
    %v3297 = vld [vmem:[#allocation8 + $0x70] sm:$0xf]
    %v3298 = vld [vmem:[#allocation8 + $0x74] sm:$0xf]
    %v3299 = vld [vmem:[#allocation8 + $0x78] sm:$0xf]
    %v3300 = vld [vmem:[#allocation8 + $0x7c] sm:$0xf]
    %v3301 = vld [vmem:[#allocation8 + $0x80] sm:$0xf]
    %v3302 = vld [vmem:[#allocation8 + $0x84] sm:$0xf]
    %v3303 = vld [vmem:[#allocation8 + $0x88] sm:$0xf]
    %v3304 = vld [vmem:[#allocation8 + $0x8c] sm:$0xf]
    %v3305 = vld [vmem:[#allocation8 + $0x90] sm:$0xf]
    %v3306 = vld [vmem:[#allocation8 + $0x94] sm:$0xf]
    %v3307 = vld [vmem:[#allocation8 + $0x98] sm:$0xf]
    %v3308 = vld [vmem:[#allocation8 + $0x9c] sm:$0xf]
    %v3309 = vld [vmem:[#allocation8 + $0xa0] sm:$0xf]
    %v3310 = vld [vmem:[#allocation8 + $0xa4] sm:$0xf]
    %v3311 = vld [vmem:[#allocation8 + $0xa8] sm:$0xf]
    %v3312 = vld [vmem:[#allocation8 + $0xac] sm:$0xf]
    %v3313 = vld [vmem:[#allocation8 + $0xb0] sm:$0xf]
    %v3314 = vld [vmem:[#allocation8 + $0xb4] sm:$0xf]
    %v3315 = vld [vmem:[#allocation8 + $0xb8] sm:$0xf]
    %v3316 = vld [vmem:[#allocation8 + $0xbc] sm:$0xf]
    %v3317 = vld [vmem:[#allocation8 + $0xc0] sm:$0xf]
    %v3318 = vld [vmem:[#allocation8 + $0xc4] sm:$0xf]
    %v3319 = vld [vmem:[#allocation8 + $0xc8] sm:$0xf]
    %v3320 = vld [vmem:[#allocation8 + $0xcc] sm:$0xf]
    %v3321 = vld [vmem:[#allocation8 + $0xd0] sm:$0xf]
    %v3322 = vld [vmem:[#allocation8 + $0xd4] sm:$0xf]
    %v3323 = vld [vmem:[#allocation8 + $0xd8] sm:$0xf]
    %v3324 = vld [vmem:[#allocation8 + $0xdc] sm:$0xf]
    %v3325 = vld [vmem:[#allocation8 + $0xe0] sm:$0xf]
    %v3326 = vld [vmem:[#allocation8 + $0xe4] sm:$0xf]
    %v3327 = vld [vmem:[#allocation8 + $0xe8] sm:$0xf]
    %v3328 = vld [vmem:[#allocation8 + $0xec] sm:$0xf]
    %v3329 = vld [vmem:[#allocation8 + $0xf0] sm:$0xf]
    %v3330 = vld [vmem:[#allocation8 + $0xf4] sm:$0xf]
    %v3331 = vld [vmem:[#allocation8 + $0xf8] sm:$0xf]
    %v3332 = vld [vmem:[#allocation8 + $0xfc] sm:$0xf]
    %v3333 = vld [vmem:[#allocation8 + $0x100] sm:$0xf]
    %v3334 = vld [vmem:[#allocation8 + $0x104] sm:$0xf]
    %v3335 = vld [vmem:[#allocation8 + $0x108] sm:$0xf]
    %v3336 = vld [vmem:[#allocation8 + $0x10c] sm:$0xf]
    %v3337 = vld [vmem:[#allocation8 + $0x110] sm:$0xf]
    %v3338 = vld [vmem:[#allocation8 + $0x114] sm:$0xf]
    %v3339 = vld [vmem:[#allocation8 + $0x118] sm:$0xf]
    %v3340 = vld [vmem:[#allocation8 + $0x11c] sm:$0xf]
    %v3341 = vld [vmem:[#allocation8 + $0x120] sm:$0xf]
    %v3342 = vld [vmem:[#allocation8 + $0x124] sm:$0xf]
    %v3343 = vld [vmem:[#allocation8 + $0x128] sm:$0xf]
    %v3344 = vld [vmem:[#allocation8 + $0x12c] sm:$0xf]
    %v3345 = vld [vmem:[#allocation8 + $0x130] sm:$0xf]
    %v3346 = vld [vmem:[#allocation8 + $0x134] sm:$0xf]
    %v3347 = vld [vmem:[#allocation8 + $0x138] sm:$0xf]
    %v3348 = vld [vmem:[#allocation8 + $0x13c] sm:$0xf]
    %v3349 = vld [vmem:[#allocation8 + $0x140] sm:$0xf]
    %v3350 = vld [vmem:[#allocation8 + $0x144] sm:$0xf]
    %v3351 = vld [vmem:[#allocation8 + $0x148] sm:$0xf]
    %v3352 = vld [vmem:[#allocation8 + $0x14c] sm:$0xf]
    %v3353 = vld [vmem:[#allocation8 + $0x150] sm:$0xf]
    %v3354 = vld [vmem:[#allocation8 + $0x154] sm:$0xf]
    %v3355 = vld [vmem:[#allocation8 + $0x158] sm:$0xf]
    %v3356 = vld [vmem:[#allocation8 + $0x15c] sm:$0xf]
    %v3357 = vld [vmem:[#allocation8 + $0x160] sm:$0xf]
    %v3358 = vld [vmem:[#allocation8 + $0x164] sm:$0xf]
    %v3359 = vld [vmem:[#allocation8 + $0x168] sm:$0xf]
    %v3360 = vld [vmem:[#allocation8 + $0x16c] sm:$0xf]
    %v3361 = vld [vmem:[#allocation8 + $0x170] sm:$0xf]
    %v3362 = vld [vmem:[#allocation8 + $0x174] sm:$0xf]
    %v3363 = vld [vmem:[#allocation8 + $0x178] sm:$0xf]
    %v3364 = vld [vmem:[#allocation8 + $0x17c] sm:$0xf]
    %v3365 = vld [vmem:[#allocation8 + $0x180] sm:$0xf]
    %v3366 = vld [vmem:[#allocation8 + $0x184] sm:$0xf]
    %v3367 = vld [vmem:[#allocation8 + $0x188] sm:$0xf]
    %v3368 = vld [vmem:[#allocation8 + $0x18c] sm:$0xf]
    %v3369 = vld [vmem:[#allocation8 + $0x190] sm:$0xf]
    %v3370 = vld [vmem:[#allocation8 + $0x194] sm:$0xf]
    %v3371 = vld [vmem:[#allocation8 + $0x198] sm:$0xf]
    %v3372 = vld [vmem:[#allocation8 + $0x19c] sm:$0xf]
    %v3373 = vld [vmem:[#allocation8 + $0x1a0] sm:$0xf]
    %v3374 = vld [vmem:[#allocation8 + $0x1a4] sm:$0xf]
    %v3375 = vld [vmem:[#allocation8 + $0x1a8] sm:$0xf]
    %v3376 = vld [vmem:[#allocation8 + $0x1ac] sm:$0xf]
    %v3377 = vld [vmem:[#allocation8 + $0x1b0] sm:$0xf]
    %v3378 = vld [vmem:[#allocation8 + $0x1b4] sm:$0xf]
    %v3379 = vld [vmem:[#allocation8 + $0x1b8] sm:$0xf]
    %v3380 = vld [vmem:[#allocation8 + $0x1bc] sm:$0xf]
    %v3381 = vld [vmem:[#allocation8 + $0x1c0] sm:$0xf]
    %v3382 = vld [vmem:[#allocation8 + $0x1c4] sm:$0xf]
    %v3383 = vld [vmem:[#allocation8 + $0x1c8] sm:$0xf]
    %v3384 = vld [vmem:[#allocation8 + $0x1cc] sm:$0xf]
    %v3385 = vld [vmem:[#allocation8 + $0x1d0] sm:$0xf]
    %v3386 = vld [vmem:[#allocation8 + $0x1d4] sm:$0xf]
    %v3387 = vld [vmem:[#allocation8 + $0x1d8] sm:$0xf]
    %v3388 = vld [vmem:[#allocation8 + $0x1dc] sm:$0xf]
    %v3389 = vld [vmem:[#allocation8 + $0x1e0] sm:$0xf]
    %v3390 = vld [vmem:[#allocation8 + $0x1e4] sm:$0xf]
    %v3391 = vld [vmem:[#allocation8 + $0x1e8] sm:$0xf]
    %v3392 = vld [vmem:[#allocation8 + $0x1ec] sm:$0xf]
    %v3393 = vld [vmem:[#allocation8 + $0x1f0] sm:$0xf]
    %v3394 = vld [vmem:[#allocation8 + $0x1f4] sm:$0xf]
    %v3395 = vld [vmem:[#allocation8 + $0x1f8] sm:$0xf]
    %v3396 = vld [vmem:[#allocation8 + $0x1fc] sm:$0xf]
    %v3397 = vld [vmem:[#allocation10] sm:$0x1]
    %v3399 = vlaneseq
    %v3400 = vshrl.u32 %v3399, 7
    %v3401 = vsub.s32 0, %v3400
    %v3402 = vrot.slane %v3397, %v3401
    %v3532 = vunpack.c.l.b16 %v3269
    %v3533 = vunpack.c.l.b16 %v3270
    %v3534 = vunpack.c.l.b16 %v3271
    %v3535 = vunpack.c.l.b16 %v3272
    %v3536 = vunpack.c.l.b16 %v3273
    %v3537 = vunpack.c.l.b16 %v3274
    %v3538 = vunpack.c.l.b16 %v3275
    %v3539 = vunpack.c.l.b16 %v3276
    %v3540 = vunpack.c.l.b16 %v3277
    %v3541 = vunpack.c.l.b16 %v3278
    %v3542 = vunpack.c.l.b16 %v3279
    %v3543 = vunpack.c.l.b16 %v3280
    %v3544 = vunpack.c.l.b16 %v3281
    %v3545 = vunpack.c.l.b16 %v3282
    %v3546 = vunpack.c.l.b16 %v3283
    %v3547 = vunpack.c.l.b16 %v3284
    %v3548 = vunpack.c.l.b16 %v3285
    %v3549 = vunpack.c.l.b16 %v3286
    %v3550 = vunpack.c.l.b16 %v3287
    %v3551 = vunpack.c.l.b16 %v3288
    %v3552 = vunpack.c.l.b16 %v3289
    %v3553 = vunpack.c.l.b16 %v3290
    %v3554 = vunpack.c.l.b16 %v3291
    %v3555 = vunpack.c.l.b16 %v3292
    %v3556 = vunpack.c.l.b16 %v3293
    %v3557 = vunpack.c.l.b16 %v3294
    %v3558 = vunpack.c.l.b16 %v3295
    %v3559 = vunpack.c.l.b16 %v3296
    %v3560 = vunpack.c.l.b16 %v3297
    %v3561 = vunpack.c.l.b16 %v3298
    %v3562 = vunpack.c.l.b16 %v3299
    %v3563 = vunpack.c.l.b16 %v3300
    %v3564 = vunpack.c.l.b16 %v3301
    %v3565 = vunpack.c.l.b16 %v3302
    %v3566 = vunpack.c.l.b16 %v3303
    %v3567 = vunpack.c.l.b16 %v3304
    %v3568 = vunpack.c.l.b16 %v3305
    %v3569 = vunpack.c.l.b16 %v3306
    %v3570 = vunpack.c.l.b16 %v3307
    %v3571 = vunpack.c.l.b16 %v3308
    %v3572 = vunpack.c.l.b16 %v3309
    %v3573 = vunpack.c.l.b16 %v3310
    %v3574 = vunpack.c.l.b16 %v3311
    %v3575 = vunpack.c.l.b16 %v3312
    %v3576 = vunpack.c.l.b16 %v3313
    %v3577 = vunpack.c.l.b16 %v3314
    %v3578 = vunpack.c.l.b16 %v3315
    %v3579 = vunpack.c.l.b16 %v3316
    %v3580 = vunpack.c.l.b16 %v3317
    %v3581 = vunpack.c.l.b16 %v3318
    %v3582 = vunpack.c.l.b16 %v3319
    %v3583 = vunpack.c.l.b16 %v3320
    %v3584 = vunpack.c.l.b16 %v3321
    %v3585 = vunpack.c.l.b16 %v3322
    %v3586 = vunpack.c.l.b16 %v3323
    %v3587 = vunpack.c.l.b16 %v3324
    %v3588 = vunpack.c.l.b16 %v3325
    %v3589 = vunpack.c.l.b16 %v3326
    %v3590 = vunpack.c.l.b16 %v3327
    %v3591 = vunpack.c.l.b16 %v3328
    %v3592 = vunpack.c.l.b16 %v3329
    %v3593 = vunpack.c.l.b16 %v3330
    %v3594 = vunpack.c.l.b16 %v3331
    %v3595 = vunpack.c.l.b16 %v3332
    %v3596 = vunpack.c.l.b16 %v3333
    %v3597 = vunpack.c.l.b16 %v3334
    %v3598 = vunpack.c.l.b16 %v3335
    %v3599 = vunpack.c.l.b16 %v3336
    %v3600 = vunpack.c.l.b16 %v3337
    %v3601 = vunpack.c.l.b16 %v3338
    %v3602 = vunpack.c.l.b16 %v3339
    %v3603 = vunpack.c.l.b16 %v3340
    %v3604 = vunpack.c.l.b16 %v3341
    %v3605 = vunpack.c.l.b16 %v3342
    %v3606 = vunpack.c.l.b16 %v3343
    %v3607 = vunpack.c.l.b16 %v3344
    %v3608 = vunpack.c.l.b16 %v3345
    %v3609 = vunpack.c.l.b16 %v3346
    %v3610 = vunpack.c.l.b16 %v3347
    %v3611 = vunpack.c.l.b16 %v3348
    %v3612 = vunpack.c.l.b16 %v3349
    %v3613 = vunpack.c.l.b16 %v3350
    %v3614 = vunpack.c.l.b16 %v3351
    %v3615 = vunpack.c.l.b16 %v3352
    %v3616 = vunpack.c.l.b16 %v3353
    %v3617 = vunpack.c.l.b16 %v3354
    %v3618 = vunpack.c.l.b16 %v3355
    %v3619 = vunpack.c.l.b16 %v3356
    %v3620 = vunpack.c.l.b16 %v3357
    %v3621 = vunpack.c.l.b16 %v3358
    %v3622 = vunpack.c.l.b16 %v3359
    %v3623 = vunpack.c.l.b16 %v3360
    %v3624 = vunpack.c.l.b16 %v3361
    %v3625 = vunpack.c.l.b16 %v3362
    %v3626 = vunpack.c.l.b16 %v3363
    %v3627 = vunpack.c.l.b16 %v3364
    %v3628 = vunpack.c.l.b16 %v3365
    %v3629 = vunpack.c.l.b16 %v3366
    %v3630 = vunpack.c.l.b16 %v3367
    %v3631 = vunpack.c.l.b16 %v3368
    %v3632 = vunpack.c.l.b16 %v3369
    %v3633 = vunpack.c.l.b16 %v3370
    %v3634 = vunpack.c.l.b16 %v3371
    %v3635 = vunpack.c.l.b16 %v3372
    %v3636 = vunpack.c.l.b16 %v3373
    %v3637 = vunpack.c.l.b16 %v3374
    %v3638 = vunpack.c.l.b16 %v3375
    %v3639 = vunpack.c.l.b16 %v3376
    %v3640 = vunpack.c.l.b16 %v3377
    %v3641 = vunpack.c.l.b16 %v3378
    %v3642 = vunpack.c.l.b16 %v3379
    %v3643 = vunpack.c.l.b16 %v3380
    %v3644 = vunpack.c.l.b16 %v3381
    %v3645 = vunpack.c.l.b16 %v3382
    %v3646 = vunpack.c.l.b16 %v3383
    %v3647 = vunpack.c.l.b16 %v3384
    %v3648 = vunpack.c.l.b16 %v3385
    %v3649 = vunpack.c.l.b16 %v3386
    %v3650 = vunpack.c.l.b16 %v3387
    %v3651 = vunpack.c.l.b16 %v3388
    %v3652 = vunpack.c.l.b16 %v3389
    %v3653 = vunpack.c.l.b16 %v3390
    %v3654 = vunpack.c.l.b16 %v3391
    %v3655 = vunpack.c.l.b16 %v3392
    %v3656 = vunpack.c.l.b16 %v3393
    %v3657 = vunpack.c.l.b16 %v3394
    %v3658 = vunpack.c.l.b16 %v3395
    %v3659 = vunpack.c.l.b16 %v3396
    %v3660 = vpack.c.b16 %v3533, %v3532
    %v3661 = vpack.c.b16 %v3535, %v3534
    %v3662 = vpack.c.b16 %v3537, %v3536
    %v3663 = vpack.c.b16 %v3539, %v3538
    %v3664 = vpack.c.b16 %v3541, %v3540
    %v3665 = vpack.c.b16 %v3543, %v3542
    %v3666 = vpack.c.b16 %v3545, %v3544
    %v3667 = vpack.c.b16 %v3547, %v3546
    %v3668 = vpack.c.b16 %v3549, %v3548
    %v3669 = vpack.c.b16 %v3551, %v3550
    %v3670 = vpack.c.b16 %v3553, %v3552
    %v3671 = vpack.c.b16 %v3555, %v3554
    %v3672 = vpack.c.b16 %v3557, %v3556
    %v3673 = vpack.c.b16 %v3559, %v3558
    %v3674 = vpack.c.b16 %v3561, %v3560
    %v3675 = vpack.c.b16 %v3563, %v3562
    %v3676 = vpack.c.b16 %v3565, %v3564
    %v3677 = vpack.c.b16 %v3567, %v3566
    %v3678 = vpack.c.b16 %v3569, %v3568
    %v3679 = vpack.c.b16 %v3571, %v3570
    %v3680 = vpack.c.b16 %v3573, %v3572
    %v3681 = vpack.c.b16 %v3575, %v3574
    %v3682 = vpack.c.b16 %v3577, %v3576
    %v3683 = vpack.c.b16 %v3579, %v3578
    %v3684 = vpack.c.b16 %v3581, %v3580
    %v3685 = vpack.c.b16 %v3583, %v3582
    %v3686 = vpack.c.b16 %v3585, %v3584
    %v3687 = vpack.c.b16 %v3587, %v3586
    %v3688 = vpack.c.b16 %v3589, %v3588
    %v3689 = vpack.c.b16 %v3591, %v3590
    %v3690 = vpack.c.b16 %v3593, %v3592
    %v3691 = vpack.c.b16 %v3595, %v3594
    %v3692 = vpack.c.b16 %v3597, %v3596
    %v3693 = vpack.c.b16 %v3599, %v3598
    %v3694 = vpack.c.b16 %v3601, %v3600
    %v3695 = vpack.c.b16 %v3603, %v3602
    %v3696 = vpack.c.b16 %v3605, %v3604
    %v3697 = vpack.c.b16 %v3607, %v3606
    %v3698 = vpack.c.b16 %v3609, %v3608
    %v3699 = vpack.c.b16 %v3611, %v3610
    %v3700 = vpack.c.b16 %v3613, %v3612
    %v3701 = vpack.c.b16 %v3615, %v3614
    %v3702 = vpack.c.b16 %v3617, %v3616
    %v3703 = vpack.c.b16 %v3619, %v3618
    %v3704 = vpack.c.b16 %v3621, %v3620
    %v3705 = vpack.c.b16 %v3623, %v3622
    %v3706 = vpack.c.b16 %v3625, %v3624
    %v3707 = vpack.c.b16 %v3627, %v3626
    %v3708 = vpack.c.b16 %v3629, %v3628
    %v3709 = vpack.c.b16 %v3631, %v3630
    %v3710 = vpack.c.b16 %v3633, %v3632
    %v3711 = vpack.c.b16 %v3635, %v3634
    %v3712 = vpack.c.b16 %v3637, %v3636
    %v3713 = vpack.c.b16 %v3639, %v3638
    %v3714 = vpack.c.b16 %v3641, %v3640
    %v3715 = vpack.c.b16 %v3643, %v3642
    %v3716 = vpack.c.b16 %v3645, %v3644
    %v3717 = vpack.c.b16 %v3647, %v3646
    %v3718 = vpack.c.b16 %v3649, %v3648
    %v3719 = vpack.c.b16 %v3651, %v3650
    %v3720 = vpack.c.b16 %v3653, %v3652
    %v3721 = vpack.c.b16 %v3655, %v3654
    %v3722 = vpack.c.b16 %v3657, %v3656
    %v3723 = vpack.c.b16 %v3659, %v3658
    %3788 = vmatprep.subr.bf16.mxu0 0
    %3789 = vmatpush1.bf16.msra.mxu0 %v3660
    %3790 = vmatprep.subr.bf16.mxu0 0
    %3791 = vmatpush1.bf16.msra.mxu0 %v3661
    %3792 = vmatprep.subr.bf16.mxu0 0
    %3793 = vmatpush1.bf16.msra.mxu0 %v3662
    %3794 = vmatprep.subr.bf16.mxu0 0
    %3795 = vmatpush1.bf16.msra.mxu0 %v3663
    %3796 = vmatprep.subr.bf16.mxu0 0
    %3797 = vmatpush1.bf16.msra.mxu0 %v3664
    %3798 = vmatprep.subr.bf16.mxu0 0
    %3799 = vmatpush1.bf16.msra.mxu0 %v3665
    %3800 = vmatprep.subr.bf16.mxu0 0
    %3801 = vmatpush1.bf16.msra.mxu0 %v3666
    %3802 = vmatprep.subr.bf16.mxu0 0
    %3803 = vmatpush1.bf16.msra.mxu0 %v3667
    %3804 = vmatprep.subr.bf16.mxu0 0
    %3805 = vmatpush1.bf16.msra.mxu0 %v3668
    %3806 = vmatprep.subr.bf16.mxu0 0
    %3807 = vmatpush1.bf16.msra.mxu0 %v3669
    %3808 = vmatprep.subr.bf16.mxu0 0
    %3809 = vmatpush1.bf16.msra.mxu0 %v3670
    %3810 = vmatprep.subr.bf16.mxu0 0
    %3811 = vmatpush1.bf16.msra.mxu0 %v3671
    %3812 = vmatprep.subr.bf16.mxu0 0
    %3813 = vmatpush1.bf16.msra.mxu0 %v3672
    %3814 = vmatprep.subr.bf16.mxu0 0
    %3815 = vmatpush1.bf16.msra.mxu0 %v3673
    %3816 = vmatprep.subr.bf16.mxu0 0
    %3817 = vmatpush1.bf16.msra.mxu0 %v3674
    %3818 = vmatprep.subr.bf16.mxu0 0
    %3819 = vmatpush1.bf16.msra.mxu0 %v3675
    %3820 = vmatprep.mubr.bf16.mxu0 %v3262
    %3821 = vmatmul.mubr.bf16.gmra.mrb[0].mxu0 %v3261
    %v3822 = vpop.f32.mrb[0].mxu0
    %v3823 = vadd.f32 %v3402, %v3822
    %v3824 = vpop.f32.mrb[0].mxu0
    %v3825 = vpop.f32.mrb[0].mxu0
    %v3826 = vpop.f32.mrb[0].mxu0
    %3827 = vdwg.mxu0
    %3828 = vmatprep.subr.bf16.mxu0 0
    %3829 = vmatpush1.bf16.msra.mxu0 %v3676
    %3830 = vmatprep.subr.bf16.mxu0 0
    %3831 = vmatpush1.bf16.msra.mxu0 %v3677
    %3832 = vmatprep.subr.bf16.mxu0 0
    %3833 = vmatpush1.bf16.msra.mxu0 %v3678
    %3834 = vmatprep.subr.bf16.mxu0 0
    %3835 = vmatpush1.bf16.msra.mxu0 %v3679
    %3836 = vmatprep.subr.bf16.mxu0 0
    %3837 = vmatpush1.bf16.msra.mxu0 %v3680
    %3838 = vmatprep.subr.bf16.mxu0 0
    %3839 = vmatpush1.bf16.msra.mxu0 %v3681
    %3840 = vmatprep.subr.bf16.mxu0 0
    %3841 = vmatpush1.bf16.msra.mxu0 %v3682
    %3842 = vmatprep.subr.bf16.mxu0 0
    %3843 = vmatpush1.bf16.msra.mxu0 %v3683
    %3844 = vmatprep.subr.bf16.mxu0 0
    %3845 = vmatpush1.bf16.msra.mxu0 %v3684
    %3846 = vmatprep.subr.bf16.mxu0 0
    %3847 = vmatpush1.bf16.msra.mxu0 %v3685
    %3848 = vmatprep.subr.bf16.mxu0 0
    %3849 = vmatpush1.bf16.msra.mxu0 %v3686
    %3850 = vmatprep.subr.bf16.mxu0 0
    %3851 = vmatpush1.bf16.msra.mxu0 %v3687
    %3852 = vmatprep.subr.bf16.mxu0 0
    %3853 = vmatpush1.bf16.msra.mxu0 %v3688
    %3854 = vmatprep.subr.bf16.mxu0 0
    %3855 = vmatpush1.bf16.msra.mxu0 %v3689
    %3856 = vmatprep.subr.bf16.mxu0 0
    %3857 = vmatpush1.bf16.msra.mxu0 %v3690
    %3858 = vmatprep.subr.bf16.mxu0 0
    %3859 = vmatpush1.bf16.msra.mxu0 %v3691
    %3860 = vmatprep.mubr.bf16.mxu0 %v3264
    %3861 = vmatmul.mubr.bf16.gmra.mrb[0].mxu0 %v3263
    %v3862 = vpop.f32.mrb[0].mxu0
    %v3863 = vadd.f32 %v3823, %v3862
    %v3864 = vpop.f32.mrb[0].mxu0
    %v3865 = vpop.f32.mrb[0].mxu0
    %v3866 = vpop.f32.mrb[0].mxu0
    %3867 = vdwg.mxu0
    %3868 = vmatprep.subr.bf16.mxu0 0
    %3869 = vmatpush1.bf16.msra.mxu0 %v3692
    %3870 = vmatprep.subr.bf16.mxu0 0
    %3871 = vmatpush1.bf16.msra.mxu0 %v3693
    %3872 = vmatprep.subr.bf16.mxu0 0
    %3873 = vmatpush1.bf16.msra.mxu0 %v3694
    %3874 = vmatprep.subr.bf16.mxu0 0
    %3875 = vmatpush1.bf16.msra.mxu0 %v3695
    %3876 = vmatprep.subr.bf16.mxu0 0
    %3877 = vmatpush1.bf16.msra.mxu0 %v3696
    %3878 = vmatprep.subr.bf16.mxu0 0
    %3879 = vmatpush1.bf16.msra.mxu0 %v3697
    %3880 = vmatprep.subr.bf16.mxu0 0
    %3881 = vmatpush1.bf16.msra.mxu0 %v3698
    %3882 = vmatprep.subr.bf16.mxu0 0
    %3883 = vmatpush1.bf16.msra.mxu0 %v3699
    %3884 = vmatprep.subr.bf16.mxu0 0
    %3885 = vmatpush1.bf16.msra.mxu0 %v3700
    %3886 = vmatprep.subr.bf16.mxu0 0
    %3887 = vmatpush1.bf16.msra.mxu0 %v3701
    %3888 = vmatprep.subr.bf16.mxu0 0
    %3889 = vmatpush1.bf16.msra.mxu0 %v3702
    %3890 = vmatprep.subr.bf16.mxu0 0
    %3891 = vmatpush1.bf16.msra.mxu0 %v3703
    %3892 = vmatprep.subr.bf16.mxu0 0
    %3893 = vmatpush1.bf16.msra.mxu0 %v3704
    %3894 = vmatprep.subr.bf16.mxu0 0
    %3895 = vmatpush1.bf16.msra.mxu0 %v3705
    %3896 = vmatprep.subr.bf16.mxu0 0
    %3897 = vmatpush1.bf16.msra.mxu0 %v3706
    %3898 = vmatprep.subr.bf16.mxu0 0
    %3899 = vmatpush1.bf16.msra.mxu0 %v3707
    %3900 = vmatprep.mubr.bf16.mxu0 %v3266
    %3901 = vmatmul.mubr.bf16.gmra.mrb[0].mxu0 %v3265
    %v3902 = vpop.f32.mrb[0].mxu0
    %v3903 = vadd.f32 %v3863, %v3902
    %v3904 = vpop.f32.mrb[0].mxu0
    %v3905 = vpop.f32.mrb[0].mxu0
    %v3906 = vpop.f32.mrb[0].mxu0
    %3907 = vdwg.mxu0
    %3908 = vmatprep.subr.bf16.mxu0 0
    %3909 = vmatpush1.bf16.msra.mxu0 %v3708
    %3910 = vmatprep.subr.bf16.mxu0 0
    %3911 = vmatpush1.bf16.msra.mxu0 %v3709
    %3912 = vmatprep.subr.bf16.mxu0 0
    %3913 = vmatpush1.bf16.msra.mxu0 %v3710
    %3914 = vmatprep.subr.bf16.mxu0 0
    %3915 = vmatpush1.bf16.msra.mxu0 %v3711
    %3916 = vmatprep.subr.bf16.mxu0 0
    %3917 = vmatpush1.bf16.msra.mxu0 %v3712
    %3918 = vmatprep.subr.bf16.mxu0 0
    %3919 = vmatpush1.bf16.msra.mxu0 %v3713
    %3920 = vmatprep.subr.bf16.mxu0 0
    %3921 = vmatpush1.bf16.msra.mxu0 %v3714
    %3922 = vmatprep.subr.bf16.mxu0 0
    %3923 = vmatpush1.bf16.msra.mxu0 %v3715
    %3924 = vmatprep.subr.bf16.mxu0 0
    %3925 = vmatpush1.bf16.msra.mxu0 %v3716
    %3926 = vmatprep.subr.bf16.mxu0 0
    %3927 = vmatpush1.bf16.msra.mxu0 %v3717
    %3928 = vmatprep.subr.bf16.mxu0 0
    %3929 = vmatpush1.bf16.msra.mxu0 %v3718
    %3930 = vmatprep.subr.bf16.mxu0 0
    %3931 = vmatpush1.bf16.msra.mxu0 %v3719
    %3932 = vmatprep.subr.bf16.mxu0 0
    %3933 = vmatpush1.bf16.msra.mxu0 %v3720
    %3934 = vmatprep.subr.bf16.mxu0 0
    %3935 = vmatpush1.bf16.msra.mxu0 %v3721
    %3936 = vmatprep.subr.bf16.mxu0 0
    %3937 = vmatpush1.bf16.msra.mxu0 %v3722
    %3938 = vmatprep.subr.bf16.mxu0 0
    %3939 = vmatpush1.bf16.msra.mxu0 %v3723
    %3940 = vmatprep.mubr.bf16.mxu0 %v3268
    %3941 = vmatmul.mubr.bf16.gmra.mrb[0].mxu0 %v3267
    %v3942 = vpop.f32.mrb[0].mxu0
    %v3943 = vadd.f32 %v3903, %v3942
    %v3944 = vpop.f32.mrb[0].mxu0
    %v3945 = vpop.f32.mrb[0].mxu0
    %v3946 = vpop.f32.mrb[0].mxu0
    %3947 = vdwg.mxu0
    %v3948 = vpack.c.bf16 %v3943, %v3943
    %3949 = vst [vmem:[#allocation11] sm:$0x1] %v3948
    // Predicated region
    $region42: #{tpu_custom_call.1} parent=1 // pred_check
      _
    $region43: #{tpu_custom_call.1} parent=1 // pred_check_branch
      %3951 = sbr.rel (0) target = $region45
    $region44: #{tpu_custom_call.1} parent=1 // pred_region
      %s3953 = ssub.s32 16, 16
      %3954 = vsyncadd [#allocation4], %s3953
      %s3956 = sshll.u32 [#allocation11], 4
      %s3957 = int_to_ptr.vmem [resolvable:$true] %s3956
      %3959 = dma.vmem_to_hbm [thread:$0]  %s3957, 16, %s5, [#allocation4]
    $region45: #{tpu_custom_call.1} parent=1 // pred_fallthru
      _
    // Predicated region
    $region46: #{tpu_custom_call.1} parent=1 // pred_check
      _
    $region47: #{tpu_custom_call.1} parent=1 // pred_check_branch
      %3961 = sbr.rel (0) target = $region49
    $region48: #{tpu_custom_call.1} parent=1 // pred_region
      %3962 = dma.done [#allocation4], 16
    $region49: #{tpu_custom_call.1} parent=1 // pred_fallthru
      _
    %3963 = vsyncpa [#allocation3], 1
    %3964 = vsyncpa [#allocation6], 1
    %3965 = vsyncpa [#allocation9], 1
    %3966 = vsyncpa [#allocation4], 1

</llo_original>
